<compile_context>
chip_gen: v6e
topology: v6e:2x2x1
jax: 0.10.0
libtpu: 0.0.40
codegen_flags: <defaults>
</compile_context>

<pallas_src>
import functools

import numpy as np

import jax
import jax.numpy as jnp
from jax import lax
from jax.experimental import pallas as pl
from jax.experimental.pallas import tpu as pltpu

EPS = 1e-5
LANE = 128


def _round_up(x, m):
    return (x + m - 1) // m * m


# ---------------------------------------------------------------------------
# Fused Res_2d kernel: `nb` images per grid step.
# ---------------------------------------------------------------------------
def _res2d_kernel(xpk_ref, w13_ref, w2_ref, aff_ref, mask_ref, o_ref, h1_ref, *,
                  n_off, pitch, hq, nb, nrows, npad, diff):
    slab = hq * pitch                       # flattened rows per image
    span = (nb - 1) * slab + nrows          # rows carrying all nb images' outputs
    ring = pitch + 1                        # rows of zero padding around the h1 interior

    # ---- conv1 (| conv3 fused on N): n_off^2 accumulated MXU dots over bf16 slabs.
    # ---- Polyphase phases were packed into K by the wrapper, so stride-2 needs
    # ---- only 4 dots (stride-1: the usual 9).
    acc = None
    for a in range(n_off):
        for b2 in range(n_off):
            start = a * pitch + b2
            lhs = xpk_ref[0, start:start + span, :]
            d = jnp.dot(lhs, w13_ref[a * n_off + b2],
                        preferred_element_type=jnp.float32)
            acc = d if acc is None else acc + d

    # bn1 + relu; junk columns / inter-image gap rows -> 0 so they double as
    # conv2's zero padding once staged into the scratch.
    h1 = acc[:, :npad] * aff_ref[0:1, :] + aff_ref[1:2, :]
    h1 = jnp.maximum(h1, 0.0) * mask_ref[...]

    # zero only the padding ring (head/tail rows); the interior is fully rewritten.
    h1_ref[0:ring, :] = jnp.zeros((ring, npad), jnp.bfloat16)
    h1_ref[ring + span:ring + span + ring, :] = jnp.zeros((ring, npad), jnp.bfloat16)
    h1_ref[ring:ring + span, :] = h1.astype(jnp.bfloat16)

    # ---- conv2 (stride 1) + bn2: 9 accumulated dots over the padded bf16 scratch.
    acc2 = None
    for dy in range(3):
        for dx in range(3):
            start = dy * pitch + dx
            d = jnp.dot(h1_ref[start:start + span, :], w2_ref[dy * 3 + dx],
                        preferred_element_type=jnp.float32)
            acc2 = d if acc2 is None else acc2 + d
    out = acc2 * aff_ref[2:3, :] + aff_ref[3:4, :]

    # ---- shortcut ---------------------------------------------------------------
    if diff:
        # projection: bn3(conv3(x)) — reuses the fused accumulator's upper lanes
        sc = acc[:, npad:] * aff_ref[4:5, :] + aff_ref[5:6, :]
    else:
        # identity: the (1,1)-shifted input slab itself, lane-padded to npad
        sc = xpk_ref[0, ring:ring + span, :].astype(jnp.float32)
        lane_pad = npad - sc.shape[1]
        if lane_pad:
            sc = jnp.concatenate(
                [sc, jnp.zeros((span, lane_pad), jnp.float32)], axis=-1)

    # ---- residual add + relu, lane-dense f32 store --------------------------------
    o_ref[0, :span, :] = jnp.maximum(out + sc, 0.0)


# ---------------------------------------------------------------------------
# Wrapper: layout plumbing (NCHW <-> flattened polyphase NHWC), BN folding.
# ---------------------------------------------------------------------------
def res_2d_forward(x_nchw, params, stride=2):
    """Forward of Res_2d (eval-mode BN).  x: (B, Cin, H, W) -> (B, Cout, Ho, Wo)."""
    assert stride in (1, 2), "kernel supports the module's stride values {1, 2}"
    w1 = params["conv1"]["w"]
    cout, cin = int(w1.shape[0]), int(w1.shape[1])
    diff = (stride != 1) or (cin != cout)
    s = stride
    n_off = -(-3 // s)                        # tap offsets per axis after polyphase split

    x = jnp.transpose(x_nchw, (0, 2, 3, 1)).astype(jnp.bfloat16)      # NHWC, bf16 staging
    b, h, w, _ = x.shape
    ho = (h - 1) // s + 1
    wo = (w - 1) // s + 1
    pitch = _round_up(wo + 2, 8)              # sublane-friendly row pitch (>= wo + 2)
    hq = ho + n_off - 1
    slab = hq * pitch                         # flattened rows per image
    nrows = (ho - 1) * pitch + wo
    npad = _round_up(cout, LANE)              # lane-dense output channels
    cin_k = _round_up(cin, 8)
    kk = s * s * cin_k                        # polyphase phases packed into K
    n13 = 2 * npad if diff else npad          # conv1 | conv3 fused on N

    # ---- choose nb (images stacked along M per grid step) ----
    def step_vmem_bytes(nb_):
        rows = nb_ * slab
        span_ = (nb_ - 1) * slab + nrows
        kk_l = _round_up(kk, LANE)
        return (2 * rows * (kk_l * 2 + npad * 4)                       # xpk + out blocks
                + 2 * (n_off * n_off * kk * n13 + 9 * npad * npad) * 2  # weights
                + 2 * (6 * npad + span_ * LANE) * 4                    # aff + mask
                + (span_ + 2 * pitch + 2) * npad * 2)                  # h1 scratch

    nb, budget, target_rows = 1, 40 << 20, 512
    for cand in range(1, b + 1):
        if b % cand:
            continue
        if b >= 2 and b // cand < 2:          # keep >= 2 grid steps (both TensorCores)
            continue
        if step_vmem_bytes(cand) > budget:
            continue
        nb = cand
        if cand * slab >= target_rows:
            break
    span = (nb - 1) * slab + nrows

    # ---- input: zero-pad, polyphase split (phases packed along channels), flatten ----
    if cin_k != cin:
        x = jnp.pad(x, ((0, 0), (0, 0), (0, 0), (0, cin_k - cin)))
    xp = jnp.pad(x, ((0, 0), (1, s * hq - h - 1), (1, s * pitch - w - 1), (0, 0)))
    xpk = xp.reshape(b, hq, s, pitch, s, cin_k).transpose(0, 1, 3, 2, 4, 5)
    xpk = xpk.reshape(b // nb, nb * slab, kk)

    # ---- weights: HWIO, zero-padded, phases packed into K per spatial offset ----
    def hwio(conv, ci_pad, co_pad):
        wc = conv["w"]
        co, ci = int(wc.shape[0]), int(wc.shape[1])
        wm = jnp.transpose(wc, (2, 3, 1, 0))
        return jnp.pad(wm, ((0, 0), (0, 0), (0, ci_pad - ci), (0, co_pad - co)))

    w1hw = hwio(params["conv1"], cin_k, npad)
    if diff:
        w13hw = jnp.concatenate([w1hw, hwio(params["conv3"], cin_k, npad)], axis=-1)
    else:
        w13hw = w1hw
    w13 = jnp.zeros((n_off, n_off, s, s, cin_k, n13), jnp.float32)
    for a in range(n_off):
        for b2 in range(n_off):
            for py in range(s):
                for px in range(s):
                    dy, dx = s * a + py, s * b2 + px
                    if dy < 3 and dx < 3:
                        w13 = w13.at[a, b2, py, px].set(w13hw[dy, dx])
    w13 = w13.reshape(n_off * n_off, kk, n13).astype(jnp.bfloat16)
    w2 = hwio(params["conv2"], npad, npad).reshape(9, npad, npad).astype(jnp.bfloat16)

    # ---- fold conv bias + eval-mode BN into per-channel affines ----
    def bn_affine(bn, conv_b):
        sc = bn["gamma"] / jnp.sqrt(bn["var"] + EPS)
        sh = bn["beta"] + (conv_b - bn["mean"]) * sc
        return jnp.pad(sc, (0, npad - cout)), jnp.pad(sh, (0, npad - cout))

    s1, t1 = bn_affine(params["bn1"], params["conv1"]["b"])
    s2, t2 = bn_affine(params["bn2"], params["conv2"]["b"])
    if diff:
        s3, t3 = bn_affine(params["bn3"], params["conv3"]["b"])
    else:
        s3 = jnp.zeros((npad,), jnp.float32)
        t3 = s3
    aff = jnp.stack([s1, t1, s2, t2, s3, t3], axis=0).astype(jnp.float32)

    # validity mask (junk columns + inter-image gap rows): a tiny (span, 1) column
    ridx = np.arange(span)
    mask = (((ridx % slab) < nrows) & ((ridx % pitch) < wo)).astype(np.float32)
    mask = jnp.asarray(mask.reshape(span, 1))

    vmem_limit = int(min(max(step_vmem_bytes(nb) + (8 << 20), 32 << 20), 96 << 20))

    kern = functools.partial(_res2d_kernel, n_off=n_off, pitch=pitch, hq=hq,
                             nb=nb, nrows=nrows, npad=npad, diff=diff)
    out = pl.pallas_call(
        kern,
        out_shape=jax.ShapeDtypeStruct((b // nb, nb * slab, npad), jnp.float32),
        grid=(b // nb,),
        in_specs=[
            pl.BlockSpec((1, nb * slab, kk), lambda i: (i, 0, 0)),
            pl.BlockSpec((n_off * n_off, kk, n13), lambda i: (0, 0, 0)),
            pl.BlockSpec((9, npad, npad), lambda i: (0, 0, 0)),
            pl.BlockSpec((6, npad), lambda i: (0, 0)),
            pl.BlockSpec((span, 1), lambda i: (0, 0)),
        ],
        out_specs=pl.BlockSpec((1, nb * slab, npad), lambda i: (i, 0, 0)),
        scratch_shapes=[pltpu.VMEM((span + 2 * pitch + 2, npad), jnp.bfloat16)],
        compiler_params=pltpu.CompilerParams(
            dimension_semantics=("parallel",),
            vmem_limit_bytes=vmem_limit,
        ),
    )(xpk, w13, w2, aff, mask)

    # unflatten: (B//nb, nb*slab, npad) -> (B, ho, wo, cout) -> NCHW
    y = out.reshape(b // nb, nb, hq, pitch, npad)[:, :, :ho, :wo, :cout]
    y = y.reshape(b, ho, wo, cout)
    return jnp.transpose(y, (0, 3, 1, 2))


# ---------------------------------------------------------------------------
# Deterministic parameter construction (synthetic, not a checkpoint)
# ---------------------------------------------------------------------------
def init_bn(key, c):
    k1, k2, k3, k4 = jax.random.split(key, 4)
    return dict(
        gamma=jax.random.uniform(k1, (c,), jnp.float32, 0.8, 1.2),
        beta=0.1 * jax.random.normal(k2, (c,), jnp.float32),
        mean=0.1 * jax.random.normal(k3, (c,), jnp.float32),
        var=jax.random.uniform(k4, (c,), jnp.float32, 0.8, 1.2),
    )


def init_conv(key, cin, cout):
    k1, k2 = jax.random.split(key)
    return dict(
        w=0.05 * jax.random.normal(k1, (cout, cin, 3, 3), jnp.float32),
        b=0.05 * jax.random.normal(k2, (cout,), jnp.float32),
    )


def init_res2d(key, cin, cout, stride):
    ks = jax.random.split(key, 6)
    p = dict(conv1=init_conv(ks[0], cin, cout), bn1=init_bn(ks[1], cout),
             conv2=init_conv(ks[2], cout, cout), bn2=init_bn(ks[3], cout))
    if stride != 1 or cin != cout:
        p["conv3"] = init_conv(ks[4], cin, cout)
        p["bn3"] = init_bn(ks[5], cout)
    return p


# ---------------------------------------------------------------------------
# Pure-JAX reference (mirrors the PyTorch forward, eval-mode BN)
# ---------------------------------------------------------------------------
def _ref_conv(x, conv, stride):
    y = lax.conv_general_dilated(
        x, conv["w"], (stride, stride), ((1, 1), (1, 1)),
        dimension_numbers=("NHWC", "OIHW", "NHWC"),
        precision=lax.Precision.HIGHEST)
    return y + conv["b"]


def _ref_bn(x, bn):
    return (x - bn["mean"]) / jnp.sqrt(bn["var"] + EPS) * bn["gamma"] + bn["beta"]


def ref_res_2d(x_nchw, params, stride=2):
    x = jnp.transpose(x_nchw, (0, 2, 3, 1)).astype(jnp.float32)
    cout, cin = params["conv1"]["w"].shape[:2]
    diff = (stride != 1) or (cin != cout)
    out = jax.nn.relu(_ref_bn(_ref_conv(x, params["conv1"], stride), params["bn1"]))
    out = _ref_bn(_ref_conv(out, params["conv2"], 1), params["bn2"])
    if diff:
        x = _ref_bn(_ref_conv(x, params["conv3"], stride), params["bn3"])
    out = jax.nn.relu(x + out)
    return jnp.transpose(out, (0, 3, 1, 2))


# ---------------------------------------------------------------------------
if __name__ == "__main__":
    key = jax.random.PRNGKey(0)
    k1, k2, k3, k4, k5, k6 = jax.random.split(key, 6)

    # primary config: module defaults (stride=2, projection shortcut)
    B, Cin, H, W, Cout, stride = 2, 4, 16, 16, 32, 2
    x = jax.random.normal(k1, (B, Cin, H, W), jnp.float32)
    params = init_res2d(k2, Cin, Cout, stride)
    out = jax.block_until_ready(res_2d_forward(x, params, stride))
    ref = ref_res_2d(x, params, stride)
    assert out.shape == (B, Cout, H // 2, W // 2), out.shape
    err = float(jnp.max(jnp.abs(out - ref)))
    assert jnp.allclose(out, ref, rtol=5e-2, atol=5e-2), f"max abs err = {err}"

    # identity-shortcut config (stride=1, cin == cout)
    x2 = jax.random.normal(k3, (B, Cout, H, W), jnp.float32)
    params2 = init_res2d(k4, Cout, Cout, 1)
    out2 = jax.block_until_ready(res_2d_forward(x2, params2, 1))
    ref2 = ref_res_2d(x2, params2, 1)
    assert out2.shape == (B, Cout, H, W), out2.shape
    err2 = float(jnp.max(jnp.abs(out2 - ref2)))
    assert jnp.allclose(out2, ref2, rtol=5e-2, atol=5e-2), f"max abs err = {err2}"

    # multi-image-per-step config (B=4 -> nb=2): exercises the M-stacking path
    x3 = jax.random.normal(k5, (4, Cin, H, W), jnp.float32)
    params3 = init_res2d(k6, Cin, Cout, 2)
    out3 = jax.block_until_ready(res_2d_forward(x3, params3, 2))
    ref3 = ref_res_2d(x3, params3, 2)
    assert out3.shape == (4, Cout, H // 2, W // 2), out3.shape
    err3 = float(jnp.max(jnp.abs(out3 - ref3)))
    assert jnp.allclose(out3, ref3, rtol=5e-2, atol=5e-2), f"max abs err = {err3}"

    print("KERNEL_OK")
</pallas_src>

<mosaic_0001>
module attributes {stable_mosaic.version = 11 : i64} {
  func.func @_res2d_kernel(%arg0: i32, %arg1: memref<1x144x32xbf16, #tpu.memory_space<vmem>>, %arg2: memref<4x32x256xbf16, #tpu.memory_space<vmem>>, %arg3: memref<9x128x128xbf16, #tpu.memory_space<vmem>>, %arg4: memref<6x128xf32, #tpu.memory_space<vmem>>, %arg5: memref<120x1xf32, #tpu.memory_space<vmem>>, %arg6: memref<1x144x128xf32, #tpu.memory_space<vmem>>, %arg7: memref<154x128xbf16, #tpu.memory_space<vmem>>) attributes {dimension_semantics = [#tpu.dimension_semantics<parallel>], iteration_bounds = array<i64: 2>, scalar_prefetch = 0 : i64, scratch_operands = 1 : i64, tpu.core_type = #tpu.core_type<tc>, window_params = [{transform_indices = @transform_0, window_bounds = array<i64: 1, 144, 32>}, {pipeline_mode = #tpu.pipeline_mode<synchronous>, transform_indices = @transform_1, window_bounds = array<i64: 4, 32, 256>}, {pipeline_mode = #tpu.pipeline_mode<synchronous>, transform_indices = @transform_2, window_bounds = array<i64: 9, 128, 128>}, {pipeline_mode = #tpu.pipeline_mode<synchronous>, transform_indices = @transform_3, window_bounds = array<i64: 6, 128>}, {pipeline_mode = #tpu.pipeline_mode<synchronous>, transform_indices = @transform_4, window_bounds = array<i64: 120, 1>}, {transform_indices = @transform_5, window_bounds = array<i64: 1, 144, 128>}]} {
    %c0 = arith.constant 0 : index
    %c0_0 = arith.constant 0 : index
    %c0_1 = arith.constant 0 : index
    %0 = vector.load %arg1[%c0, %c0_0, %c0_1] : memref<1x144x32xbf16, #tpu.memory_space<vmem>>, vector<1x120x32xbf16>
    %1 = vector.shape_cast %0 : vector<1x120x32xbf16> to vector<120x32xbf16>
    %c0_2 = arith.constant 0 : index
    %c0_3 = arith.constant 0 : index
    %c0_4 = arith.constant 0 : index
    %2 = vector.load %arg2[%c0_2, %c0_3, %c0_4] : memref<4x32x256xbf16, #tpu.memory_space<vmem>>, vector<1x32x256xbf16>
    %3 = vector.shape_cast %2 : vector<1x32x256xbf16> to vector<32x256xbf16>
    %cst = arith.constant dense<0.000000e+00> : vector<120x256xf32>
    %4 = tpu.matmul %1, %3, %cst {dimension_numbers = #tpu.dot_dimension_numbers<[1], [0], [0], [1], [0, 0, 1, 1], [], []>} : vector<120x32xbf16>, vector<32x256xbf16>, vector<120x256xf32> -> vector<120x256xf32>
    %c0_5 = arith.constant 0 : index
    %c1 = arith.constant 1 : index
    %c0_6 = arith.constant 0 : index
    %5 = vector.load %arg1[%c0_5, %c1, %c0_6] : memref<1x144x32xbf16, #tpu.memory_space<vmem>>, vector<1x120x32xbf16>
    %6 = vector.shape_cast %5 : vector<1x120x32xbf16> to vector<120x32xbf16>
    %c1_7 = arith.constant 1 : index
    %c0_8 = arith.constant 0 : index
    %c0_9 = arith.constant 0 : index
    %7 = vector.load %arg2[%c1_7, %c0_8, %c0_9] : memref<4x32x256xbf16, #tpu.memory_space<vmem>>, vector<1x32x256xbf16>
    %8 = vector.shape_cast %7 : vector<1x32x256xbf16> to vector<32x256xbf16>
    %cst_10 = arith.constant dense<0.000000e+00> : vector<120x256xf32>
    %9 = tpu.matmul %6, %8, %cst_10 {dimension_numbers = #tpu.dot_dimension_numbers<[1], [0], [0], [1], [0, 0, 1, 1], [], []>} : vector<120x32xbf16>, vector<32x256xbf16>, vector<120x256xf32> -> vector<120x256xf32>
    %10 = arith.addf %4, %9 : vector<120x256xf32>
    %c0_11 = arith.constant 0 : index
    %c16 = arith.constant 16 : index
    %c0_12 = arith.constant 0 : index
    %11 = vector.load %arg1[%c0_11, %c16, %c0_12] : memref<1x144x32xbf16, #tpu.memory_space<vmem>>, vector<1x120x32xbf16>
    %12 = vector.shape_cast %11 : vector<1x120x32xbf16> to vector<120x32xbf16>
    %c2 = arith.constant 2 : index
    %c0_13 = arith.constant 0 : index
    %c0_14 = arith.constant 0 : index
    %13 = vector.load %arg2[%c2, %c0_13, %c0_14] : memref<4x32x256xbf16, #tpu.memory_space<vmem>>, vector<1x32x256xbf16>
    %14 = vector.shape_cast %13 : vector<1x32x256xbf16> to vector<32x256xbf16>
    %cst_15 = arith.constant dense<0.000000e+00> : vector<120x256xf32>
    %15 = tpu.matmul %12, %14, %cst_15 {dimension_numbers = #tpu.dot_dimension_numbers<[1], [0], [0], [1], [0, 0, 1, 1], [], []>} : vector<120x32xbf16>, vector<32x256xbf16>, vector<120x256xf32> -> vector<120x256xf32>
    %16 = arith.addf %10, %15 : vector<120x256xf32>
    %c0_16 = arith.constant 0 : index
    %c17 = arith.constant 17 : index
    %c0_17 = arith.constant 0 : index
    %17 = vector.load %arg1[%c0_16, %c17, %c0_17] : memref<1x144x32xbf16, #tpu.memory_space<vmem>>, vector<1x120x32xbf16>
    %18 = vector.shape_cast %17 : vector<1x120x32xbf16> to vector<120x32xbf16>
    %c3 = arith.constant 3 : index
    %c0_18 = arith.constant 0 : index
    %c0_19 = arith.constant 0 : index
    %19 = vector.load %arg2[%c3, %c0_18, %c0_19] : memref<4x32x256xbf16, #tpu.memory_space<vmem>>, vector<1x32x256xbf16>
    %20 = vector.shape_cast %19 : vector<1x32x256xbf16> to vector<32x256xbf16>
    %cst_20 = arith.constant dense<0.000000e+00> : vector<120x256xf32>
    %21 = tpu.matmul %18, %20, %cst_20 {dimension_numbers = #tpu.dot_dimension_numbers<[1], [0], [0], [1], [0, 0, 1, 1], [], []>} : vector<120x32xbf16>, vector<32x256xbf16>, vector<120x256xf32> -> vector<120x256xf32>
    %22 = arith.addf %16, %21 : vector<120x256xf32>
    %23 = vector.extract_strided_slice %22 {offsets = [0, 0], sizes = [120, 128], strides = [1, 1]} : vector<120x256xf32> to vector<120x128xf32>
    %c0_21 = arith.constant 0 : index
    %c0_22 = arith.constant 0 : index
    %24 = vector.load %arg4[%c0_21, %c0_22] : memref<6x128xf32, #tpu.memory_space<vmem>>, vector<1x128xf32>
    %25 = vector.broadcast %24 : vector<1x128xf32> to vector<120x128xf32>
    %26 = arith.mulf %23, %25 : vector<120x128xf32>
    %c1_23 = arith.constant 1 : index
    %c0_24 = arith.constant 0 : index
    %27 = vector.load %arg4[%c1_23, %c0_24] : memref<6x128xf32, #tpu.memory_space<vmem>>, vector<1x128xf32>
    %28 = vector.broadcast %27 : vector<1x128xf32> to vector<120x128xf32>
    %29 = arith.addf %26, %28 : vector<120x128xf32>
    %cst_25 = arith.constant 0.000000e+00 : f32
    %30 = vector.broadcast %cst_25 : f32 to vector<120x128xf32>
    %31 = arith.maximumf %29, %30 : vector<120x128xf32>
    %c0_26 = arith.constant 0 : index
    %c0_27 = arith.constant 0 : index
    %32 = vector.load %arg5[%c0_26, %c0_27] : memref<120x1xf32, #tpu.memory_space<vmem>>, vector<120x1xf32>
    %33 = vector.broadcast %32 : vector<120x1xf32> to vector<120x128xf32>
    %34 = arith.mulf %31, %33 : vector<120x128xf32>
    %cst_28 = arith.constant 0.000000e+00 : bf16
    %35 = vector.broadcast %cst_28 : bf16 to vector<17x128xbf16>
    %c0_29 = arith.constant 0 : index
    %c0_30 = arith.constant 0 : index
    %36 = vector.load %arg7[%c0_29, %c0_30] : memref<154x128xbf16, #tpu.memory_space<vmem>>, vector<17x128xbf16>
    tpu.vector_store %arg7[%c0_29, %c0_30], %35 {strides = array<i32>} : memref<154x128xbf16, #tpu.memory_space<vmem>>, vector<17x128xbf16>,
    %cst_31 = arith.constant 0.000000e+00 : bf16
    %37 = vector.broadcast %cst_31 : bf16 to vector<17x128xbf16>
    %c137 = arith.constant 137 : index
    %c0_32 = arith.constant 0 : index
    %38 = vector.load %arg7[%c137, %c0_32] : memref<154x128xbf16, #tpu.memory_space<vmem>>, vector<17x128xbf16>
    tpu.vector_store %arg7[%c137, %c0_32], %37 {strides = array<i32>} : memref<154x128xbf16, #tpu.memory_space<vmem>>, vector<17x128xbf16>,
    %39 = arith.truncf %34 : vector<120x128xf32> to vector<120x128xbf16>
    %c17_33 = arith.constant 17 : index
    %c0_34 = arith.constant 0 : index
    %40 = vector.load %arg7[%c17_33, %c0_34] : memref<154x128xbf16, #tpu.memory_space<vmem>>, vector<120x128xbf16>
    tpu.vector_store %arg7[%c17_33, %c0_34], %39 {strides = array<i32>} : memref<154x128xbf16, #tpu.memory_space<vmem>>, vector<120x128xbf16>,
    %c0_35 = arith.constant 0 : index
    %c0_36 = arith.constant 0 : index
    %41 = vector.load %arg7[%c0_35, %c0_36] : memref<154x128xbf16, #tpu.memory_space<vmem>>, vector<120x128xbf16>
    %c0_37 = arith.constant 0 : index
    %c0_38 = arith.constant 0 : index
    %c0_39 = arith.constant 0 : index
    %42 = vector.load %arg3[%c0_37, %c0_38, %c0_39] : memref<9x128x128xbf16, #tpu.memory_space<vmem>>, vector<1x128x128xbf16>
    %43 = vector.shape_cast %42 : vector<1x128x128xbf16> to vector<128x128xbf16>
    %cst_40 = arith.constant dense<0.000000e+00> : vector<120x128xf32>
    %44 = tpu.matmul %41, %43, %cst_40 {dimension_numbers = #tpu.dot_dimension_numbers<[1], [0], [0], [1], [0, 0, 1, 1], [], []>} : vector<120x128xbf16>, vector<128x128xbf16>, vector<120x128xf32> -> vector<120x128xf32>
    %c1_41 = arith.constant 1 : index
    %c0_42 = arith.constant 0 : index
    %45 = vector.load %arg7[%c1_41, %c0_42] : memref<154x128xbf16, #tpu.memory_space<vmem>>, vector<120x128xbf16>
    %c1_43 = arith.constant 1 : index
    %c0_44 = arith.constant 0 : index
    %c0_45 = arith.constant 0 : index
    %46 = vector.load %arg3[%c1_43, %c0_44, %c0_45] : memref<9x128x128xbf16, #tpu.memory_space<vmem>>, vector<1x128x128xbf16>
    %47 = vector.shape_cast %46 : vector<1x128x128xbf16> to vector<128x128xbf16>
    %cst_46 = arith.constant dense<0.000000e+00> : vector<120x128xf32>
    %48 = tpu.matmul %45, %47, %cst_46 {dimension_numbers = #tpu.dot_dimension_numbers<[1], [0], [0], [1], [0, 0, 1, 1], [], []>} : vector<120x128xbf16>, vector<128x128xbf16>, vector<120x128xf32> -> vector<120x128xf32>
    %49 = arith.addf %44, %48 : vector<120x128xf32>
    %c2_47 = arith.constant 2 : index
    %c0_48 = arith.constant 0 : index
    %50 = vector.load %arg7[%c2_47, %c0_48] : memref<154x128xbf16, #tpu.memory_space<vmem>>, vector<120x128xbf16>
    %c2_49 = arith.constant 2 : index
    %c0_50 = arith.constant 0 : index
    %c0_51 = arith.constant 0 : index
    %51 = vector.load %arg3[%c2_49, %c0_50, %c0_51] : memref<9x128x128xbf16, #tpu.memory_space<vmem>>, vector<1x128x128xbf16>
    %52 = vector.shape_cast %51 : vector<1x128x128xbf16> to vector<128x128xbf16>
    %cst_52 = arith.constant dense<0.000000e+00> : vector<120x128xf32>
    %53 = tpu.matmul %50, %52, %cst_52 {dimension_numbers = #tpu.dot_dimension_numbers<[1], [0], [0], [1], [0, 0, 1, 1], [], []>} : vector<120x128xbf16>, vector<128x128xbf16>, vector<120x128xf32> -> vector<120x128xf32>
    %54 = arith.addf %49, %53 : vector<120x128xf32>
    %c16_53 = arith.constant 16 : index
    %c0_54 = arith.constant 0 : index
    %55 = vector.load %arg7[%c16_53, %c0_54] : memref<154x128xbf16, #tpu.memory_space<vmem>>, vector<120x128xbf16>
    %c3_55 = arith.constant 3 : index
    %c0_56 = arith.constant 0 : index
    %c0_57 = arith.constant 0 : index
    %56 = vector.load %arg3[%c3_55, %c0_56, %c0_57] : memref<9x128x128xbf16, #tpu.memory_space<vmem>>, vector<1x128x128xbf16>
    %57 = vector.shape_cast %56 : vector<1x128x128xbf16> to vector<128x128xbf16>
    %cst_58 = arith.constant dense<0.000000e+00> : vector<120x128xf32>
    %58 = tpu.matmul %55, %57, %cst_58 {dimension_numbers = #tpu.dot_dimension_numbers<[1], [0], [0], [1], [0, 0, 1, 1], [], []>} : vector<120x128xbf16>, vector<128x128xbf16>, vector<120x128xf32> -> vector<120x128xf32>
    %59 = arith.addf %54, %58 : vector<120x128xf32>
    %c17_59 = arith.constant 17 : index
    %c0_60 = arith.constant 0 : index
    %60 = vector.load %arg7[%c17_59, %c0_60] : memref<154x128xbf16, #tpu.memory_space<vmem>>, vector<120x128xbf16>
    %c4 = arith.constant 4 : index
    %c0_61 = arith.constant 0 : index
    %c0_62 = arith.constant 0 : index
    %61 = vector.load %arg3[%c4, %c0_61, %c0_62] : memref<9x128x128xbf16, #tpu.memory_space<vmem>>, vector<1x128x128xbf16>
    %62 = vector.shape_cast %61 : vector<1x128x128xbf16> to vector<128x128xbf16>
    %cst_63 = arith.constant dense<0.000000e+00> : vector<120x128xf32>
    %63 = tpu.matmul %60, %62, %cst_63 {dimension_numbers = #tpu.dot_dimension_numbers<[1], [0], [0], [1], [0, 0, 1, 1], [], []>} : vector<120x128xbf16>, vector<128x128xbf16>, vector<120x128xf32> -> vector<120x128xf32>
    %64 = arith.addf %59, %63 : vector<120x128xf32>
    %c18 = arith.constant 18 : index
    %c0_64 = arith.constant 0 : index
    %65 = vector.load %arg7[%c18, %c0_64] : memref<154x128xbf16, #tpu.memory_space<vmem>>, vector<120x128xbf16>
    %c5 = arith.constant 5 : index
    %c0_65 = arith.constant 0 : index
    %c0_66 = arith.constant 0 : index
    %66 = vector.load %arg3[%c5, %c0_65, %c0_66] : memref<9x128x128xbf16, #tpu.memory_space<vmem>>, vector<1x128x128xbf16>
    %67 = vector.shape_cast %66 : vector<1x128x128xbf16> to vector<128x128xbf16>
    %cst_67 = arith.constant dense<0.000000e+00> : vector<120x128xf32>
    %68 = tpu.matmul %65, %67, %cst_67 {dimension_numbers = #tpu.dot_dimension_numbers<[1], [0], [0], [1], [0, 0, 1, 1], [], []>} : vector<120x128xbf16>, vector<128x128xbf16>, vector<120x128xf32> -> vector<120x128xf32>
    %69 = arith.addf %64, %68 : vector<120x128xf32>
    %c32 = arith.constant 32 : index
    %c0_68 = arith.constant 0 : index
    %70 = vector.load %arg7[%c32, %c0_68] : memref<154x128xbf16, #tpu.memory_space<vmem>>, vector<120x128xbf16>
    %c6 = arith.constant 6 : index
    %c0_69 = arith.constant 0 : index
    %c0_70 = arith.constant 0 : index
    %71 = vector.load %arg3[%c6, %c0_69, %c0_70] : memref<9x128x128xbf16, #tpu.memory_space<vmem>>, vector<1x128x128xbf16>
    %72 = vector.shape_cast %71 : vector<1x128x128xbf16> to vector<128x128xbf16>
    %cst_71 = arith.constant dense<0.000000e+00> : vector<120x128xf32>
    %73 = tpu.matmul %70, %72, %cst_71 {dimension_numbers = #tpu.dot_dimension_numbers<[1], [0], [0], [1], [0, 0, 1, 1], [], []>} : vector<120x128xbf16>, vector<128x128xbf16>, vector<120x128xf32> -> vector<120x128xf32>
    %74 = arith.addf %69, %73 : vector<120x128xf32>
    %c33 = arith.constant 33 : index
    %c0_72 = arith.constant 0 : index
    %75 = vector.load %arg7[%c33, %c0_72] : memref<154x128xbf16, #tpu.memory_space<vmem>>, vector<120x128xbf16>
    %c7 = arith.constant 7 : index
    %c0_73 = arith.constant 0 : index
    %c0_74 = arith.constant 0 : index
    %76 = vector.load %arg3[%c7, %c0_73, %c0_74] : memref<9x128x128xbf16, #tpu.memory_space<vmem>>, vector<1x128x128xbf16>
    %77 = vector.shape_cast %76 : vector<1x128x128xbf16> to vector<128x128xbf16>
    %cst_75 = arith.constant dense<0.000000e+00> : vector<120x128xf32>
    %78 = tpu.matmul %75, %77, %cst_75 {dimension_numbers = #tpu.dot_dimension_numbers<[1], [0], [0], [1], [0, 0, 1, 1], [], []>} : vector<120x128xbf16>, vector<128x128xbf16>, vector<120x128xf32> -> vector<120x128xf32>
    %79 = arith.addf %74, %78 : vector<120x128xf32>
    %c34 = arith.constant 34 : index
    %c0_76 = arith.constant 0 : index
    %80 = vector.load %arg7[%c34, %c0_76] : memref<154x128xbf16, #tpu.memory_space<vmem>>, vector<120x128xbf16>
    %c8 = arith.constant 8 : index
    %c0_77 = arith.constant 0 : index
    %c0_78 = arith.constant 0 : index
    %81 = vector.load %arg3[%c8, %c0_77, %c0_78] : memref<9x128x128xbf16, #tpu.memory_space<vmem>>, vector<1x128x128xbf16>
    %82 = vector.shape_cast %81 : vector<1x128x128xbf16> to vector<128x128xbf16>
    %cst_79 = arith.constant dense<0.000000e+00> : vector<120x128xf32>
    %83 = tpu.matmul %80, %82, %cst_79 {dimension_numbers = #tpu.dot_dimension_numbers<[1], [0], [0], [1], [0, 0, 1, 1], [], []>} : vector<120x128xbf16>, vector<128x128xbf16>, vector<120x128xf32> -> vector<120x128xf32>
    %84 = arith.addf %79, %83 : vector<120x128xf32>
    %c2_80 = arith.constant 2 : index
    %c0_81 = arith.constant 0 : index
    %85 = vector.load %arg4[%c2_80, %c0_81] : memref<6x128xf32, #tpu.memory_space<vmem>>, vector<1x128xf32>
    %86 = vector.broadcast %85 : vector<1x128xf32> to vector<120x128xf32>
    %87 = arith.mulf %84, %86 : vector<120x128xf32>
    %c3_82 = arith.constant 3 : index
    %c0_83 = arith.constant 0 : index
    %88 = vector.load %arg4[%c3_82, %c0_83] : memref<6x128xf32, #tpu.memory_space<vmem>>, vector<1x128xf32>
    %89 = vector.broadcast %88 : vector<1x128xf32> to vector<120x128xf32>
    %90 = arith.addf %87, %89 : vector<120x128xf32>
    %91 = vector.extract_strided_slice %22 {offsets = [0, 128], sizes = [120, 128], strides = [1, 1]} : vector<120x256xf32> to vector<120x128xf32>
    %c4_84 = arith.constant 4 : index
    %c0_85 = arith.constant 0 : index
    %92 = vector.load %arg4[%c4_84, %c0_85] : memref<6x128xf32, #tpu.memory_space<vmem>>, vector<1x128xf32>
    %93 = vector.broadcast %92 : vector<1x128xf32> to vector<120x128xf32>
    %94 = arith.mulf %91, %93 : vector<120x128xf32>
    %c5_86 = arith.constant 5 : index
    %c0_87 = arith.constant 0 : index
    %95 = vector.load %arg4[%c5_86, %c0_87] : memref<6x128xf32, #tpu.memory_space<vmem>>, vector<1x128xf32>
    %96 = vector.broadcast %95 : vector<1x128xf32> to vector<120x128xf32>
    %97 = arith.addf %94, %96 : vector<120x128xf32>
    %98 = arith.addf %90, %97 : vector<120x128xf32>
    %cst_88 = arith.constant 0.000000e+00 : f32
    %99 = vector.broadcast %cst_88 : f32 to vector<120x128xf32>
    %100 = arith.maximumf %98, %99 : vector<120x128xf32>
    %c0_89 = arith.constant 0 : index
    %c0_90 = arith.constant 0 : index
    %c0_91 = arith.constant 0 : index
    %101 = vector.load %arg6[%c0_89, %c0_90, %c0_91] : memref<1x144x128xf32, #tpu.memory_space<vmem>>, vector<1x120x128xf32>
    %102 = vector.shape_cast %101 : vector<1x120x128xf32> to vector<120x128xf32>
    %103 = vector.shape_cast %100 : vector<120x128xf32> to vector<1x120x128xf32>
    tpu.vector_store %arg6[%c0_89, %c0_90, %c0_91], %103 {strides = array<i32>} : memref<1x144x128xf32, #tpu.memory_space<vmem>>, vector<1x120x128xf32>,
    return
  }
  func.func @transform_0(%arg0: i32) -> (i32, i32, i32) {
    %c0_i32 = arith.constant 0 : i32
    %c0_i32_0 = arith.constant 0 : i32
    %c0_i32_1 = arith.constant 0 : i32
    return %arg0, %c0_i32, %c0_i32_0 : i32, i32, i32
  }
  func.func @transform_1(%arg0: i32) -> (i32, i32, i32) {
    %c0_i32 = arith.constant 0 : i32
    %c0_i32_0 = arith.constant 0 : i32
    %c0_i32_1 = arith.constant 0 : i32
    %c0_i32_2 = arith.constant 0 : i32
    return %c0_i32, %c0_i32_0, %c0_i32_1 : i32, i32, i32
  }
  func.func @transform_2(%arg0: i32) -> (i32, i32, i32) {
    %c0_i32 = arith.constant 0 : i32
    %c0_i32_0 = arith.constant 0 : i32
    %c0_i32_1 = arith.constant 0 : i32
    %c0_i32_2 = arith.constant 0 : i32
    return %c0_i32, %c0_i32_0, %c0_i32_1 : i32, i32, i32
  }
  func.func @transform_3(%arg0: i32) -> (i32, i32) {
    %c0_i32 = arith.constant 0 : i32
    %c0_i32_0 = arith.constant 0 : i32
    %c0_i32_1 = arith.constant 0 : i32
    return %c0_i32, %c0_i32_0 : i32, i32
  }
  func.func @transform_4(%arg0: i32) -> (i32, i32) {
    %c0_i32 = arith.constant 0 : i32
    %c0_i32_0 = arith.constant 0 : i32
    %c0_i32_1 = arith.constant 0 : i32
    return %c0_i32, %c0_i32_0 : i32, i32
  }
  func.func @transform_5(%arg0: i32) -> (i32, i32, i32) {
    %c0_i32 = arith.constant 0 : i32
    %c0_i32_0 = arith.constant 0 : i32
    %c0_i32_1 = arith.constant 0 : i32
    return %arg0, %c0_i32, %c0_i32_0 : i32, i32, i32
  }
}

</mosaic_0001>

<llo_original>
// kernel: tpu_custom_call.1
$region0: #{tpu_custom_call.1}
  #allocation0 [shape = 'u32[]', space=smem, size = 0x4, offset = 0x4, fixed_abs, tag = 'smem constant byte address 0x4 - core index']
  #allocation1 [shape = 'u32[144,128]{1,0:T(1,128)}', space=vmem, size = 0x12000, scoped, tag = 'internal scratch']
  #allocation2 [shape = 'bf16[154,128]{1,0:T(8,128)(2,1)}', space=vmem, size = 0xa000, scoped, tag = 'scratch operand']
  %s0 = inlined_call_operand.vmem [shape: bf16[2,144,32], index: 0, kind: input, shape index: {}]
  %s1 = inlined_call_operand.vmem [shape: bf16[4,32,256], index: 1, kind: input, shape index: {}]
  %s2 = inlined_call_operand.hbm [shape: bf16[9,128,128], index: 2, kind: input, shape index: {}]
  %s3 = inlined_call_operand.vmem [shape: f32[6,128], index: 3, kind: input, shape index: {}]
  %s4 = inlined_call_operand.vmem [shape: f32[120,1], index: 4, kind: input, shape index: {}]
  %s5 = inlined_call_operand.hbm [shape: f32[2,144,128], index: 5, kind: output, shape index: {}]
  %s6 = sld [smem:[#allocation0]]
  $region57: #{tpu_custom_call.1} parent=0
    _
  %s8 = ssub.s32 1, %s6
  %s9 = scalar_select 0, %s8, %s6
  $region1: #{tpu_custom_call.1} parent=0
    #allocation3 [shape = 'u8[294912]{0}', space=vmem, size = 0x48000, scoped, tag = 'input window, operand 2, single buffered']
    #allocation4 [shape = 's32[2]{0}', space=sflag, size = 0x8, scoped, tag = 'scoped memory for tpu_custom_call.1']
    #allocation5 [shape = 's32[2]{0}', space=sflag, size = 0x8, scoped, tag = 'scoped memory for tpu_custom_call.1']
    #allocation6 [shape = 'u8[147456]{0}', space=vmem, size = 0x24000, scoped, tag = 'output window, operand 0']
    %10 = vsyncpa [#allocation4], 0
    %11 = vsyncpa [#allocation5], 0
    %s12 = scalar_lea.sflag [#allocation5], 1
    %13 = vsyncpa %s12, 0
    loop: start=0, step=1, limit=4
    $region2: #{tpu_custom_call.1} parent=1 // loop_pre_header
      _
    $region3: #{tpu_custom_call.1} parent=1 // loop_header
      %s15 = sphi 0, %s19
      %p16 = scmp.ge.s32.totalorder %s15, 4
      %s25 = sphi 0, %s27
      %s28 = sphi 0, %s25
      %s29 = sphi 0, %s28
      %s45 = sphi 0, %s29
      %s49 = sphi 0, %s49
      %s51 = sphi 0, %s49
      %s52 = sphi 0, %s51
      %s66 = sphi 0, %s52
      %s70 = sphi 0, %s70
      %s72 = sphi 0, %s70
      %s73 = sphi 0, %s72
      %s87 = sphi 0, %s73
      %s91 = sphi 0, %s91
      %s93 = sphi 0, %s91
      %s94 = sphi 0, %s93
      %s108 = sphi 0, %s94
      %s112 = sphi 0, %s112
      %s114 = sphi 0, %s112
      %s115 = sphi 0, %s114
      %s129 = sphi 0, %s115
      %s135 = sphi 0, %s137
      %s138 = sphi 0, %s135
      %s139 = sphi 0, %s138
      %s155 = sphi 0, %s139
    $region4: #{tpu_custom_call.1} parent=1 // loop_header_branch
      %18 = sbr.rel (%p16) target = $region8
    $region5: #{tpu_custom_call.1} parent=1 // loop_body
      %s20 = ssub.s32 %s15, 1
      %s21 = ssub.s32 %s15, 2
      %s22 = sadd.s32 %s15, 1
      %s23 = ssub.s32 %s15, %s22
      %p24 = scmp.eq.s32.totalorder %s23, 0
      %s26 = sadd.s32 %s25, 1
      %s27 = scalar_select %p24, %s25, %s26
      %p30 = pneg %p24
      %p31 = scmp.eq.s32.totalorder %s15, 1
      %p32 = por %p30, %p31
      %p33 = scmp.ne.s32.totalorder %s25, %s28
      %p34 = scmp.eq.s32.totalorder %s15, 0
      %p35 = por %p33, %p34
      %p36 = scmp.ne.s32.totalorder %s25, %s28
      %p37 = scmp.eq.s32.totalorder %s20, 1
      %p38 = por %p36, %p37
      %p39 = scmp.ne.s32.totalorder %s28, %s29
      %p40 = scmp.eq.s32.totalorder %s20, 0
      %p41 = por %p39, %p40
      %p42 = scmp.ne.s32.totalorder %s28, %s29
      %p43 = scmp.eq.s32.totalorder %s21, 1
      %p44 = por %p42, %p43
      %p46 = scmp.ne.s32.totalorder %s29, %s45
      %p47 = scmp.eq.s32.totalorder %s21, 0
      %p48 = por %p46, %p47
      %s50 = sadd.s32 %s49, 1
      %p53 = scmp.eq.s32.totalorder %s15, 1
      %p54 = scmp.ne.s32.totalorder %s49, %s51
      %p55 = scmp.eq.s32.totalorder %s15, 0
      %p56 = por %p54, %p55
      %p57 = scmp.ne.s32.totalorder %s49, %s51
      %p58 = scmp.eq.s32.totalorder %s20, 1
      %p59 = por %p57, %p58
      %p60 = scmp.ne.s32.totalorder %s51, %s52
      %p61 = scmp.eq.s32.totalorder %s20, 0
      %p62 = por %p60, %p61
      %p63 = scmp.ne.s32.totalorder %s51, %s52
      %p64 = scmp.eq.s32.totalorder %s21, 1
      %p65 = por %p63, %p64
      %p67 = scmp.ne.s32.totalorder %s52, %s66
      %p68 = scmp.eq.s32.totalorder %s21, 0
      %p69 = por %p67, %p68
      %s71 = sadd.s32 %s70, 1
      %p74 = scmp.eq.s32.totalorder %s15, 1
      %p75 = scmp.ne.s32.totalorder %s70, %s72
      %p76 = scmp.eq.s32.totalorder %s15, 0
      %p77 = por %p75, %p76
      %p78 = scmp.ne.s32.totalorder %s70, %s72
      %p79 = scmp.eq.s32.totalorder %s20, 1
      %p80 = por %p78, %p79
      %p81 = scmp.ne.s32.totalorder %s72, %s73
      %p82 = scmp.eq.s32.totalorder %s20, 0
      %p83 = por %p81, %p82
      %p84 = scmp.ne.s32.totalorder %s72, %s73
      %p85 = scmp.eq.s32.totalorder %s21, 1
      %p86 = por %p84, %p85
      %p88 = scmp.ne.s32.totalorder %s73, %s87
      %p89 = scmp.eq.s32.totalorder %s21, 0
      %p90 = por %p88, %p89
      %s92 = sadd.s32 %s91, 1
      %p95 = scmp.eq.s32.totalorder %s15, 1
      %p96 = scmp.ne.s32.totalorder %s91, %s93
      %p97 = scmp.eq.s32.totalorder %s15, 0
      %p98 = por %p96, %p97
      %p99 = scmp.ne.s32.totalorder %s91, %s93
      %p100 = scmp.eq.s32.totalorder %s20, 1
      %p101 = por %p99, %p100
      %p102 = scmp.ne.s32.totalorder %s93, %s94
      %p103 = scmp.eq.s32.totalorder %s20, 0
      %p104 = por %p102, %p103
      %p105 = scmp.ne.s32.totalorder %s93, %s94
      %p106 = scmp.eq.s32.totalorder %s21, 1
      %p107 = por %p105, %p106
      %p109 = scmp.ne.s32.totalorder %s94, %s108
      %p110 = scmp.eq.s32.totalorder %s21, 0
      %p111 = por %p109, %p110
      %s113 = sadd.s32 %s112, 1
      %p116 = scmp.eq.s32.totalorder %s15, 1
      %p117 = scmp.ne.s32.totalorder %s112, %s114
      %p118 = scmp.eq.s32.totalorder %s15, 0
      %p119 = por %p117, %p118
      %p120 = scmp.ne.s32.totalorder %s112, %s114
      %p121 = scmp.eq.s32.totalorder %s20, 1
      %p122 = por %p120, %p121
      %p123 = scmp.ne.s32.totalorder %s114, %s115
      %p124 = scmp.eq.s32.totalorder %s20, 0
      %p125 = por %p123, %p124
      %p126 = scmp.ne.s32.totalorder %s114, %s115
      %p127 = scmp.eq.s32.totalorder %s21, 1
      %p128 = por %p126, %p127
      %p130 = scmp.ne.s32.totalorder %s115, %s129
      %p131 = scmp.eq.s32.totalorder %s21, 0
      %p132 = por %p130, %p131
      %s133 = ssub.s32 %s15, %s22
      %p134 = scmp.eq.s32.totalorder %s133, 0
      %s136 = sadd.s32 %s135, 1
      %s137 = scalar_select %p134, %s135, %s136
      %p140 = pneg %p134
      %p141 = scmp.eq.s32.totalorder %s15, 1
      %p142 = por %p140, %p141
      %p143 = scmp.ne.s32.totalorder %s135, %s138
      %p144 = scmp.eq.s32.totalorder %s15, 0
      %p145 = por %p143, %p144
      %p146 = scmp.ne.s32.totalorder %s135, %s138
      %p147 = scmp.eq.s32.totalorder %s20, 1
      %p148 = por %p146, %p147
      %p149 = scmp.ne.s32.totalorder %s138, %s139
      %p150 = scmp.eq.s32.totalorder %s20, 0
      %p151 = por %p149, %p150
      %p152 = scmp.ne.s32.totalorder %s138, %s139
      %p153 = scmp.eq.s32.totalorder %s21, 1
      %p154 = por %p152, %p153
      %p156 = scmp.ne.s32.totalorder %s139, %s155
      %p157 = scmp.eq.s32.totalorder %s21, 0
      %p158 = por %p156, %p157
      %p159 = scmp.le.s32.totalorder 1, %s15
      %p160 = scmp.lt.s32.totalorder %s15, 3
      %p161 = pnand %p159, %p160
      %p162 = pneg %p161
      // Predicated region
      $region9: #{tpu_custom_call.1} parent=5 // pred_check
        _
      $region10: #{tpu_custom_call.1} parent=5 // pred_check_branch
        %164 = sbr.rel (%p161) target = $region12
      $region11: #{tpu_custom_call.1} parent=5 // pred_region
        %s165 = ssub.s32 %s15, 1
        // Predicated region
        $region13: #{tpu_custom_call.1} parent=11 // pred_check
          %p166 = pneg %p62
        $region14: #{tpu_custom_call.1} parent=11 // pred_check_branch
          %168 = sbr.rel (%p166) target = $region16
        $region15: #{tpu_custom_call.1} parent=11 // pred_region
          _
        $region16: #{tpu_custom_call.1} parent=11 // pred_fallthru
          _
        // Predicated region
        $region17: #{tpu_custom_call.1} parent=11 // pred_check
          %p169 = pneg %p83
        $region18: #{tpu_custom_call.1} parent=11 // pred_check_branch
          %171 = sbr.rel (%p169) target = $region20
        $region19: #{tpu_custom_call.1} parent=11 // pred_region
          %s173 = ssub.s32 9216, 9216
          %174 = vsyncadd [#allocation4], %s173
          %s175 = sshll.u32 [#allocation3], 4
          %s176 = int_to_ptr.vmem [resolvable:$true] %s175
          %181 = dma.hbm_to_vmem [thread:$0]  %s2, 9216, %s176, [#allocation4], 64, 64, 4
        $region20: #{tpu_custom_call.1} parent=11 // pred_fallthru
          _
        // Predicated region
        $region21: #{tpu_custom_call.1} parent=11 // pred_check
          %p182 = pneg %p104
        $region22: #{tpu_custom_call.1} parent=11 // pred_check_branch
          %184 = sbr.rel (%p182) target = $region24
        $region23: #{tpu_custom_call.1} parent=11 // pred_region
          _
        $region24: #{tpu_custom_call.1} parent=11 // pred_fallthru
          _
        // Predicated region
        $region25: #{tpu_custom_call.1} parent=11 // pred_check
          %p185 = pneg %p125
        $region26: #{tpu_custom_call.1} parent=11 // pred_check_branch
          %187 = sbr.rel (%p185) target = $region28
        $region27: #{tpu_custom_call.1} parent=11 // pred_region
          _
        $region28: #{tpu_custom_call.1} parent=11 // pred_fallthru
          _
      $region12: #{tpu_custom_call.1} parent=5 // pred_fallthru
        _
      %p188 = scmp.lt.s32.totalorder %s15, 2
      // Predicated region
      $region29: #{tpu_custom_call.1} parent=5 // pred_check
        %p189 = pneg %p188
      $region30: #{tpu_custom_call.1} parent=5 // pred_check_branch
        %191 = sbr.rel (%p189) target = $region32
      $region31: #{tpu_custom_call.1} parent=5 // pred_region
        // Predicated region
        $region33: #{tpu_custom_call.1} parent=31 // pred_check
          %p192 = pneg %p35
        $region34: #{tpu_custom_call.1} parent=31 // pred_check_branch
          %194 = sbr.rel (%p192) target = $region36
        $region35: #{tpu_custom_call.1} parent=31 // pred_region
          %p195 = scmp.lt.s32.totalorder %s15, 1
          %s196 = scalar_select %p195, %s15, 1
          %s197 = smul.addr %s196, 18
          %s198 = smul.addr %s197, 4
          %s199 = scalar_lea.vmem %s0, %s198
        $region36: #{tpu_custom_call.1} parent=31 // pred_fallthru
          _
      $region32: #{tpu_custom_call.1} parent=5 // pred_fallthru
        _
      %p200 = scmp.le.s32.totalorder 1, %s15
      %p201 = scmp.lt.s32.totalorder %s15, 3
      %p202 = pnand %p200, %p201
      %p203 = pneg %p202
      // Predicated region
      $region37: #{tpu_custom_call.1} parent=5 // pred_check
        _
      $region38: #{tpu_custom_call.1} parent=5 // pred_check_branch
        %205 = sbr.rel (%p202) target = $region40
      $region39: #{tpu_custom_call.1} parent=5 // pred_region
        %s206 = ssub.s32 %s15, 1
        // Predicated region
        $region41: #{tpu_custom_call.1} parent=39 // pred_check
          %p207 = pneg %p83
        $region42: #{tpu_custom_call.1} parent=39 // pred_check_branch
          %209 = sbr.rel (%p207) target = $region44
        $region43: #{tpu_custom_call.1} parent=39 // pred_region
          %210 = dma.done [#allocation4], 9216
        $region44: #{tpu_custom_call.1} parent=39 // pred_fallthru
          _
        %p211 = scmp.lt.s32.totalorder %s20, 1
        %s212 = scalar_select %p211, %s20, 1
        %s213 = smul.addr %s212, 18
        %s214 = smul.addr %s213, 4
        %s215 = scalar_lea.vmem %s0, %s214
        %p216 = pneg %p41
        %p217 = pneg %p38
        %p218 = pneg %p62
        %p219 = pneg %p59
        %p220 = pneg %p83
        %p221 = pneg %p80
        %p222 = pneg %p104
        %p223 = pneg %p101
        %p224 = pneg %p125
        %p225 = pneg %p122
        %p226 = pneg %p151
        %p227 = pneg %p148
        %s228 = sand.u32 %s138, 1
        %s229 = scalar_lea.sflag [#allocation5], %s228
        %s230 = sand.u32 %s138, 1
        %s231 = smul.addr %s230, 144
        %s232 = scalar_lea.vmem [#allocation6], %s231
        %p233 = scmp.lt.s32.totalorder %s20, 1
        %s234 = scalar_select %p233, %s20, 1
        %s235 = smul.addr %s234, 18
        %s236 = smul.addr %s235, 4
        %s237 = scalar_lea.vmem %s0, %s236
        %v239 = vld [vmem:[%s237] sm:$0xf]
        %v240 = vld [vmem:[%s237 + $0x4] sm:$0xf]
        %v241 = vld [vmem:[%s237 + $0x8] sm:$0xf]
        %v242 = vld [vmem:[%s237 + $0xc] sm:$0xf]
        %v243 = vld [vmem:[%s237 + $0x10] sm:$0xf]
        %v244 = vld [vmem:[%s237 + $0x14] sm:$0xf]
        %v245 = vld [vmem:[%s237 + $0x18] sm:$0xf]
        %v246 = vld [vmem:[%s237 + $0x1c] sm:$0xf]
        %v247 = vld [vmem:[%s237 + $0x20] sm:$0xf]
        %v248 = vld [vmem:[%s237 + $0x24] sm:$0xf]
        %v249 = vld [vmem:[%s237 + $0x28] sm:$0xf]
        %v250 = vld [vmem:[%s237 + $0x2c] sm:$0xf]
        %v251 = vld [vmem:[%s237 + $0x30] sm:$0xf]
        %v252 = vld [vmem:[%s237 + $0x34] sm:$0xf]
        %v253 = vld [vmem:[%s237 + $0x38] sm:$0xf]
        %v254 = vld [vmem:[%s1] sm:$0xff]
        %v255 = vld [vmem:[%s1 + $0x8] sm:$0xff]
        %v256 = vld [vmem:[%s1 + $0x10] sm:$0xff]
        %v257 = vld [vmem:[%s1 + $0x18] sm:$0xff]
        %v258 = vld [vmem:[%s237 + $0x3c] sm:$0x1]
        %s259 = scalar_lea.vmem %s1, 32
        %v260 = vld [vmem:[%s259] sm:$0xff]
        %v261 = vld [vmem:[%s259 + $0x8] sm:$0xff]
        %v262 = vld [vmem:[%s259 + $0x10] sm:$0xff]
        %v263 = vld [vmem:[%s259 + $0x18] sm:$0xff]
        %v280 = vunpack.c.l.b16 %v239
        %v281 = vunpack.c.l.b16 %v240
        %v282 = vunpack.c.l.b16 %v241
        %v283 = vunpack.c.l.b16 %v242
        %v284 = vunpack.c.l.b16 %v243
        %v285 = vunpack.c.l.b16 %v244
        %v286 = vunpack.c.l.b16 %v245
        %v287 = vunpack.c.l.b16 %v246
        %v288 = vunpack.c.l.b16 %v247
        %v289 = vunpack.c.l.b16 %v248
        %v290 = vunpack.c.l.b16 %v249
        %v291 = vunpack.c.l.b16 %v250
        %v292 = vunpack.c.l.b16 %v251
        %v293 = vunpack.c.l.b16 %v252
        %v294 = vunpack.c.l.b16 %v253
        %v295 = vunpack.c.l.b16 %v258
        %v296 = vpack.c.b16 %v281, %v280
        %v297 = vpack.c.b16 %v283, %v282
        %v298 = vpack.c.b16 %v285, %v284
        %v299 = vpack.c.b16 %v287, %v286
        %v300 = vpack.c.b16 %v289, %v288
        %v301 = vpack.c.b16 %v291, %v290
        %v302 = vpack.c.b16 %v293, %v292
        %v303 = vpack.c.b16 %v295, %v294
        %vm304 = vsmask.f32 7424
        %v306 = vshrl.u32 %v296, 16
        %v308 = vshll.u32 %v296, 16
        %v310 = vrot.slane %v308, 1
        %v311 = vor.u32 %v306, %v310
        %v313 = vshll.u32 %v297, 16
        %v315 = vrot.slane %v313, 1
        %v316 = vsel %vm304, %v311, %v315
        %v317 = vshrl.u32 %v297, 16
        %v319 = vor.u32 %v317, %v315
        %v321 = vshll.u32 %v298, 16
        %v323 = vrot.slane %v321, 1
        %v324 = vsel %vm304, %v319, %v323
        %v325 = vshrl.u32 %v298, 16
        %v327 = vor.u32 %v325, %v323
        %v329 = vshll.u32 %v299, 16
        %v331 = vrot.slane %v329, 1
        %v332 = vsel %vm304, %v327, %v331
        %v333 = vshrl.u32 %v299, 16
        %v335 = vor.u32 %v333, %v331
        %v337 = vshll.u32 %v300, 16
        %v339 = vrot.slane %v337, 1
        %v340 = vsel %vm304, %v335, %v339
        %v341 = vshrl.u32 %v300, 16
        %v343 = vor.u32 %v341, %v339
        %v345 = vshll.u32 %v301, 16
        %v347 = vrot.slane %v345, 1
        %v348 = vsel %vm304, %v343, %v347
        %v349 = vshrl.u32 %v301, 16
        %v351 = vor.u32 %v349, %v347
        %v353 = vshll.u32 %v302, 16
        %v355 = vrot.slane %v353, 1
        %v356 = vsel %vm304, %v351, %v355
        %v357 = vshrl.u32 %v302, 16
        %v359 = vor.u32 %v357, %v355
        %v361 = vshll.u32 %v303, 16
        %v363 = vrot.slane %v361, 1
        %v364 = vsel %vm304, %v359, %v363
        %v365 = vshrl.u32 %v303, 16
        %v367 = vor.u32 %v365, %v363
        %v372 = vunpack.c.l.b16 %v260
        %v373 = vunpack.c.h.b16 %v260
        %v374 = vunpack.c.l.b16 %v261
        %v375 = vunpack.c.h.b16 %v261
        %v376 = vunpack.c.l.b16 %v262
        %v377 = vunpack.c.h.b16 %v262
        %v378 = vunpack.c.l.b16 %v263
        %v379 = vunpack.c.h.b16 %v263
        %v380 = vpack.c.b16 %v374, %v372
        %v381 = vpack.c.b16 %v375, %v373
        %v382 = vpack.c.b16 %v378, %v376
        %v383 = vpack.c.b16 %v379, %v377
        %vm388 = vcmask 261120
        %v390 = vsel %vm388, %v316, 0
        %v393 = vsel %vm388, %v324, 0
        %v396 = vsel %vm388, %v332, 0
        %v399 = vsel %vm388, %v340, 0
        %v402 = vsel %vm388, %v348, 0
        %v405 = vsel %vm388, %v356, 0
        %v408 = vsel %vm388, %v364, 0
        %v411 = vsel %vm388, %v367, 0
        %413 = vmatprep.subr.bf16.mxu0 0
        %414 = vmatpush1.bf16.msra.mxu0 0
        %415 = vmatprep.subr.bf16.mxu0 0
        %416 = vmatpush1.bf16.msra.mxu0 0
        %417 = vmatprep.subr.bf16.mxu0 0
        %418 = vmatpush1.bf16.msra.mxu0 0
        %419 = vmatprep.subr.bf16.mxu0 0
        %420 = vmatpush1.bf16.msra.mxu0 0
        %421 = vmatprep.subr.bf16.mxu0 0
        %422 = vmatpush1.bf16.msra.mxu0 0
        %423 = vmatprep.subr.bf16.mxu0 0
        %424 = vmatpush1.bf16.msra.mxu0 0
        %425 = vmatprep.subr.bf16.mxu0 %v383
        %426 = vmatpush1.bf16.msra.mxu0 %v382
        %427 = vmatprep.subr.bf16.mxu0 %v381
        %428 = vmatpush1.bf16.msra.mxu0 %v380
        %429 = vmatprep.subr.bf16.mxu0 0
        %430 = vmatpush2.bf16.msra.mxu0 0
        %431 = vmatprep.subr.bf16.mxu0 0
        %432 = vmatpush2.bf16.msra.mxu0 0
        %433 = vmatprep.subr.bf16.mxu0 0
        %434 = vmatpush2.bf16.msra.mxu0 0
        %435 = vmatprep.subr.bf16.mxu0 0
        %436 = vmatpush2.bf16.msra.mxu0 0
        %437 = vmatprep.subr.bf16.mxu0 0
        %438 = vmatpush2.bf16.msra.mxu0 0
        %439 = vmatprep.subr.bf16.mxu0 0
        %440 = vmatpush2.bf16.msra.mxu0 0
        %441 = vmatprep.subr.bf16.mxu0 0
        %442 = vmatpush2.bf16.msra.mxu0 0
        %443 = vmatprep.subr.bf16.mxu0 0
        %444 = vmatpush2.bf16.msra.mxu0 0
        %445 = vmatprep.mubr.bf16.mxu0 0
        %446 = vmatmul.mubr.bf16.gmra.mxu0 %v390
        %v447 = vpop.f32.mrf.mxu0
        %v448 = vadd.f32 0.0, %v447
        %v449 = vpop.f32.mrf.mxu0
        %v450 = vadd.f32 0.0, %v449
        %v451 = vpop.f32.mrf.mxu0
        %v452 = vadd.f32 0.0, %v451
        %v453 = vpop.f32.mrf.mxu0
        %v454 = vadd.f32 0.0, %v453
        %455 = vmatprep.mubr.bf16.mxu0 0
        %456 = vmatmul.mubr.bf16.gmra.mxu0 %v393
        %v457 = vpop.f32.mrf.mxu0
        %v458 = vadd.f32 0.0, %v457
        %v459 = vpop.f32.mrf.mxu0
        %v460 = vadd.f32 0.0, %v459
        %v461 = vpop.f32.mrf.mxu0
        %v462 = vadd.f32 0.0, %v461
        %v463 = vpop.f32.mrf.mxu0
        %v464 = vadd.f32 0.0, %v463
        %465 = vmatprep.mubr.bf16.mxu0 0
        %466 = vmatmul.mubr.bf16.gmra.mxu0 %v396
        %v467 = vpop.f32.mrf.mxu0
        %v468 = vadd.f32 0.0, %v467
        %v469 = vpop.f32.mrf.mxu0
        %v470 = vadd.f32 0.0, %v469
        %v471 = vpop.f32.mrf.mxu0
        %v472 = vadd.f32 0.0, %v471
        %v473 = vpop.f32.mrf.mxu0
        %v474 = vadd.f32 0.0, %v473
        %475 = vmatprep.mubr.bf16.mxu0 0
        %476 = vmatmul.mubr.bf16.gmra.mxu0 %v399
        %v477 = vpop.f32.mrf.mxu0
        %v478 = vadd.f32 0.0, %v477
        %v479 = vpop.f32.mrf.mxu0
        %v480 = vadd.f32 0.0, %v479
        %v481 = vpop.f32.mrf.mxu0
        %v482 = vadd.f32 0.0, %v481
        %v483 = vpop.f32.mrf.mxu0
        %v484 = vadd.f32 0.0, %v483
        %485 = vmatprep.mubr.bf16.mxu0 0
        %486 = vmatmul.mubr.bf16.gmra.mxu0 %v402
        %v487 = vpop.f32.mrf.mxu0
        %v488 = vadd.f32 0.0, %v487
        %v489 = vpop.f32.mrf.mxu0
        %v490 = vadd.f32 0.0, %v489
        %v491 = vpop.f32.mrf.mxu0
        %v492 = vadd.f32 0.0, %v491
        %v493 = vpop.f32.mrf.mxu0
        %v494 = vadd.f32 0.0, %v493
        %495 = vmatprep.mubr.bf16.mxu0 0
        %496 = vmatmul.mubr.bf16.gmra.mxu0 %v405
        %v497 = vpop.f32.mrf.mxu0
        %v498 = vadd.f32 0.0, %v497
        %v499 = vpop.f32.mrf.mxu0
        %v500 = vadd.f32 0.0, %v499
        %v501 = vpop.f32.mrf.mxu0
        %v502 = vadd.f32 0.0, %v501
        %v503 = vpop.f32.mrf.mxu0
        %v504 = vadd.f32 0.0, %v503
        %505 = vmatprep.mubr.bf16.mxu0 0
        %506 = vmatmul.mubr.bf16.gmra.mxu0 %v408
        %v507 = vpop.f32.mrf.mxu0
        %v508 = vadd.f32 0.0, %v507
        %v509 = vpop.f32.mrf.mxu0
        %v510 = vadd.f32 0.0, %v509
        %v511 = vpop.f32.mrf.mxu0
        %v512 = vadd.f32 0.0, %v511
        %v513 = vpop.f32.mrf.mxu0
        %v514 = vadd.f32 0.0, %v513
        %515 = vmatprep.mubr.bf16.mxu0 0
        %516 = vmatmul.mubr.bf16.gmra.mxu0 %v411
        %v517 = vpop.f32.mrf.mxu0
        %v518 = vadd.f32 0.0, %v517
        %v519 = vpop.f32.mrf.mxu0
        %v520 = vadd.f32 0.0, %v519
        %v521 = vpop.f32.mrf.mxu0
        %v522 = vpop.f32.mrf.mxu0
        %523 = vdwg.mxu0
        %v524 = vpack.c.b16 %v294, %v294
        %v529 = vunpack.c.l.b16 %v254
        %v530 = vunpack.c.h.b16 %v254
        %v531 = vunpack.c.l.b16 %v255
        %v532 = vunpack.c.h.b16 %v255
        %v533 = vunpack.c.l.b16 %v256
        %v534 = vunpack.c.h.b16 %v256
        %v535 = vunpack.c.l.b16 %v257
        %v536 = vunpack.c.h.b16 %v257
        %v537 = vpack.c.b16 %v531, %v529
        %v538 = vpack.c.b16 %v532, %v530
        %v539 = vpack.c.b16 %v535, %v533
        %v540 = vpack.c.b16 %v536, %v534
        %v545 = vsel %vm388, %v296, 0
        %v547 = vsel %vm388, %v297, 0
        %v549 = vsel %vm388, %v298, 0
        %v551 = vsel %vm388, %v299, 0
        %v553 = vsel %vm388, %v300, 0
        %v555 = vsel %vm388, %v301, 0
        %v557 = vsel %vm388, %v302, 0
        %v560 = vsel %vm388, %v524, 0
        %562 = vmatprep.subr.bf16.mxu0 0
        %563 = vmatpush1.bf16.msra.mxu0 0
        %564 = vmatprep.subr.bf16.mxu0 0
        %565 = vmatpush1.bf16.msra.mxu0 0
        %566 = vmatprep.subr.bf16.mxu0 0
        %567 = vmatpush1.bf16.msra.mxu0 0
        %568 = vmatprep.subr.bf16.mxu0 0
        %569 = vmatpush1.bf16.msra.mxu0 0
        %570 = vmatprep.subr.bf16.mxu0 0
        %571 = vmatpush1.bf16.msra.mxu0 0
        %572 = vmatprep.subr.bf16.mxu0 0
        %573 = vmatpush1.bf16.msra.mxu0 0
        %574 = vmatprep.subr.bf16.mxu0 %v540
        %575 = vmatpush1.bf16.msra.mxu0 %v539
        %576 = vmatprep.subr.bf16.mxu0 %v538
        %577 = vmatpush1.bf16.msra.mxu0 %v537
        %578 = vmatprep.subr.bf16.mxu0 0
        %579 = vmatpush2.bf16.msra.mxu0 0
        %580 = vmatprep.subr.bf16.mxu0 0
        %581 = vmatpush2.bf16.msra.mxu0 0
        %582 = vmatprep.subr.bf16.mxu0 0
        %583 = vmatpush2.bf16.msra.mxu0 0
        %584 = vmatprep.subr.bf16.mxu0 0
        %585 = vmatpush2.bf16.msra.mxu0 0
        %586 = vmatprep.subr.bf16.mxu0 0
        %587 = vmatpush2.bf16.msra.mxu0 0
        %588 = vmatprep.subr.bf16.mxu0 0
        %589 = vmatpush2.bf16.msra.mxu0 0
        %590 = vmatprep.subr.bf16.mxu0 0
        %591 = vmatpush2.bf16.msra.mxu0 0
        %592 = vmatprep.subr.bf16.mxu0 0
        %593 = vmatpush2.bf16.msra.mxu0 0
        %594 = vmatprep.mubr.bf16.mxu0 0
        %595 = vmatmul.mubr.bf16.gmra.mxu0 %v545
        %v596 = vpop.f32.mrf.mxu0
        %v597 = vadd.f32 %v448, %v596
        %v598 = vpop.f32.mrf.mxu0
        %v599 = vadd.f32 %v450, %v598
        %v600 = vpop.f32.mrf.mxu0
        %v601 = vadd.f32 %v452, %v600
        %v602 = vpop.f32.mrf.mxu0
        %v603 = vadd.f32 %v454, %v602
        %604 = vmatprep.mubr.bf16.mxu0 0
        %605 = vmatmul.mubr.bf16.gmra.mxu0 %v547
        %v606 = vpop.f32.mrf.mxu0
        %v607 = vadd.f32 %v458, %v606
        %v608 = vpop.f32.mrf.mxu0
        %v609 = vadd.f32 %v460, %v608
        %v610 = vpop.f32.mrf.mxu0
        %v611 = vadd.f32 %v462, %v610
        %v612 = vpop.f32.mrf.mxu0
        %v613 = vadd.f32 %v464, %v612
        %614 = vmatprep.mubr.bf16.mxu0 0
        %615 = vmatmul.mubr.bf16.gmra.mxu0 %v549
        %v616 = vpop.f32.mrf.mxu0
        %v617 = vadd.f32 %v468, %v616
        %v618 = vpop.f32.mrf.mxu0
        %v619 = vadd.f32 %v470, %v618
        %v620 = vpop.f32.mrf.mxu0
        %v621 = vadd.f32 %v472, %v620
        %v622 = vpop.f32.mrf.mxu0
        %v623 = vadd.f32 %v474, %v622
        %624 = vmatprep.mubr.bf16.mxu0 0
        %625 = vmatmul.mubr.bf16.gmra.mxu0 %v551
        %v626 = vpop.f32.mrf.mxu0
        %v627 = vadd.f32 %v478, %v626
        %v628 = vpop.f32.mrf.mxu0
        %v629 = vadd.f32 %v480, %v628
        %v630 = vpop.f32.mrf.mxu0
        %v631 = vadd.f32 %v482, %v630
        %v632 = vpop.f32.mrf.mxu0
        %v633 = vadd.f32 %v484, %v632
        %634 = vmatprep.mubr.bf16.mxu0 0
        %635 = vmatmul.mubr.bf16.gmra.mxu0 %v553
        %v636 = vpop.f32.mrf.mxu0
        %v637 = vadd.f32 %v488, %v636
        %v638 = vpop.f32.mrf.mxu0
        %v639 = vadd.f32 %v490, %v638
        %v640 = vpop.f32.mrf.mxu0
        %v641 = vadd.f32 %v492, %v640
        %v642 = vpop.f32.mrf.mxu0
        %v643 = vadd.f32 %v494, %v642
        %644 = vmatprep.mubr.bf16.mxu0 0
        %645 = vmatmul.mubr.bf16.gmra.mxu0 %v555
        %v646 = vpop.f32.mrf.mxu0
        %v647 = vadd.f32 %v498, %v646
        %v648 = vpop.f32.mrf.mxu0
        %v649 = vadd.f32 %v500, %v648
        %v650 = vpop.f32.mrf.mxu0
        %v651 = vadd.f32 %v502, %v650
        %v652 = vpop.f32.mrf.mxu0
        %v653 = vadd.f32 %v504, %v652
        %654 = vmatprep.mubr.bf16.mxu0 0
        %655 = vmatmul.mubr.bf16.gmra.mxu0 %v557
        %v656 = vpop.f32.mrf.mxu0
        %v657 = vadd.f32 %v508, %v656
        %v658 = vpop.f32.mrf.mxu0
        %v659 = vadd.f32 %v510, %v658
        %v660 = vpop.f32.mrf.mxu0
        %v661 = vadd.f32 %v512, %v660
        %v662 = vpop.f32.mrf.mxu0
        %v663 = vadd.f32 %v514, %v662
        %664 = vmatprep.mubr.bf16.mxu0 0
        %665 = vmatmul.mubr.bf16.gmra.mxu0 %v560
        %v666 = vpop.f32.mrf.mxu0
        %v667 = vadd.f32 %v518, %v666
        %v668 = vpop.f32.mrf.mxu0
        %v669 = vadd.f32 %v520, %v668
        %v670 = vpop.f32.mrf.mxu0
        %v671 = vpop.f32.mrf.mxu0
        %672 = vdwg.mxu0
        %v673 = vld [vmem:[%s237 + $0x8] sm:$0xf]
        %v674 = vld [vmem:[%s237 + $0xc] sm:$0xf]
        %v675 = vld [vmem:[%s237 + $0x10] sm:$0xf]
        %v676 = vld [vmem:[%s237 + $0x14] sm:$0xf]
        %v677 = vld [vmem:[%s237 + $0x18] sm:$0xf]
        %v678 = vld [vmem:[%s237 + $0x1c] sm:$0xf]
        %v679 = vld [vmem:[%s237 + $0x20] sm:$0xf]
        %v680 = vld [vmem:[%s237 + $0x24] sm:$0xf]
        %v681 = vld [vmem:[%s237 + $0x28] sm:$0xf]
        %v682 = vld [vmem:[%s237 + $0x2c] sm:$0xf]
        %v683 = vld [vmem:[%s237 + $0x30] sm:$0xf]
        %v684 = vld [vmem:[%s237 + $0x34] sm:$0xf]
        %v685 = vld [vmem:[%s237 + $0x38] sm:$0xf]
        %v686 = vld [vmem:[%s237 + $0x3c] sm:$0xf]
        %v687 = vld [vmem:[%s237 + $0x40] sm:$0xf]
        %s688 = scalar_lea.vmem %s1, 64
        %v689 = vld [vmem:[%s688] sm:$0xff]
        %v690 = vld [vmem:[%s688 + $0x8] sm:$0xff]
        %v691 = vld [vmem:[%s688 + $0x10] sm:$0xff]
        %v692 = vld [vmem:[%s688 + $0x18] sm:$0xff]
        %v708 = vunpack.c.l.b16 %v673
        %v709 = vunpack.c.l.b16 %v674
        %v710 = vunpack.c.l.b16 %v675
        %v711 = vunpack.c.l.b16 %v676
        %v712 = vunpack.c.l.b16 %v677
        %v713 = vunpack.c.l.b16 %v678
        %v714 = vunpack.c.l.b16 %v679
        %v715 = vunpack.c.l.b16 %v680
        %v716 = vunpack.c.l.b16 %v681
        %v717 = vunpack.c.l.b16 %v682
        %v718 = vunpack.c.l.b16 %v683
        %v719 = vunpack.c.l.b16 %v684
        %v720 = vunpack.c.l.b16 %v685
        %v721 = vunpack.c.l.b16 %v686
        %v722 = vunpack.c.l.b16 %v687
        %v723 = vpack.c.b16 %v709, %v708
        %v724 = vpack.c.b16 %v711, %v710
        %v725 = vpack.c.b16 %v713, %v712
        %v726 = vpack.c.b16 %v715, %v714
        %v727 = vpack.c.b16 %v717, %v716
        %v728 = vpack.c.b16 %v719, %v718
        %v729 = vpack.c.b16 %v721, %v720
        %v730 = vpack.c.b16 %v722, %v722
        %v735 = vunpack.c.l.b16 %v689
        %v736 = vunpack.c.h.b16 %v689
        %v737 = vunpack.c.l.b16 %v690
        %v738 = vunpack.c.h.b16 %v690
        %v739 = vunpack.c.l.b16 %v691
        %v740 = vunpack.c.h.b16 %v691
        %v741 = vunpack.c.l.b16 %v692
        %v742 = vunpack.c.h.b16 %v692
        %v743 = vpack.c.b16 %v737, %v735
        %v744 = vpack.c.b16 %v738, %v736
        %v745 = vpack.c.b16 %v741, %v739
        %v746 = vpack.c.b16 %v742, %v740
        %v752 = vsel %vm388, %v723, 0
        %v755 = vsel %vm388, %v724, 0
        %v758 = vsel %vm388, %v725, 0
        %v761 = vsel %vm388, %v726, 0
        %v764 = vsel %vm388, %v727, 0
        %v767 = vsel %vm388, %v728, 0
        %v770 = vsel %vm388, %v729, 0
        %v773 = vsel %vm388, %v730, 0
        %775 = vmatprep.subr.bf16.mxu0 0
        %776 = vmatpush1.bf16.msra.mxu0 0
        %777 = vmatprep.subr.bf16.mxu0 0
        %778 = vmatpush1.bf16.msra.mxu0 0
        %779 = vmatprep.subr.bf16.mxu0 0
        %780 = vmatpush1.bf16.msra.mxu0 0
        %781 = vmatprep.subr.bf16.mxu0 0
        %782 = vmatpush1.bf16.msra.mxu0 0
        %783 = vmatprep.subr.bf16.mxu0 0
        %784 = vmatpush1.bf16.msra.mxu0 0
        %785 = vmatprep.subr.bf16.mxu0 0
        %786 = vmatpush1.bf16.msra.mxu0 0
        %787 = vmatprep.subr.bf16.mxu0 %v746
        %788 = vmatpush1.bf16.msra.mxu0 %v745
        %789 = vmatprep.subr.bf16.mxu0 %v744
        %790 = vmatpush1.bf16.msra.mxu0 %v743
        %791 = vmatprep.subr.bf16.mxu0 0
        %792 = vmatpush2.bf16.msra.mxu0 0
        %793 = vmatprep.subr.bf16.mxu0 0
        %794 = vmatpush2.bf16.msra.mxu0 0
        %795 = vmatprep.subr.bf16.mxu0 0
        %796 = vmatpush2.bf16.msra.mxu0 0
        %797 = vmatprep.subr.bf16.mxu0 0
        %798 = vmatpush2.bf16.msra.mxu0 0
        %799 = vmatprep.subr.bf16.mxu0 0
        %800 = vmatpush2.bf16.msra.mxu0 0
        %801 = vmatprep.subr.bf16.mxu0 0
        %802 = vmatpush2.bf16.msra.mxu0 0
        %803 = vmatprep.subr.bf16.mxu0 0
        %804 = vmatpush2.bf16.msra.mxu0 0
        %805 = vmatprep.subr.bf16.mxu0 0
        %806 = vmatpush2.bf16.msra.mxu0 0
        %807 = vmatprep.mubr.bf16.mxu0 0
        %808 = vmatmul.mubr.bf16.gmra.mxu0 %v752
        %v809 = vpop.f32.mrf.mxu0
        %v810 = vadd.f32 0.0, %v809
        %v811 = vpop.f32.mrf.mxu0
        %v812 = vadd.f32 0.0, %v811
        %v813 = vpop.f32.mrf.mxu0
        %v814 = vadd.f32 0.0, %v813
        %v815 = vpop.f32.mrf.mxu0
        %v816 = vadd.f32 0.0, %v815
        %817 = vmatprep.mubr.bf16.mxu0 0
        %818 = vmatmul.mubr.bf16.gmra.mxu0 %v755
        %v819 = vpop.f32.mrf.mxu0
        %v820 = vadd.f32 0.0, %v819
        %v821 = vpop.f32.mrf.mxu0
        %v822 = vadd.f32 0.0, %v821
        %v823 = vpop.f32.mrf.mxu0
        %v824 = vadd.f32 0.0, %v823
        %v825 = vpop.f32.mrf.mxu0
        %v826 = vadd.f32 0.0, %v825
        %827 = vmatprep.mubr.bf16.mxu0 0
        %828 = vmatmul.mubr.bf16.gmra.mxu0 %v758
        %v829 = vpop.f32.mrf.mxu0
        %v830 = vadd.f32 0.0, %v829
        %v831 = vpop.f32.mrf.mxu0
        %v832 = vadd.f32 0.0, %v831
        %v833 = vpop.f32.mrf.mxu0
        %v834 = vadd.f32 0.0, %v833
        %v835 = vpop.f32.mrf.mxu0
        %v836 = vadd.f32 0.0, %v835
        %837 = vmatprep.mubr.bf16.mxu0 0
        %838 = vmatmul.mubr.bf16.gmra.mxu0 %v761
        %v839 = vpop.f32.mrf.mxu0
        %v840 = vadd.f32 0.0, %v839
        %v841 = vpop.f32.mrf.mxu0
        %v842 = vadd.f32 0.0, %v841
        %v843 = vpop.f32.mrf.mxu0
        %v844 = vadd.f32 0.0, %v843
        %v845 = vpop.f32.mrf.mxu0
        %v846 = vadd.f32 0.0, %v845
        %847 = vmatprep.mubr.bf16.mxu0 0
        %848 = vmatmul.mubr.bf16.gmra.mxu0 %v764
        %v849 = vpop.f32.mrf.mxu0
        %v850 = vadd.f32 0.0, %v849
        %v851 = vpop.f32.mrf.mxu0
        %v852 = vadd.f32 0.0, %v851
        %v853 = vpop.f32.mrf.mxu0
        %v854 = vadd.f32 0.0, %v853
        %v855 = vpop.f32.mrf.mxu0
        %v856 = vadd.f32 0.0, %v855
        %857 = vmatprep.mubr.bf16.mxu0 0
        %858 = vmatmul.mubr.bf16.gmra.mxu0 %v767
        %v859 = vpop.f32.mrf.mxu0
        %v860 = vadd.f32 0.0, %v859
        %v861 = vpop.f32.mrf.mxu0
        %v862 = vadd.f32 0.0, %v861
        %v863 = vpop.f32.mrf.mxu0
        %v864 = vadd.f32 0.0, %v863
        %v865 = vpop.f32.mrf.mxu0
        %v866 = vadd.f32 0.0, %v865
        %867 = vmatprep.mubr.bf16.mxu0 0
        %868 = vmatmul.mubr.bf16.gmra.mxu0 %v770
        %v869 = vpop.f32.mrf.mxu0
        %v870 = vadd.f32 0.0, %v869
        %v871 = vpop.f32.mrf.mxu0
        %v872 = vadd.f32 0.0, %v871
        %v873 = vpop.f32.mrf.mxu0
        %v874 = vadd.f32 0.0, %v873
        %v875 = vpop.f32.mrf.mxu0
        %v876 = vadd.f32 0.0, %v875
        %877 = vmatprep.mubr.bf16.mxu0 0
        %878 = vmatmul.mubr.bf16.gmra.mxu0 %v773
        %v879 = vpop.f32.mrf.mxu0
        %v880 = vadd.f32 0.0, %v879
        %v881 = vpop.f32.mrf.mxu0
        %v882 = vadd.f32 0.0, %v881
        %v883 = vpop.f32.mrf.mxu0
        %v884 = vpop.f32.mrf.mxu0
        %885 = vdwg.mxu0
        %v886 = vadd.f32 %v597, %v810
        %v887 = vadd.f32 %v599, %v812
        %v888 = vadd.f32 %v601, %v814
        %v889 = vadd.f32 %v603, %v816
        %v890 = vadd.f32 %v607, %v820
        %v891 = vadd.f32 %v609, %v822
        %v892 = vadd.f32 %v611, %v824
        %v893 = vadd.f32 %v613, %v826
        %v894 = vadd.f32 %v617, %v830
        %v895 = vadd.f32 %v619, %v832
        %v896 = vadd.f32 %v621, %v834
        %v897 = vadd.f32 %v623, %v836
        %v898 = vadd.f32 %v627, %v840
        %v899 = vadd.f32 %v629, %v842
        %v900 = vadd.f32 %v631, %v844
        %v901 = vadd.f32 %v633, %v846
        %v902 = vadd.f32 %v637, %v850
        %v903 = vadd.f32 %v639, %v852
        %v904 = vadd.f32 %v641, %v854
        %v905 = vadd.f32 %v643, %v856
        %v906 = vadd.f32 %v647, %v860
        %v907 = vadd.f32 %v649, %v862
        %v908 = vadd.f32 %v651, %v864
        %v909 = vadd.f32 %v653, %v866
        %v910 = vadd.f32 %v657, %v870
        %v911 = vadd.f32 %v659, %v872
        %v912 = vadd.f32 %v661, %v874
        %v913 = vadd.f32 %v663, %v876
        %v914 = vadd.f32 %v667, %v880
        %v915 = vadd.f32 %v669, %v882
        %v916 = vld [vmem:[%s237 + $0x8] sm:$0xf]
        %v917 = vld [vmem:[%s237 + $0xc] sm:$0xf]
        %v918 = vld [vmem:[%s237 + $0x10] sm:$0xf]
        %v919 = vld [vmem:[%s237 + $0x14] sm:$0xf]
        %v920 = vld [vmem:[%s237 + $0x18] sm:$0xf]
        %v921 = vld [vmem:[%s237 + $0x1c] sm:$0xf]
        %v922 = vld [vmem:[%s237 + $0x20] sm:$0xf]
        %v923 = vld [vmem:[%s237 + $0x24] sm:$0xf]
        %v924 = vld [vmem:[%s237 + $0x28] sm:$0xf]
        %v925 = vld [vmem:[%s237 + $0x2c] sm:$0xf]
        %v926 = vld [vmem:[%s237 + $0x30] sm:$0xf]
        %v927 = vld [vmem:[%s237 + $0x34] sm:$0xf]
        %v928 = vld [vmem:[%s237 + $0x38] sm:$0xf]
        %v929 = vld [vmem:[%s237 + $0x3c] sm:$0xf]
        %v930 = vld [vmem:[%s237 + $0x40] sm:$0xf]
        %v931 = vld [vmem:[%s237 + $0x44] sm:$0x1]
        %s932 = scalar_lea.vmem %s1, 96
        %v933 = vld [vmem:[%s932] sm:$0xff]
        %v934 = vld [vmem:[%s932 + $0x8] sm:$0xff]
        %v935 = vld [vmem:[%s932 + $0x10] sm:$0xff]
        %v936 = vld [vmem:[%s932 + $0x18] sm:$0xff]
        %v953 = vunpack.c.l.b16 %v916
        %v954 = vunpack.c.l.b16 %v917
        %v955 = vunpack.c.l.b16 %v918
        %v956 = vunpack.c.l.b16 %v919
        %v957 = vunpack.c.l.b16 %v920
        %v958 = vunpack.c.l.b16 %v921
        %v959 = vunpack.c.l.b16 %v922
        %v960 = vunpack.c.l.b16 %v923
        %v961 = vunpack.c.l.b16 %v924
        %v962 = vunpack.c.l.b16 %v925
        %v963 = vunpack.c.l.b16 %v926
        %v964 = vunpack.c.l.b16 %v927
        %v965 = vunpack.c.l.b16 %v928
        %v966 = vunpack.c.l.b16 %v929
        %v967 = vunpack.c.l.b16 %v930
        %v968 = vunpack.c.l.b16 %v931
        %v969 = vpack.c.b16 %v954, %v953
        %v970 = vpack.c.b16 %v956, %v955
        %v971 = vpack.c.b16 %v958, %v957
        %v972 = vpack.c.b16 %v960, %v959
        %v973 = vpack.c.b16 %v962, %v961
        %v974 = vpack.c.b16 %v964, %v963
        %v975 = vpack.c.b16 %v966, %v965
        %v976 = vpack.c.b16 %v968, %v967
        %v978 = vshrl.u32 %v969, 16
        %v980 = vshll.u32 %v969, 16
        %v982 = vrot.slane %v980, 1
        %v983 = vor.u32 %v978, %v982
        %v985 = vshll.u32 %v970, 16
        %v987 = vrot.slane %v985, 1
        %v988 = vsel %vm304, %v983, %v987
        %v989 = vshrl.u32 %v970, 16
        %v991 = vor.u32 %v989, %v987
        %v993 = vshll.u32 %v971, 16
        %v995 = vrot.slane %v993, 1
        %v996 = vsel %vm304, %v991, %v995
        %v997 = vshrl.u32 %v971, 16
        %v999 = vor.u32 %v997, %v995
        %v1001 = vshll.u32 %v972, 16
        %v1003 = vrot.slane %v1001, 1
        %v1004 = vsel %vm304, %v999, %v1003
        %v1005 = vshrl.u32 %v972, 16
        %v1007 = vor.u32 %v1005, %v1003
        %v1009 = vshll.u32 %v973, 16
        %v1011 = vrot.slane %v1009, 1
        %v1012 = vsel %vm304, %v1007, %v1011
        %v1013 = vshrl.u32 %v973, 16
        %v1015 = vor.u32 %v1013, %v1011
        %v1017 = vshll.u32 %v974, 16
        %v1019 = vrot.slane %v1017, 1
        %v1020 = vsel %vm304, %v1015, %v1019
        %v1021 = vshrl.u32 %v974, 16
        %v1023 = vor.u32 %v1021, %v1019
        %v1025 = vshll.u32 %v975, 16
        %v1027 = vrot.slane %v1025, 1
        %v1028 = vsel %vm304, %v1023, %v1027
        %v1029 = vshrl.u32 %v975, 16
        %v1031 = vor.u32 %v1029, %v1027
        %v1033 = vshll.u32 %v976, 16
        %v1035 = vrot.slane %v1033, 1
        %v1036 = vsel %vm304, %v1031, %v1035
        %v1037 = vshrl.u32 %v976, 16
        %v1039 = vor.u32 %v1037, %v1035
        %v1044 = vunpack.c.l.b16 %v933
        %v1045 = vunpack.c.h.b16 %v933
        %v1046 = vunpack.c.l.b16 %v934
        %v1047 = vunpack.c.h.b16 %v934
        %v1048 = vunpack.c.l.b16 %v935
        %v1049 = vunpack.c.h.b16 %v935
        %v1050 = vunpack.c.l.b16 %v936
        %v1051 = vunpack.c.h.b16 %v936
        %v1052 = vpack.c.b16 %v1046, %v1044
        %v1053 = vpack.c.b16 %v1047, %v1045
        %v1054 = vpack.c.b16 %v1050, %v1048
        %v1055 = vpack.c.b16 %v1051, %v1049
        %v1061 = vsel %vm388, %v988, 0
        %v1064 = vsel %vm388, %v996, 0
        %v1067 = vsel %vm388, %v1004, 0
        %v1070 = vsel %vm388, %v1012, 0
        %v1073 = vsel %vm388, %v1020, 0
        %v1076 = vsel %vm388, %v1028, 0
        %v1079 = vsel %vm388, %v1036, 0
        %v1082 = vsel %vm388, %v1039, 0
        %1084 = vmatprep.subr.bf16.mxu0 0
        %1085 = vmatpush1.bf16.msra.mxu0 0
        %1086 = vmatprep.subr.bf16.mxu0 0
        %1087 = vmatpush1.bf16.msra.mxu0 0
        %1088 = vmatprep.subr.bf16.mxu0 0
        %1089 = vmatpush1.bf16.msra.mxu0 0
        %1090 = vmatprep.subr.bf16.mxu0 0
        %1091 = vmatpush1.bf16.msra.mxu0 0
        %1092 = vmatprep.subr.bf16.mxu0 0
        %1093 = vmatpush1.bf16.msra.mxu0 0
        %1094 = vmatprep.subr.bf16.mxu0 0
        %1095 = vmatpush1.bf16.msra.mxu0 0
        %1096 = vmatprep.subr.bf16.mxu0 %v1055
        %1097 = vmatpush1.bf16.msra.mxu0 %v1054
        %1098 = vmatprep.subr.bf16.mxu0 %v1053
        %1099 = vmatpush1.bf16.msra.mxu0 %v1052
        %1100 = vmatprep.subr.bf16.mxu0 0
        %1101 = vmatpush2.bf16.msra.mxu0 0
        %1102 = vmatprep.subr.bf16.mxu0 0
        %1103 = vmatpush2.bf16.msra.mxu0 0
        %1104 = vmatprep.subr.bf16.mxu0 0
        %1105 = vmatpush2.bf16.msra.mxu0 0
        %1106 = vmatprep.subr.bf16.mxu0 0
        %1107 = vmatpush2.bf16.msra.mxu0 0
        %1108 = vmatprep.subr.bf16.mxu0 0
        %1109 = vmatpush2.bf16.msra.mxu0 0
        %1110 = vmatprep.subr.bf16.mxu0 0
        %1111 = vmatpush2.bf16.msra.mxu0 0
        %1112 = vmatprep.subr.bf16.mxu0 0
        %1113 = vmatpush2.bf16.msra.mxu0 0
        %1114 = vmatprep.subr.bf16.mxu0 0
        %1115 = vmatpush2.bf16.msra.mxu0 0
        %1116 = vmatprep.mubr.bf16.mxu0 0
        %1117 = vmatmul.mubr.bf16.gmra.mxu0 %v1061
        %v1118 = vpop.f32.mrf.mxu0
        %v1119 = vadd.f32 0.0, %v1118
        %v1120 = vpop.f32.mrf.mxu0
        %v1121 = vadd.f32 0.0, %v1120
        %v1122 = vpop.f32.mrf.mxu0
        %v1123 = vadd.f32 0.0, %v1122
        %v1124 = vpop.f32.mrf.mxu0
        %v1125 = vadd.f32 0.0, %v1124
        %1126 = vmatprep.mubr.bf16.mxu0 0
        %1127 = vmatmul.mubr.bf16.gmra.mxu0 %v1064
        %v1128 = vpop.f32.mrf.mxu0
        %v1129 = vadd.f32 0.0, %v1128
        %v1130 = vpop.f32.mrf.mxu0
        %v1131 = vadd.f32 0.0, %v1130
        %v1132 = vpop.f32.mrf.mxu0
        %v1133 = vadd.f32 0.0, %v1132
        %v1134 = vpop.f32.mrf.mxu0
        %v1135 = vadd.f32 0.0, %v1134
        %1136 = vmatprep.mubr.bf16.mxu0 0
        %1137 = vmatmul.mubr.bf16.gmra.mxu0 %v1067
        %v1138 = vpop.f32.mrf.mxu0
        %v1139 = vadd.f32 0.0, %v1138
        %v1140 = vpop.f32.mrf.mxu0
        %v1141 = vadd.f32 0.0, %v1140
        %v1142 = vpop.f32.mrf.mxu0
        %v1143 = vadd.f32 0.0, %v1142
        %v1144 = vpop.f32.mrf.mxu0
        %v1145 = vadd.f32 0.0, %v1144
        %1146 = vmatprep.mubr.bf16.mxu0 0
        %1147 = vmatmul.mubr.bf16.gmra.mxu0 %v1070
        %v1148 = vpop.f32.mrf.mxu0
        %v1149 = vadd.f32 0.0, %v1148
        %v1150 = vpop.f32.mrf.mxu0
        %v1151 = vadd.f32 0.0, %v1150
        %v1152 = vpop.f32.mrf.mxu0
        %v1153 = vadd.f32 0.0, %v1152
        %v1154 = vpop.f32.mrf.mxu0
        %v1155 = vadd.f32 0.0, %v1154
        %1156 = vmatprep.mubr.bf16.mxu0 0
        %1157 = vmatmul.mubr.bf16.gmra.mxu0 %v1073
        %v1158 = vpop.f32.mrf.mxu0
        %v1159 = vadd.f32 0.0, %v1158
        %v1160 = vpop.f32.mrf.mxu0
        %v1161 = vadd.f32 0.0, %v1160
        %v1162 = vpop.f32.mrf.mxu0
        %v1163 = vadd.f32 0.0, %v1162
        %v1164 = vpop.f32.mrf.mxu0
        %v1165 = vadd.f32 0.0, %v1164
        %1166 = vmatprep.mubr.bf16.mxu0 0
        %1167 = vmatmul.mubr.bf16.gmra.mxu0 %v1076
        %v1168 = vpop.f32.mrf.mxu0
        %v1169 = vadd.f32 0.0, %v1168
        %v1170 = vpop.f32.mrf.mxu0
        %v1171 = vadd.f32 0.0, %v1170
        %v1172 = vpop.f32.mrf.mxu0
        %v1173 = vadd.f32 0.0, %v1172
        %v1174 = vpop.f32.mrf.mxu0
        %v1175 = vadd.f32 0.0, %v1174
        %1176 = vmatprep.mubr.bf16.mxu0 0
        %1177 = vmatmul.mubr.bf16.gmra.mxu0 %v1079
        %v1178 = vpop.f32.mrf.mxu0
        %v1179 = vadd.f32 0.0, %v1178
        %v1180 = vpop.f32.mrf.mxu0
        %v1181 = vadd.f32 0.0, %v1180
        %v1182 = vpop.f32.mrf.mxu0
        %v1183 = vadd.f32 0.0, %v1182
        %v1184 = vpop.f32.mrf.mxu0
        %v1185 = vadd.f32 0.0, %v1184
        %1186 = vmatprep.mubr.bf16.mxu0 0
        %1187 = vmatmul.mubr.bf16.gmra.mxu0 %v1082
        %v1188 = vpop.f32.mrf.mxu0
        %v1189 = vadd.f32 0.0, %v1188
        %v1190 = vpop.f32.mrf.mxu0
        %v1191 = vadd.f32 0.0, %v1190
        %v1192 = vpop.f32.mrf.mxu0
        %v1193 = vpop.f32.mrf.mxu0
        %1194 = vdwg.mxu0
        %v1195 = vadd.f32 %v886, %v1119
        %v1196 = vadd.f32 %v887, %v1121
        %v1197 = vadd.f32 %v888, %v1123
        %v1198 = vadd.f32 %v889, %v1125
        %v1199 = vadd.f32 %v890, %v1129
        %v1200 = vadd.f32 %v891, %v1131
        %v1201 = vadd.f32 %v892, %v1133
        %v1202 = vadd.f32 %v893, %v1135
        %v1203 = vadd.f32 %v894, %v1139
        %v1204 = vadd.f32 %v895, %v1141
        %v1205 = vadd.f32 %v896, %v1143
        %v1206 = vadd.f32 %v897, %v1145
        %v1207 = vadd.f32 %v898, %v1149
        %v1208 = vadd.f32 %v899, %v1151
        %v1209 = vadd.f32 %v900, %v1153
        %v1210 = vadd.f32 %v901, %v1155
        %v1211 = vadd.f32 %v902, %v1159
        %v1212 = vadd.f32 %v903, %v1161
        %v1213 = vadd.f32 %v904, %v1163
        %v1214 = vadd.f32 %v905, %v1165
        %v1215 = vadd.f32 %v906, %v1169
        %v1216 = vadd.f32 %v907, %v1171
        %v1217 = vadd.f32 %v908, %v1173
        %v1218 = vadd.f32 %v909, %v1175
        %v1219 = vadd.f32 %v910, %v1179
        %v1220 = vadd.f32 %v911, %v1181
        %v1221 = vadd.f32 %v912, %v1183
        %v1222 = vadd.f32 %v913, %v1185
        %v1223 = vadd.f32 %v914, %v1189
        %v1224 = vadd.f32 %v915, %v1191
        %v1225 = vld [vmem:[%s3] sm:$0x1]
        %v1226 = vlaneseq
        %v1227 = vshrl.u32 %v1226, 7
        %v1228 = vsub.s32 0, %v1227
        %v1229 = vrot.slane %v1225, %v1228
        %v1230 = vmul.f32 %v1195, %v1229
        %v1231 = vmul.f32 %v1197, %v1229
        %v1232 = vmul.f32 %v1199, %v1229
        %v1233 = vmul.f32 %v1201, %v1229
        %v1234 = vmul.f32 %v1203, %v1229
        %v1235 = vmul.f32 %v1205, %v1229
        %v1236 = vmul.f32 %v1207, %v1229
        %v1237 = vmul.f32 %v1209, %v1229
        %v1238 = vmul.f32 %v1211, %v1229
        %v1239 = vmul.f32 %v1213, %v1229
        %v1240 = vmul.f32 %v1215, %v1229
        %v1241 = vmul.f32 %v1217, %v1229
        %v1242 = vmul.f32 %v1219, %v1229
        %v1243 = vmul.f32 %v1221, %v1229
        %v1244 = vmul.f32 %v1223, %v1229
        %v1245 = vld [vmem:[%s3 + $0x1] sm:$0x1]
        %v1246 = vlaneseq
        %v1247 = vshrl.u32 %v1246, 7
        %v1248 = vsub.s32 0, %v1247
        %v1249 = vrot.slane %v1245, %v1248
        %v1250 = vadd.f32 %v1230, %v1249
        %v1251 = vadd.f32 %v1231, %v1249
        %v1252 = vadd.f32 %v1232, %v1249
        %v1253 = vadd.f32 %v1233, %v1249
        %v1254 = vadd.f32 %v1234, %v1249
        %v1255 = vadd.f32 %v1235, %v1249
        %v1256 = vadd.f32 %v1236, %v1249
        %v1257 = vadd.f32 %v1237, %v1249
        %v1258 = vadd.f32 %v1238, %v1249
        %v1259 = vadd.f32 %v1239, %v1249
        %v1260 = vadd.f32 %v1240, %v1249
        %v1261 = vadd.f32 %v1241, %v1249
        %v1262 = vadd.f32 %v1242, %v1249
        %v1263 = vadd.f32 %v1243, %v1249
        %v1264 = vadd.f32 %v1244, %v1249
        %v1265 = vmax.f32 %v1250, 0.0
        %v1266 = vmax.f32 %v1251, 0.0
        %v1267 = vmax.f32 %v1252, 0.0
        %v1268 = vmax.f32 %v1253, 0.0
        %v1269 = vmax.f32 %v1254, 0.0
        %v1270 = vmax.f32 %v1255, 0.0
        %v1271 = vmax.f32 %v1256, 0.0
        %v1272 = vmax.f32 %v1257, 0.0
        %v1273 = vmax.f32 %v1258, 0.0
        %v1274 = vmax.f32 %v1259, 0.0
        %v1275 = vmax.f32 %v1260, 0.0
        %v1276 = vmax.f32 %v1261, 0.0
        %v1277 = vmax.f32 %v1262, 0.0
        %v1278 = vmax.f32 %v1263, 0.0
        %v1279 = vmax.f32 %v1264, 0.0
        %v1280 = vld [vmem:[%s4] sm:$0xff]
        %v1281 = vld [vmem:[%s4 + $0x8] sm:$0xff]
        %v1282 = vld [vmem:[%s4 + $0x10] sm:$0xff]
        %v1283 = vld [vmem:[%s4 + $0x18] sm:$0xff]
        %v1284 = vld [vmem:[%s4 + $0x20] sm:$0xff]
        %v1285 = vld [vmem:[%s4 + $0x28] sm:$0xff]
        %v1286 = vld [vmem:[%s4 + $0x30] sm:$0xff]
        %v1287 = vld [vmem:[%s4 + $0x38] sm:$0xff]
        %v1288 = vld [vmem:[%s4 + $0x40] sm:$0xff]
        %v1289 = vld [vmem:[%s4 + $0x48] sm:$0xff]
        %v1290 = vld [vmem:[%s4 + $0x50] sm:$0xff]
        %v1291 = vld [vmem:[%s4 + $0x58] sm:$0xff]
        %v1292 = vld [vmem:[%s4 + $0x60] sm:$0xff]
        %v1293 = vld [vmem:[%s4 + $0x68] sm:$0xff]
        %v1294 = vld [vmem:[%s4 + $0x70] sm:$0xff]
        %1296 = vset.pattern.permute.xlu0 0
        %1297 = vperm.xlu0 %1296, %v1280
        %v1298 = vpop.permute.xlu0 %1297
        %1301 = vset.pattern.permute.xlu0 0
        %1302 = vperm.xlu0 %1301, %v1281
        %v1303 = vpop.permute.xlu0 %1302
        %1306 = vset.pattern.permute.xlu0 0
        %1307 = vperm.xlu0 %1306, %v1282
        %v1308 = vpop.permute.xlu0 %1307
        %1311 = vset.pattern.permute.xlu0 0
        %1312 = vperm.xlu0 %1311, %v1283
        %v1313 = vpop.permute.xlu0 %1312
        %1316 = vset.pattern.permute.xlu0 0
        %1317 = vperm.xlu0 %1316, %v1284
        %v1318 = vpop.permute.xlu0 %1317
        %1321 = vset.pattern.permute.xlu0 0
        %1322 = vperm.xlu0 %1321, %v1285
        %v1323 = vpop.permute.xlu0 %1322
        %1326 = vset.pattern.permute.xlu0 0
        %1327 = vperm.xlu0 %1326, %v1286
        %v1328 = vpop.permute.xlu0 %1327
        %1331 = vset.pattern.permute.xlu0 0
        %1332 = vperm.xlu0 %1331, %v1287
        %v1333 = vpop.permute.xlu0 %1332
        %1336 = vset.pattern.permute.xlu0 0
        %1337 = vperm.xlu0 %1336, %v1288
        %v1338 = vpop.permute.xlu0 %1337
        %1341 = vset.pattern.permute.xlu0 0
        %1342 = vperm.xlu0 %1341, %v1289
        %v1343 = vpop.permute.xlu0 %1342
        %1346 = vset.pattern.permute.xlu0 0
        %1347 = vperm.xlu0 %1346, %v1290
        %v1348 = vpop.permute.xlu0 %1347
        %1351 = vset.pattern.permute.xlu0 0
        %1352 = vperm.xlu0 %1351, %v1291
        %v1353 = vpop.permute.xlu0 %1352
        %1356 = vset.pattern.permute.xlu0 0
        %1357 = vperm.xlu0 %1356, %v1292
        %v1358 = vpop.permute.xlu0 %1357
        %1361 = vset.pattern.permute.xlu0 0
        %1362 = vperm.xlu0 %1361, %v1293
        %v1363 = vpop.permute.xlu0 %1362
        %1366 = vset.pattern.permute.xlu0 0
        %1367 = vperm.xlu0 %1366, %v1294
        %v1368 = vpop.permute.xlu0 %1367
        %v1370 = vmul.f32 %v1265, %v1298
        %v1371 = vmul.f32 %v1266, %v1303
        %v1372 = vmul.f32 %v1267, %v1308
        %v1373 = vmul.f32 %v1268, %v1313
        %v1374 = vmul.f32 %v1269, %v1318
        %v1375 = vmul.f32 %v1270, %v1323
        %v1376 = vmul.f32 %v1271, %v1328
        %v1377 = vmul.f32 %v1272, %v1333
        %v1378 = vmul.f32 %v1273, %v1338
        %v1379 = vmul.f32 %v1274, %v1343
        %v1380 = vmul.f32 %v1275, %v1348
        %v1381 = vmul.f32 %v1276, %v1353
        %v1382 = vmul.f32 %v1277, %v1358
        %v1383 = vmul.f32 %v1278, %v1363
        %v1384 = vmul.f32 %v1279, %v1368
        %1385 = vst [vmem:[#allocation2] sm:$0xf] 0
        %1386 = vst [vmem:[#allocation2 + $0x4] sm:$0xf] 0
        %vm1387 = vcmask 1040384
        %vm1388 = vsmask.f32 256
        %vm1389 = vmand %vm1387, %vm1388
        %v1390 = vld [vmem:[#allocation2 + $0x8] sm:$0x1]
        %v1391 = vsel %vm1389, 0, %v1390
        %1392 = vst [vmem:[#allocation2 + $0x8] sm:$0x1] %v1391
        %vm1393 = vcmask 1043456
        %vm1394 = vsmask.f32 7938
        %vm1395 = vmand %vm1393, %vm1394
        %v1396 = vld [vmem:[#allocation2 + $0x44] sm:$0xf]
        %v1397 = vsel %vm1395, 0, %v1396
        %1398 = vst [vmem:[#allocation2 + $0x44] sm:$0xf] %v1397
        %1399 = vst [vmem:[#allocation2 + $0x48] sm:$0xf] 0
        %1400 = vst [vmem:[#allocation2 + $0x4c] sm:$0x1] 0
        %v1401 = vpack.c.bf16 %v1371, %v1370
        %v1402 = vpack.c.bf16 %v1373, %v1372
        %v1403 = vpack.c.bf16 %v1375, %v1374
        %v1404 = vpack.c.bf16 %v1377, %v1376
        %v1405 = vpack.c.bf16 %v1379, %v1378
        %v1406 = vpack.c.bf16 %v1381, %v1380
        %v1407 = vpack.c.bf16 %v1383, %v1382
        %v1408 = vpack.c.bf16 %v1384, %v1384
        %v1417 = vunpack.c.l.b16 %v1401
        %v1418 = vunpack.c.h.b16 %v1401
        %v1419 = vunpack.c.l.b16 %v1402
        %v1420 = vunpack.c.h.b16 %v1402
        %v1421 = vunpack.c.l.b16 %v1403
        %v1422 = vunpack.c.h.b16 %v1403
        %v1423 = vunpack.c.l.b16 %v1404
        %v1424 = vunpack.c.h.b16 %v1404
        %v1425 = vunpack.c.l.b16 %v1405
        %v1426 = vunpack.c.h.b16 %v1405
        %v1427 = vunpack.c.l.b16 %v1406
        %v1428 = vunpack.c.h.b16 %v1406
        %v1429 = vunpack.c.l.b16 %v1407
        %v1430 = vunpack.c.h.b16 %v1407
        %v1431 = vunpack.c.l.b16 %v1408
        %v1432 = vpack.c.b16 %v1417, %v1417
        %v1433 = vpack.c.b16 %v1418, %v1418
        %v1434 = vpack.c.b16 %v1419, %v1419
        %v1435 = vpack.c.b16 %v1420, %v1420
        %v1436 = vpack.c.b16 %v1421, %v1421
        %v1437 = vpack.c.b16 %v1422, %v1422
        %v1438 = vpack.c.b16 %v1423, %v1423
        %v1439 = vpack.c.b16 %v1424, %v1424
        %v1440 = vpack.c.b16 %v1425, %v1425
        %v1441 = vpack.c.b16 %v1426, %v1426
        %v1442 = vpack.c.b16 %v1427, %v1427
        %v1443 = vpack.c.b16 %v1428, %v1428
        %v1444 = vpack.c.b16 %v1429, %v1429
        %v1445 = vpack.c.b16 %v1430, %v1430
        %v1446 = vpack.c.b16 %v1431, %v1431
        %vm1447 = vsmask.f32 4368
        %vm1448 = vmor %vm1388, %vm1447
        %v1450 = vshrl.u32 %v1432, 16
        %v1452 = vrot.slane %v1450, 7
        %v1453 = vshll.u32 %v1432, 16
        %v1455 = vor.u32 %v1452, %v1453
        %v1456 = vrot.slane %v1452, 4
        %v1458 = vshrl.u32 %v1433, 16
        %v1460 = vrot.slane %v1458, 7
        %v1461 = vshll.u32 %v1433, 16
        %v1463 = vor.u32 %v1460, %v1461
        %v1464 = vsel %vm1448, %v1456, %v1463
        %v1465 = vrot.slane %v1460, 4
        %v1467 = vshrl.u32 %v1434, 16
        %v1469 = vrot.slane %v1467, 7
        %v1470 = vshll.u32 %v1434, 16
        %v1472 = vor.u32 %v1469, %v1470
        %v1473 = vsel %vm1448, %v1465, %v1472
        %v1474 = vrot.slane %v1469, 4
        %v1476 = vshrl.u32 %v1435, 16
        %v1478 = vrot.slane %v1476, 7
        %v1479 = vshll.u32 %v1435, 16
        %v1481 = vor.u32 %v1478, %v1479
        %v1482 = vsel %vm1448, %v1474, %v1481
        %v1483 = vrot.slane %v1478, 4
        %v1485 = vshrl.u32 %v1436, 16
        %v1487 = vrot.slane %v1485, 7
        %v1488 = vshll.u32 %v1436, 16
        %v1490 = vor.u32 %v1487, %v1488
        %v1491 = vsel %vm1448, %v1483, %v1490
        %v1492 = vrot.slane %v1487, 4
        %v1494 = vshrl.u32 %v1437, 16
        %v1496 = vrot.slane %v1494, 7
        %v1497 = vshll.u32 %v1437, 16
        %v1499 = vor.u32 %v1496, %v1497
        %v1500 = vsel %vm1448, %v1492, %v1499
        %v1501 = vrot.slane %v1496, 4
        %v1503 = vshrl.u32 %v1438, 16
        %v1505 = vrot.slane %v1503, 7
        %v1506 = vshll.u32 %v1438, 16
        %v1508 = vor.u32 %v1505, %v1506
        %v1509 = vsel %vm1448, %v1501, %v1508
        %v1510 = vrot.slane %v1505, 4
        %v1512 = vshrl.u32 %v1439, 16
        %v1514 = vrot.slane %v1512, 7
        %v1515 = vshll.u32 %v1439, 16
        %v1517 = vor.u32 %v1514, %v1515
        %v1518 = vsel %vm1448, %v1510, %v1517
        %v1519 = vrot.slane %v1514, 4
        %v1521 = vshrl.u32 %v1440, 16
        %v1523 = vrot.slane %v1521, 7
        %v1524 = vshll.u32 %v1440, 16
        %v1526 = vor.u32 %v1523, %v1524
        %v1527 = vsel %vm1448, %v1519, %v1526
        %v1528 = vrot.slane %v1523, 4
        %v1530 = vshrl.u32 %v1441, 16
        %v1532 = vrot.slane %v1530, 7
        %v1533 = vshll.u32 %v1441, 16
        %v1535 = vor.u32 %v1532, %v1533
        %v1536 = vsel %vm1448, %v1528, %v1535
        %v1537 = vrot.slane %v1532, 4
        %v1539 = vshrl.u32 %v1442, 16
        %v1541 = vrot.slane %v1539, 7
        %v1542 = vshll.u32 %v1442, 16
        %v1544 = vor.u32 %v1541, %v1542
        %v1545 = vsel %vm1448, %v1537, %v1544
        %v1546 = vrot.slane %v1541, 4
        %v1548 = vshrl.u32 %v1443, 16
        %v1550 = vrot.slane %v1548, 7
        %v1551 = vshll.u32 %v1443, 16
        %v1553 = vor.u32 %v1550, %v1551
        %v1554 = vsel %vm1448, %v1546, %v1553
        %v1555 = vrot.slane %v1550, 4
        %v1557 = vshrl.u32 %v1444, 16
        %v1559 = vrot.slane %v1557, 7
        %v1560 = vshll.u32 %v1444, 16
        %v1562 = vor.u32 %v1559, %v1560
        %v1563 = vsel %vm1448, %v1555, %v1562
        %v1564 = vrot.slane %v1559, 4
        %v1566 = vshrl.u32 %v1445, 16
        %v1568 = vrot.slane %v1566, 7
        %v1569 = vshll.u32 %v1445, 16
        %v1571 = vor.u32 %v1568, %v1569
        %v1572 = vsel %vm1448, %v1564, %v1571
        %v1573 = vrot.slane %v1568, 4
        %v1575 = vshrl.u32 %v1446, 16
        %v1577 = vrot.slane %v1575, 7
        %v1578 = vshll.u32 %v1446, 16
        %v1580 = vor.u32 %v1577, %v1578
        %v1581 = vsel %vm1448, %v1573, %v1580
        %v1582 = vrot.slane %v1577, 4
        %v1599 = vld [vmem:[#allocation2 + $0x8] sm:$0xf]
        %v1600 = vsel %vm1395, %v1455, %v1599
        %1601 = vst [vmem:[#allocation2 + $0x8] sm:$0xf] %v1600
        %1602 = vst [vmem:[#allocation2 + $0xc] sm:$0xf] %v1464
        %1603 = vst [vmem:[#allocation2 + $0x10] sm:$0xf] %v1473
        %1604 = vst [vmem:[#allocation2 + $0x14] sm:$0xf] %v1482
        %1605 = vst [vmem:[#allocation2 + $0x18] sm:$0xf] %v1491
        %1606 = vst [vmem:[#allocation2 + $0x1c] sm:$0xf] %v1500
        %1607 = vst [vmem:[#allocation2 + $0x20] sm:$0xf] %v1509
        %1608 = vst [vmem:[#allocation2 + $0x24] sm:$0xf] %v1518
        %1609 = vst [vmem:[#allocation2 + $0x28] sm:$0xf] %v1527
        %1610 = vst [vmem:[#allocation2 + $0x2c] sm:$0xf] %v1536
        %1611 = vst [vmem:[#allocation2 + $0x30] sm:$0xf] %v1545
        %1612 = vst [vmem:[#allocation2 + $0x34] sm:$0xf] %v1554
        %1613 = vst [vmem:[#allocation2 + $0x38] sm:$0xf] %v1563
        %1614 = vst [vmem:[#allocation2 + $0x3c] sm:$0xf] %v1572
        %1615 = vst [vmem:[#allocation2 + $0x40] sm:$0xf] %v1581
        %v1616 = vld [vmem:[#allocation2 + $0x44] sm:$0x1]
        %v1617 = vsel %vm1389, %v1582, %v1616
        %1618 = vst [vmem:[#allocation2 + $0x44] sm:$0x1] %v1617
        %v1619 = vld [vmem:[#allocation2] sm:$0xf]
        %v1620 = vld [vmem:[#allocation2 + $0x4] sm:$0xf]
        %v1621 = vld [vmem:[#allocation2 + $0x8] sm:$0xf]
        %v1622 = vld [vmem:[#allocation2 + $0xc] sm:$0xf]
        %v1623 = vld [vmem:[#allocation2 + $0x10] sm:$0xf]
        %v1624 = vld [vmem:[#allocation2 + $0x14] sm:$0xf]
        %v1625 = vld [vmem:[#allocation2 + $0x18] sm:$0xf]
        %v1626 = vld [vmem:[#allocation2 + $0x1c] sm:$0xf]
        %v1627 = vld [vmem:[#allocation2 + $0x20] sm:$0xf]
        %v1628 = vld [vmem:[#allocation2 + $0x24] sm:$0xf]
        %v1629 = vld [vmem:[#allocation2 + $0x28] sm:$0xf]
        %v1630 = vld [vmem:[#allocation2 + $0x2c] sm:$0xf]
        %v1631 = vld [vmem:[#allocation2 + $0x30] sm:$0xf]
        %v1632 = vld [vmem:[#allocation2 + $0x34] sm:$0xf]
        %v1633 = vld [vmem:[#allocation2 + $0x38] sm:$0xf]
        %v1634 = vld [vmem:[#allocation3] sm:$0xf]
        %v1635 = vld [vmem:[#allocation3 + $0x4] sm:$0xf]
        %v1636 = vld [vmem:[#allocation3 + $0x8] sm:$0xf]
        %v1637 = vld [vmem:[#allocation3 + $0xc] sm:$0xf]
        %v1638 = vld [vmem:[#allocation3 + $0x10] sm:$0xf]
        %v1639 = vld [vmem:[#allocation3 + $0x14] sm:$0xf]
        %v1640 = vld [vmem:[#allocation3 + $0x18] sm:$0xf]
        %v1641 = vld [vmem:[#allocation3 + $0x1c] sm:$0xf]
        %v1642 = vld [vmem:[#allocation3 + $0x20] sm:$0xf]
        %v1643 = vld [vmem:[#allocation3 + $0x24] sm:$0xf]
        %v1644 = vld [vmem:[#allocation3 + $0x28] sm:$0xf]
        %v1645 = vld [vmem:[#allocation3 + $0x2c] sm:$0xf]
        %v1646 = vld [vmem:[#allocation3 + $0x30] sm:$0xf]
        %v1647 = vld [vmem:[#allocation3 + $0x34] sm:$0xf]
        %v1648 = vld [vmem:[#allocation3 + $0x38] sm:$0xf]
        %v1649 = vld [vmem:[#allocation3 + $0x3c] sm:$0xf]
        %v1650 = vld [vmem:[#allocation2 + $0x3c] sm:$0x1]
        %s1651 = scalar_lea.vmem [#allocation3], 64
        %v1652 = vld [vmem:[%s1651] sm:$0xf]
        %v1653 = vld [vmem:[%s1651 + $0x4] sm:$0xf]
        %v1654 = vld [vmem:[%s1651 + $0x8] sm:$0xf]
        %v1655 = vld [vmem:[%s1651 + $0xc] sm:$0xf]
        %v1656 = vld [vmem:[%s1651 + $0x10] sm:$0xf]
        %v1657 = vld [vmem:[%s1651 + $0x14] sm:$0xf]
        %v1658 = vld [vmem:[%s1651 + $0x18] sm:$0xf]
        %v1659 = vld [vmem:[%s1651 + $0x1c] sm:$0xf]
        %v1660 = vld [vmem:[%s1651 + $0x20] sm:$0xf]
        %v1661 = vld [vmem:[%s1651 + $0x24] sm:$0xf]
        %v1662 = vld [vmem:[%s1651 + $0x28] sm:$0xf]
        %v1663 = vld [vmem:[%s1651 + $0x2c] sm:$0xf]
        %v1664 = vld [vmem:[%s1651 + $0x30] sm:$0xf]
        %v1665 = vld [vmem:[%s1651 + $0x34] sm:$0xf]
        %v1666 = vld [vmem:[%s1651 + $0x38] sm:$0xf]
        %v1667 = vld [vmem:[%s1651 + $0x3c] sm:$0xf]
        %v1684 = vunpack.c.l.b16 %v1619
        %v1685 = vunpack.c.l.b16 %v1620
        %v1686 = vunpack.c.l.b16 %v1621
        %v1687 = vunpack.c.l.b16 %v1622
        %v1688 = vunpack.c.l.b16 %v1623
        %v1689 = vunpack.c.l.b16 %v1624
        %v1690 = vunpack.c.l.b16 %v1625
        %v1691 = vunpack.c.l.b16 %v1626
        %v1692 = vunpack.c.l.b16 %v1627
        %v1693 = vunpack.c.l.b16 %v1628
        %v1694 = vunpack.c.l.b16 %v1629
        %v1695 = vunpack.c.l.b16 %v1630
        %v1696 = vunpack.c.l.b16 %v1631
        %v1697 = vunpack.c.l.b16 %v1632
        %v1698 = vunpack.c.l.b16 %v1633
        %v1699 = vunpack.c.l.b16 %v1650
        %v1700 = vpack.c.b16 %v1685, %v1684
        %v1701 = vpack.c.b16 %v1687, %v1686
        %v1702 = vpack.c.b16 %v1689, %v1688
        %v1703 = vpack.c.b16 %v1691, %v1690
        %v1704 = vpack.c.b16 %v1693, %v1692
        %v1705 = vpack.c.b16 %v1695, %v1694
        %v1706 = vpack.c.b16 %v1697, %v1696
        %v1707 = vpack.c.b16 %v1699, %v1698
        %v1709 = vshrl.u32 %v1700, 16
        %v1711 = vshll.u32 %v1700, 16
        %v1713 = vrot.slane %v1711, 1
        %v1714 = vor.u32 %v1709, %v1713
        %v1716 = vshll.u32 %v1701, 16
        %v1718 = vrot.slane %v1716, 1
        %v1719 = vsel %vm304, %v1714, %v1718
        %v1720 = vshrl.u32 %v1701, 16
        %v1722 = vor.u32 %v1720, %v1718
        %v1724 = vshll.u32 %v1702, 16
        %v1726 = vrot.slane %v1724, 1
        %v1727 = vsel %vm304, %v1722, %v1726
        %v1728 = vshrl.u32 %v1702, 16
        %v1730 = vor.u32 %v1728, %v1726
        %v1732 = vshll.u32 %v1703, 16
        %v1734 = vrot.slane %v1732, 1
        %v1735 = vsel %vm304, %v1730, %v1734
        %v1736 = vshrl.u32 %v1703, 16
        %v1738 = vor.u32 %v1736, %v1734
        %v1740 = vshll.u32 %v1704, 16
        %v1742 = vrot.slane %v1740, 1
        %v1743 = vsel %vm304, %v1738, %v1742
        %v1744 = vshrl.u32 %v1704, 16
        %v1746 = vor.u32 %v1744, %v1742
        %v1748 = vshll.u32 %v1705, 16
        %v1750 = vrot.slane %v1748, 1
        %v1751 = vsel %vm304, %v1746, %v1750
        %v1752 = vshrl.u32 %v1705, 16
        %v1754 = vor.u32 %v1752, %v1750
        %v1756 = vshll.u32 %v1706, 16
        %v1758 = vrot.slane %v1756, 1
        %v1759 = vsel %vm304, %v1754, %v1758
        %v1760 = vshrl.u32 %v1706, 16
        %v1762 = vor.u32 %v1760, %v1758
        %v1764 = vshll.u32 %v1707, 16
        %v1766 = vrot.slane %v1764, 1
        %v1767 = vsel %vm304, %v1762, %v1766
        %v1768 = vshrl.u32 %v1707, 16
        %v1770 = vor.u32 %v1768, %v1766
        %v1795 = vunpack.c.l.b16 %v1652
        %v1796 = vunpack.c.l.b16 %v1653
        %v1797 = vunpack.c.l.b16 %v1654
        %v1798 = vunpack.c.l.b16 %v1655
        %v1799 = vunpack.c.l.b16 %v1656
        %v1800 = vunpack.c.l.b16 %v1657
        %v1801 = vunpack.c.l.b16 %v1658
        %v1802 = vunpack.c.l.b16 %v1659
        %v1803 = vunpack.c.l.b16 %v1660
        %v1804 = vunpack.c.l.b16 %v1661
        %v1805 = vunpack.c.l.b16 %v1662
        %v1806 = vunpack.c.l.b16 %v1663
        %v1807 = vunpack.c.l.b16 %v1664
        %v1808 = vunpack.c.l.b16 %v1665
        %v1809 = vunpack.c.l.b16 %v1666
        %v1810 = vunpack.c.l.b16 %v1667
        %v1811 = vpack.c.b16 %v1796, %v1795
        %v1812 = vpack.c.b16 %v1798, %v1797
        %v1813 = vpack.c.b16 %v1800, %v1799
        %v1814 = vpack.c.b16 %v1802, %v1801
        %v1815 = vpack.c.b16 %v1804, %v1803
        %v1816 = vpack.c.b16 %v1806, %v1805
        %v1817 = vpack.c.b16 %v1808, %v1807
        %v1818 = vpack.c.b16 %v1810, %v1809
        %1827 = vmatprep.subr.bf16.mxu0 0
        %1828 = vmatpush1.bf16.msra.mxu0 %v1818
        %1829 = vmatprep.subr.bf16.mxu0 0
        %1830 = vmatpush1.bf16.msra.mxu0 %v1817
        %1831 = vmatprep.subr.bf16.mxu0 0
        %1832 = vmatpush1.bf16.msra.mxu0 %v1816
        %1833 = vmatprep.subr.bf16.mxu0 0
        %1834 = vmatpush1.bf16.msra.mxu0 %v1815
        %1835 = vmatprep.subr.bf16.mxu0 0
        %1836 = vmatpush1.bf16.msra.mxu0 %v1814
        %1837 = vmatprep.subr.bf16.mxu0 0
        %1838 = vmatpush1.bf16.msra.mxu0 %v1813
        %1839 = vmatprep.subr.bf16.mxu0 0
        %1840 = vmatpush1.bf16.msra.mxu0 %v1812
        %1841 = vmatprep.subr.bf16.mxu0 0
        %1842 = vmatpush1.bf16.msra.mxu0 %v1811
        %1843 = vmatprep.subr.bf16.mxu0 0
        %1844 = vmatpush2.bf16.msra.mxu0 0
        %1845 = vmatprep.subr.bf16.mxu0 0
        %1846 = vmatpush2.bf16.msra.mxu0 0
        %1847 = vmatprep.subr.bf16.mxu0 0
        %1848 = vmatpush2.bf16.msra.mxu0 0
        %1849 = vmatprep.subr.bf16.mxu0 0
        %1850 = vmatpush2.bf16.msra.mxu0 0
        %1851 = vmatprep.subr.bf16.mxu0 0
        %1852 = vmatpush2.bf16.msra.mxu0 0
        %1853 = vmatprep.subr.bf16.mxu0 0
        %1854 = vmatpush2.bf16.msra.mxu0 0
        %1855 = vmatprep.subr.bf16.mxu0 0
        %1856 = vmatpush2.bf16.msra.mxu0 0
        %1857 = vmatprep.subr.bf16.mxu0 0
        %1858 = vmatpush2.bf16.msra.mxu0 0
        %1859 = vmatprep.mubr.bf16.mxu0 0
        %1860 = vmatmul.mubr.bf16.gmra.mxu0 %v1719
        %v1861 = vpop.f32.mrf.mxu0
        %v1862 = vadd.f32 0.0, %v1861
        %v1863 = vpop.f32.mrf.mxu0
        %v1864 = vpop.f32.mrf.mxu0
        %v1865 = vadd.f32 0.0, %v1864
        %v1866 = vpop.f32.mrf.mxu0
        %1867 = vmatprep.mubr.bf16.mxu0 0
        %1868 = vmatmul.mubr.bf16.gmra.mxu0 %v1727
        %v1869 = vpop.f32.mrf.mxu0
        %v1870 = vadd.f32 0.0, %v1869
        %v1871 = vpop.f32.mrf.mxu0
        %v1872 = vpop.f32.mrf.mxu0
        %v1873 = vadd.f32 0.0, %v1872
        %v1874 = vpop.f32.mrf.mxu0
        %1875 = vmatprep.mubr.bf16.mxu0 0
        %1876 = vmatmul.mubr.bf16.gmra.mxu0 %v1735
        %v1877 = vpop.f32.mrf.mxu0
        %v1878 = vadd.f32 0.0, %v1877
        %v1879 = vpop.f32.mrf.mxu0
        %v1880 = vpop.f32.mrf.mxu0
        %v1881 = vadd.f32 0.0, %v1880
        %v1882 = vpop.f32.mrf.mxu0
        %1883 = vmatprep.mubr.bf16.mxu0 0
        %1884 = vmatmul.mubr.bf16.gmra.mxu0 %v1743
        %v1885 = vpop.f32.mrf.mxu0
        %v1886 = vadd.f32 0.0, %v1885
        %v1887 = vpop.f32.mrf.mxu0
        %v1888 = vpop.f32.mrf.mxu0
        %v1889 = vadd.f32 0.0, %v1888
        %v1890 = vpop.f32.mrf.mxu0
        %1891 = vmatprep.mubr.bf16.mxu0 0
        %1892 = vmatmul.mubr.bf16.gmra.mxu0 %v1751
        %v1893 = vpop.f32.mrf.mxu0
        %v1894 = vadd.f32 0.0, %v1893
        %v1895 = vpop.f32.mrf.mxu0
        %v1896 = vpop.f32.mrf.mxu0
        %v1897 = vadd.f32 0.0, %v1896
        %v1898 = vpop.f32.mrf.mxu0
        %1899 = vmatprep.mubr.bf16.mxu0 0
        %1900 = vmatmul.mubr.bf16.gmra.mxu0 %v1759
        %v1901 = vpop.f32.mrf.mxu0
        %v1902 = vadd.f32 0.0, %v1901
        %v1903 = vpop.f32.mrf.mxu0
        %v1904 = vpop.f32.mrf.mxu0
        %v1905 = vadd.f32 0.0, %v1904
        %v1906 = vpop.f32.mrf.mxu0
        %1907 = vmatprep.mubr.bf16.mxu0 0
        %1908 = vmatmul.mubr.bf16.gmra.mxu0 %v1767
        %v1909 = vpop.f32.mrf.mxu0
        %v1910 = vadd.f32 0.0, %v1909
        %v1911 = vpop.f32.mrf.mxu0
        %v1912 = vpop.f32.mrf.mxu0
        %v1913 = vadd.f32 0.0, %v1912
        %v1914 = vpop.f32.mrf.mxu0
        %1915 = vmatprep.mubr.bf16.mxu0 0
        %1916 = vmatmul.mubr.bf16.gmra.mxu0 %v1770
        %v1917 = vpop.f32.mrf.mxu0
        %v1918 = vadd.f32 0.0, %v1917
        %v1919 = vpop.f32.mrf.mxu0
        %v1920 = vpop.f32.mrf.mxu0
        %v1921 = vpop.f32.mrf.mxu0
        %1922 = vdwg.mxu0
        %v1923 = vpack.c.b16 %v1698, %v1698
        %v1948 = vunpack.c.l.b16 %v1634
        %v1949 = vunpack.c.l.b16 %v1635
        %v1950 = vunpack.c.l.b16 %v1636
        %v1951 = vunpack.c.l.b16 %v1637
        %v1952 = vunpack.c.l.b16 %v1638
        %v1953 = vunpack.c.l.b16 %v1639
        %v1954 = vunpack.c.l.b16 %v1640
        %v1955 = vunpack.c.l.b16 %v1641
        %v1956 = vunpack.c.l.b16 %v1642
        %v1957 = vunpack.c.l.b16 %v1643
        %v1958 = vunpack.c.l.b16 %v1644
        %v1959 = vunpack.c.l.b16 %v1645
        %v1960 = vunpack.c.l.b16 %v1646
        %v1961 = vunpack.c.l.b16 %v1647
        %v1962 = vunpack.c.l.b16 %v1648
        %v1963 = vunpack.c.l.b16 %v1649
        %v1964 = vpack.c.b16 %v1949, %v1948
        %v1965 = vpack.c.b16 %v1951, %v1950
        %v1966 = vpack.c.b16 %v1953, %v1952
        %v1967 = vpack.c.b16 %v1955, %v1954
        %v1968 = vpack.c.b16 %v1957, %v1956
        %v1969 = vpack.c.b16 %v1959, %v1958
        %v1970 = vpack.c.b16 %v1961, %v1960
        %v1971 = vpack.c.b16 %v1963, %v1962
        %1980 = vmatprep.subr.bf16.mxu0 0
        %1981 = vmatpush1.bf16.msra.mxu0 %v1971
        %1982 = vmatprep.subr.bf16.mxu0 0
        %1983 = vmatpush1.bf16.msra.mxu0 %v1970
        %1984 = vmatprep.subr.bf16.mxu0 0
        %1985 = vmatpush1.bf16.msra.mxu0 %v1969
        %1986 = vmatprep.subr.bf16.mxu0 0
        %1987 = vmatpush1.bf16.msra.mxu0 %v1968
        %1988 = vmatprep.subr.bf16.mxu0 0
        %1989 = vmatpush1.bf16.msra.mxu0 %v1967
        %1990 = vmatprep.subr.bf16.mxu0 0
        %1991 = vmatpush1.bf16.msra.mxu0 %v1966
        %1992 = vmatprep.subr.bf16.mxu0 0
        %1993 = vmatpush1.bf16.msra.mxu0 %v1965
        %1994 = vmatprep.subr.bf16.mxu0 0
        %1995 = vmatpush1.bf16.msra.mxu0 %v1964
        %1996 = vmatprep.subr.bf16.mxu0 0
        %1997 = vmatpush2.bf16.msra.mxu0 0
        %1998 = vmatprep.subr.bf16.mxu0 0
        %1999 = vmatpush2.bf16.msra.mxu0 0
        %2000 = vmatprep.subr.bf16.mxu0 0
        %2001 = vmatpush2.bf16.msra.mxu0 0
        %2002 = vmatprep.subr.bf16.mxu0 0
        %2003 = vmatpush2.bf16.msra.mxu0 0
        %2004 = vmatprep.subr.bf16.mxu0 0
        %2005 = vmatpush2.bf16.msra.mxu0 0
        %2006 = vmatprep.subr.bf16.mxu0 0
        %2007 = vmatpush2.bf16.msra.mxu0 0
        %2008 = vmatprep.subr.bf16.mxu0 0
        %2009 = vmatpush2.bf16.msra.mxu0 0
        %2010 = vmatprep.subr.bf16.mxu0 0
        %2011 = vmatpush2.bf16.msra.mxu0 0
        %2012 = vmatprep.mubr.bf16.mxu0 0
        %2013 = vmatmul.mubr.bf16.gmra.mxu0 %v1700
        %v2014 = vpop.f32.mrf.mxu0
        %v2015 = vadd.f32 %v1862, %v2014
        %v2016 = vpop.f32.mrf.mxu0
        %v2017 = vpop.f32.mrf.mxu0
        %v2018 = vadd.f32 %v1865, %v2017
        %v2019 = vpop.f32.mrf.mxu0
        %2020 = vmatprep.mubr.bf16.mxu0 0
        %2021 = vmatmul.mubr.bf16.gmra.mxu0 %v1701
        %v2022 = vpop.f32.mrf.mxu0
        %v2023 = vadd.f32 %v1870, %v2022
        %v2024 = vpop.f32.mrf.mxu0
        %v2025 = vpop.f32.mrf.mxu0
        %v2026 = vadd.f32 %v1873, %v2025
        %v2027 = vpop.f32.mrf.mxu0
        %2028 = vmatprep.mubr.bf16.mxu0 0
        %2029 = vmatmul.mubr.bf16.gmra.mxu0 %v1702
        %v2030 = vpop.f32.mrf.mxu0
        %v2031 = vadd.f32 %v1878, %v2030
        %v2032 = vpop.f32.mrf.mxu0
        %v2033 = vpop.f32.mrf.mxu0
        %v2034 = vadd.f32 %v1881, %v2033
        %v2035 = vpop.f32.mrf.mxu0
        %2036 = vmatprep.mubr.bf16.mxu0 0
        %2037 = vmatmul.mubr.bf16.gmra.mxu0 %v1703
        %v2038 = vpop.f32.mrf.mxu0
        %v2039 = vadd.f32 %v1886, %v2038
        %v2040 = vpop.f32.mrf.mxu0
        %v2041 = vpop.f32.mrf.mxu0
        %v2042 = vadd.f32 %v1889, %v2041
        %v2043 = vpop.f32.mrf.mxu0
        %2044 = vmatprep.mubr.bf16.mxu0 0
        %2045 = vmatmul.mubr.bf16.gmra.mxu0 %v1704
        %v2046 = vpop.f32.mrf.mxu0
        %v2047 = vadd.f32 %v1894, %v2046
        %v2048 = vpop.f32.mrf.mxu0
        %v2049 = vpop.f32.mrf.mxu0
        %v2050 = vadd.f32 %v1897, %v2049
        %v2051 = vpop.f32.mrf.mxu0
        %2052 = vmatprep.mubr.bf16.mxu0 0
        %2053 = vmatmul.mubr.bf16.gmra.mxu0 %v1705
        %v2054 = vpop.f32.mrf.mxu0
        %v2055 = vadd.f32 %v1902, %v2054
        %v2056 = vpop.f32.mrf.mxu0
        %v2057 = vpop.f32.mrf.mxu0
        %v2058 = vadd.f32 %v1905, %v2057
        %v2059 = vpop.f32.mrf.mxu0
        %2060 = vmatprep.mubr.bf16.mxu0 0
        %2061 = vmatmul.mubr.bf16.gmra.mxu0 %v1706
        %v2062 = vpop.f32.mrf.mxu0
        %v2063 = vadd.f32 %v1910, %v2062
        %v2064 = vpop.f32.mrf.mxu0
        %v2065 = vpop.f32.mrf.mxu0
        %v2066 = vadd.f32 %v1913, %v2065
        %v2067 = vpop.f32.mrf.mxu0
        %2068 = vmatprep.mubr.bf16.mxu0 0
        %2069 = vmatmul.mubr.bf16.gmra.mxu0 %v1923
        %v2070 = vpop.f32.mrf.mxu0
        %v2071 = vadd.f32 %v1918, %v2070
        %v2072 = vpop.f32.mrf.mxu0
        %v2073 = vpop.f32.mrf.mxu0
        %v2074 = vpop.f32.mrf.mxu0
        %2075 = vdwg.mxu0
        %v2076 = vld [vmem:[#allocation2] sm:$0xe]
        %s2077 = scalar_lea.vmem [#allocation3], 128
        %v2078 = vld [vmem:[%s2077] sm:$0xf]
        %v2079 = vld [vmem:[%s2077 + $0x4] sm:$0xf]
        %v2080 = vld [vmem:[%s2077 + $0x8] sm:$0xf]
        %v2081 = vld [vmem:[%s2077 + $0xc] sm:$0xf]
        %v2082 = vld [vmem:[%s2077 + $0x10] sm:$0xf]
        %v2083 = vld [vmem:[%s2077 + $0x14] sm:$0xf]
        %v2084 = vld [vmem:[%s2077 + $0x18] sm:$0xf]
        %v2085 = vld [vmem:[%s2077 + $0x1c] sm:$0xf]
        %v2086 = vld [vmem:[%s2077 + $0x20] sm:$0xf]
        %v2087 = vld [vmem:[%s2077 + $0x24] sm:$0xf]
        %v2088 = vld [vmem:[%s2077 + $0x28] sm:$0xf]
        %v2089 = vld [vmem:[%s2077 + $0x2c] sm:$0xf]
        %v2090 = vld [vmem:[%s2077 + $0x30] sm:$0xf]
        %v2091 = vld [vmem:[%s2077 + $0x34] sm:$0xf]
        %v2092 = vld [vmem:[%s2077 + $0x38] sm:$0xf]
        %v2093 = vld [vmem:[%s2077 + $0x3c] sm:$0xf]
        %v2095 = vunpack.c.l.b16 %v2076
        %v2096 = vpack.c.b16 %v1685, %v2095
        %vm2097 = vcmask 1046528
        %v2098 = vrot.slane %v2096, 1
        %v2099 = vrot.slane %v1701, 1
        %v2100 = vsel %vm2097, %v2098, %v2099
        %v2101 = vrot.slane %v1702, 1
        %v2102 = vsel %vm2097, %v2099, %v2101
        %v2103 = vrot.slane %v1703, 1
        %v2104 = vsel %vm2097, %v2101, %v2103
        %v2105 = vrot.slane %v1704, 1
        %v2106 = vsel %vm2097, %v2103, %v2105
        %v2107 = vrot.slane %v1705, 1
        %v2108 = vsel %vm2097, %v2105, %v2107
        %v2109 = vrot.slane %v1706, 1
        %v2110 = vsel %vm2097, %v2107, %v2109
        %v2111 = vrot.slane %v1707, 1
        %v2112 = vsel %vm2097, %v2109, %v2111
        %v2137 = vunpack.c.l.b16 %v2078
        %v2138 = vunpack.c.l.b16 %v2079
        %v2139 = vunpack.c.l.b16 %v2080
        %v2140 = vunpack.c.l.b16 %v2081
        %v2141 = vunpack.c.l.b16 %v2082
        %v2142 = vunpack.c.l.b16 %v2083
        %v2143 = vunpack.c.l.b16 %v2084
        %v2144 = vunpack.c.l.b16 %v2085
        %v2145 = vunpack.c.l.b16 %v2086
        %v2146 = vunpack.c.l.b16 %v2087
        %v2147 = vunpack.c.l.b16 %v2088
        %v2148 = vunpack.c.l.b16 %v2089
        %v2149 = vunpack.c.l.b16 %v2090
        %v2150 = vunpack.c.l.b16 %v2091
        %v2151 = vunpack.c.l.b16 %v2092
        %v2152 = vunpack.c.l.b16 %v2093
        %v2153 = vpack.c.b16 %v2138, %v2137
        %v2154 = vpack.c.b16 %v2140, %v2139
        %v2155 = vpack.c.b16 %v2142, %v2141
        %v2156 = vpack.c.b16 %v2144, %v2143
        %v2157 = vpack.c.b16 %v2146, %v2145
        %v2158 = vpack.c.b16 %v2148, %v2147
        %v2159 = vpack.c.b16 %v2150, %v2149
        %v2160 = vpack.c.b16 %v2152, %v2151
        %2169 = vmatprep.subr.bf16.mxu0 0
        %2170 = vmatpush1.bf16.msra.mxu0 %v2160
        %2171 = vmatprep.subr.bf16.mxu0 0
        %2172 = vmatpush1.bf16.msra.mxu0 %v2159
        %2173 = vmatprep.subr.bf16.mxu0 0
        %2174 = vmatpush1.bf16.msra.mxu0 %v2158
        %2175 = vmatprep.subr.bf16.mxu0 0
        %2176 = vmatpush1.bf16.msra.mxu0 %v2157
        %2177 = vmatprep.subr.bf16.mxu0 0
        %2178 = vmatpush1.bf16.msra.mxu0 %v2156
        %2179 = vmatprep.subr.bf16.mxu0 0
        %2180 = vmatpush1.bf16.msra.mxu0 %v2155
        %2181 = vmatprep.subr.bf16.mxu0 0
        %2182 = vmatpush1.bf16.msra.mxu0 %v2154
        %2183 = vmatprep.subr.bf16.mxu0 0
        %2184 = vmatpush1.bf16.msra.mxu0 %v2153
        %2185 = vmatprep.subr.bf16.mxu0 0
        %2186 = vmatpush2.bf16.msra.mxu0 0
        %2187 = vmatprep.subr.bf16.mxu0 0
        %2188 = vmatpush2.bf16.msra.mxu0 0
        %2189 = vmatprep.subr.bf16.mxu0 0
        %2190 = vmatpush2.bf16.msra.mxu0 0
        %2191 = vmatprep.subr.bf16.mxu0 0
        %2192 = vmatpush2.bf16.msra.mxu0 0
        %2193 = vmatprep.subr.bf16.mxu0 0
        %2194 = vmatpush2.bf16.msra.mxu0 0
        %2195 = vmatprep.subr.bf16.mxu0 0
        %2196 = vmatpush2.bf16.msra.mxu0 0
        %2197 = vmatprep.subr.bf16.mxu0 0
        %2198 = vmatpush2.bf16.msra.mxu0 0
        %2199 = vmatprep.subr.bf16.mxu0 0
        %2200 = vmatpush2.bf16.msra.mxu0 0
        %2201 = vmatprep.mubr.bf16.mxu0 0
        %2202 = vmatmul.mubr.bf16.gmra.mxu0 %v2100
        %v2203 = vpop.f32.mrf.mxu0
        %v2204 = vadd.f32 0.0, %v2203
        %v2205 = vpop.f32.mrf.mxu0
        %v2206 = vpop.f32.mrf.mxu0
        %v2207 = vadd.f32 0.0, %v2206
        %v2208 = vpop.f32.mrf.mxu0
        %2209 = vmatprep.mubr.bf16.mxu0 0
        %2210 = vmatmul.mubr.bf16.gmra.mxu0 %v2102
        %v2211 = vpop.f32.mrf.mxu0
        %v2212 = vadd.f32 0.0, %v2211
        %v2213 = vpop.f32.mrf.mxu0
        %v2214 = vpop.f32.mrf.mxu0
        %v2215 = vadd.f32 0.0, %v2214
        %v2216 = vpop.f32.mrf.mxu0
        %2217 = vmatprep.mubr.bf16.mxu0 0
        %2218 = vmatmul.mubr.bf16.gmra.mxu0 %v2104
        %v2219 = vpop.f32.mrf.mxu0
        %v2220 = vadd.f32 0.0, %v2219
        %v2221 = vpop.f32.mrf.mxu0
        %v2222 = vpop.f32.mrf.mxu0
        %v2223 = vadd.f32 0.0, %v2222
        %v2224 = vpop.f32.mrf.mxu0
        %2225 = vmatprep.mubr.bf16.mxu0 0
        %2226 = vmatmul.mubr.bf16.gmra.mxu0 %v2106
        %v2227 = vpop.f32.mrf.mxu0
        %v2228 = vadd.f32 0.0, %v2227
        %v2229 = vpop.f32.mrf.mxu0
        %v2230 = vpop.f32.mrf.mxu0
        %v2231 = vadd.f32 0.0, %v2230
        %v2232 = vpop.f32.mrf.mxu0
        %2233 = vmatprep.mubr.bf16.mxu0 0
        %2234 = vmatmul.mubr.bf16.gmra.mxu0 %v2108
        %v2235 = vpop.f32.mrf.mxu0
        %v2236 = vadd.f32 0.0, %v2235
        %v2237 = vpop.f32.mrf.mxu0
        %v2238 = vpop.f32.mrf.mxu0
        %v2239 = vadd.f32 0.0, %v2238
        %v2240 = vpop.f32.mrf.mxu0
        %2241 = vmatprep.mubr.bf16.mxu0 0
        %2242 = vmatmul.mubr.bf16.gmra.mxu0 %v2110
        %v2243 = vpop.f32.mrf.mxu0
        %v2244 = vadd.f32 0.0, %v2243
        %v2245 = vpop.f32.mrf.mxu0
        %v2246 = vpop.f32.mrf.mxu0
        %v2247 = vadd.f32 0.0, %v2246
        %v2248 = vpop.f32.mrf.mxu0
        %2249 = vmatprep.mubr.bf16.mxu0 0
        %2250 = vmatmul.mubr.bf16.gmra.mxu0 %v2112
        %v2251 = vpop.f32.mrf.mxu0
        %v2252 = vadd.f32 0.0, %v2251
        %v2253 = vpop.f32.mrf.mxu0
        %v2254 = vpop.f32.mrf.mxu0
        %v2255 = vadd.f32 0.0, %v2254
        %v2256 = vpop.f32.mrf.mxu0
        %2257 = vmatprep.mubr.bf16.mxu0 0
        %2258 = vmatmul.mubr.bf16.gmra.mxu0 %v2111
        %v2259 = vpop.f32.mrf.mxu0
        %v2260 = vadd.f32 0.0, %v2259
        %v2261 = vpop.f32.mrf.mxu0
        %v2262 = vpop.f32.mrf.mxu0
        %v2263 = vpop.f32.mrf.mxu0
        %2264 = vdwg.mxu0
        %v2265 = vadd.f32 %v2015, %v2204
        %v2266 = vadd.f32 %v2018, %v2207
        %v2267 = vadd.f32 %v2023, %v2212
        %v2268 = vadd.f32 %v2026, %v2215
        %v2269 = vadd.f32 %v2031, %v2220
        %v2270 = vadd.f32 %v2034, %v2223
        %v2271 = vadd.f32 %v2039, %v2228
        %v2272 = vadd.f32 %v2042, %v2231
        %v2273 = vadd.f32 %v2047, %v2236
        %v2274 = vadd.f32 %v2050, %v2239
        %v2275 = vadd.f32 %v2055, %v2244
        %v2276 = vadd.f32 %v2058, %v2247
        %v2277 = vadd.f32 %v2063, %v2252
        %v2278 = vadd.f32 %v2066, %v2255
        %v2279 = vadd.f32 %v2071, %v2260
        %v2280 = vld [vmem:[#allocation2 + $0x8] sm:$0xf]
        %v2281 = vld [vmem:[#allocation2 + $0xc] sm:$0xf]
        %v2282 = vld [vmem:[#allocation2 + $0x10] sm:$0xf]
        %v2283 = vld [vmem:[#allocation2 + $0x14] sm:$0xf]
        %v2284 = vld [vmem:[#allocation2 + $0x18] sm:$0xf]
        %v2285 = vld [vmem:[#allocation2 + $0x1c] sm:$0xf]
        %v2286 = vld [vmem:[#allocation2 + $0x20] sm:$0xf]
        %v2287 = vld [vmem:[#allocation2 + $0x24] sm:$0xf]
        %v2288 = vld [vmem:[#allocation2 + $0x28] sm:$0xf]
        %v2289 = vld [vmem:[#allocation2 + $0x2c] sm:$0xf]
        %v2290 = vld [vmem:[#allocation2 + $0x30] sm:$0xf]
        %v2291 = vld [vmem:[#allocation2 + $0x34] sm:$0xf]
        %v2292 = vld [vmem:[#allocation2 + $0x38] sm:$0xf]
        %v2293 = vld [vmem:[#allocation2 + $0x3c] sm:$0xf]
        %v2294 = vld [vmem:[#allocation2 + $0x40] sm:$0xf]
        %s2295 = scalar_lea.vmem [#allocation3], 192
        %v2296 = vld [vmem:[%s2295] sm:$0xf]
        %v2297 = vld [vmem:[%s2295 + $0x4] sm:$0xf]
        %v2298 = vld [vmem:[%s2295 + $0x8] sm:$0xf]
        %v2299 = vld [vmem:[%s2295 + $0xc] sm:$0xf]
        %v2300 = vld [vmem:[%s2295 + $0x10] sm:$0xf]
        %v2301 = vld [vmem:[%s2295 + $0x14] sm:$0xf]
        %v2302 = vld [vmem:[%s2295 + $0x18] sm:$0xf]
        %v2303 = vld [vmem:[%s2295 + $0x1c] sm:$0xf]
        %v2304 = vld [vmem:[%s2295 + $0x20] sm:$0xf]
        %v2305 = vld [vmem:[%s2295 + $0x24] sm:$0xf]
        %v2306 = vld [vmem:[%s2295 + $0x28] sm:$0xf]
        %v2307 = vld [vmem:[%s2295 + $0x2c] sm:$0xf]
        %v2308 = vld [vmem:[%s2295 + $0x30] sm:$0xf]
        %v2309 = vld [vmem:[%s2295 + $0x34] sm:$0xf]
        %v2310 = vld [vmem:[%s2295 + $0x38] sm:$0xf]
        %v2311 = vld [vmem:[%s2295 + $0x3c] sm:$0xf]
        %v2327 = vunpack.c.l.b16 %v2280
        %v2328 = vunpack.c.l.b16 %v2281
        %v2329 = vunpack.c.l.b16 %v2282
        %v2330 = vunpack.c.l.b16 %v2283
        %v2331 = vunpack.c.l.b16 %v2284
        %v2332 = vunpack.c.l.b16 %v2285
        %v2333 = vunpack.c.l.b16 %v2286
        %v2334 = vunpack.c.l.b16 %v2287
        %v2335 = vunpack.c.l.b16 %v2288
        %v2336 = vunpack.c.l.b16 %v2289
        %v2337 = vunpack.c.l.b16 %v2290
        %v2338 = vunpack.c.l.b16 %v2291
        %v2339 = vunpack.c.l.b16 %v2292
        %v2340 = vunpack.c.l.b16 %v2293
        %v2341 = vunpack.c.l.b16 %v2294
        %v2342 = vpack.c.b16 %v2328, %v2327
        %v2343 = vpack.c.b16 %v2330, %v2329
        %v2344 = vpack.c.b16 %v2332, %v2331
        %v2345 = vpack.c.b16 %v2334, %v2333
        %v2346 = vpack.c.b16 %v2336, %v2335
        %v2347 = vpack.c.b16 %v2338, %v2337
        %v2348 = vpack.c.b16 %v2340, %v2339
        %v2349 = vpack.c.b16 %v2341, %v2341
        %v2374 = vunpack.c.l.b16 %v2296
        %v2375 = vunpack.c.l.b16 %v2297
        %v2376 = vunpack.c.l.b16 %v2298
        %v2377 = vunpack.c.l.b16 %v2299
        %v2378 = vunpack.c.l.b16 %v2300
        %v2379 = vunpack.c.l.b16 %v2301
        %v2380 = vunpack.c.l.b16 %v2302
        %v2381 = vunpack.c.l.b16 %v2303
        %v2382 = vunpack.c.l.b16 %v2304
        %v2383 = vunpack.c.l.b16 %v2305
        %v2384 = vunpack.c.l.b16 %v2306
        %v2385 = vunpack.c.l.b16 %v2307
        %v2386 = vunpack.c.l.b16 %v2308
        %v2387 = vunpack.c.l.b16 %v2309
        %v2388 = vunpack.c.l.b16 %v2310
        %v2389 = vunpack.c.l.b16 %v2311
        %v2390 = vpack.c.b16 %v2375, %v2374
        %v2391 = vpack.c.b16 %v2377, %v2376
        %v2392 = vpack.c.b16 %v2379, %v2378
        %v2393 = vpack.c.b16 %v2381, %v2380
        %v2394 = vpack.c.b16 %v2383, %v2382
        %v2395 = vpack.c.b16 %v2385, %v2384
        %v2396 = vpack.c.b16 %v2387, %v2386
        %v2397 = vpack.c.b16 %v2389, %v2388
        %2406 = vmatprep.subr.bf16.mxu0 0
        %2407 = vmatpush1.bf16.msra.mxu0 %v2397
        %2408 = vmatprep.subr.bf16.mxu0 0
        %2409 = vmatpush1.bf16.msra.mxu0 %v2396
        %2410 = vmatprep.subr.bf16.mxu0 0
        %2411 = vmatpush1.bf16.msra.mxu0 %v2395
        %2412 = vmatprep.subr.bf16.mxu0 0
        %2413 = vmatpush1.bf16.msra.mxu0 %v2394
        %2414 = vmatprep.subr.bf16.mxu0 0
        %2415 = vmatpush1.bf16.msra.mxu0 %v2393
        %2416 = vmatprep.subr.bf16.mxu0 0
        %2417 = vmatpush1.bf16.msra.mxu0 %v2392
        %2418 = vmatprep.subr.bf16.mxu0 0
        %2419 = vmatpush1.bf16.msra.mxu0 %v2391
        %2420 = vmatprep.subr.bf16.mxu0 0
        %2421 = vmatpush1.bf16.msra.mxu0 %v2390
        %2422 = vmatprep.subr.bf16.mxu0 0
        %2423 = vmatpush2.bf16.msra.mxu0 0
        %2424 = vmatprep.subr.bf16.mxu0 0
        %2425 = vmatpush2.bf16.msra.mxu0 0
        %2426 = vmatprep.subr.bf16.mxu0 0
        %2427 = vmatpush2.bf16.msra.mxu0 0
        %2428 = vmatprep.subr.bf16.mxu0 0
        %2429 = vmatpush2.bf16.msra.mxu0 0
        %2430 = vmatprep.subr.bf16.mxu0 0
        %2431 = vmatpush2.bf16.msra.mxu0 0
        %2432 = vmatprep.subr.bf16.mxu0 0
        %2433 = vmatpush2.bf16.msra.mxu0 0
        %2434 = vmatprep.subr.bf16.mxu0 0
        %2435 = vmatpush2.bf16.msra.mxu0 0
        %2436 = vmatprep.subr.bf16.mxu0 0
        %2437 = vmatpush2.bf16.msra.mxu0 0
        %2438 = vmatprep.mubr.bf16.mxu0 0
        %2439 = vmatmul.mubr.bf16.gmra.mxu0 %v2342
        %v2440 = vpop.f32.mrf.mxu0
        %v2441 = vadd.f32 0.0, %v2440
        %v2442 = vpop.f32.mrf.mxu0
        %v2443 = vpop.f32.mrf.mxu0
        %v2444 = vadd.f32 0.0, %v2443
        %v2445 = vpop.f32.mrf.mxu0
        %2446 = vmatprep.mubr.bf16.mxu0 0
        %2447 = vmatmul.mubr.bf16.gmra.mxu0 %v2343
        %v2448 = vpop.f32.mrf.mxu0
        %v2449 = vadd.f32 0.0, %v2448
        %v2450 = vpop.f32.mrf.mxu0
        %v2451 = vpop.f32.mrf.mxu0
        %v2452 = vadd.f32 0.0, %v2451
        %v2453 = vpop.f32.mrf.mxu0
        %2454 = vmatprep.mubr.bf16.mxu0 0
        %2455 = vmatmul.mubr.bf16.gmra.mxu0 %v2344
        %v2456 = vpop.f32.mrf.mxu0
        %v2457 = vadd.f32 0.0, %v2456
        %v2458 = vpop.f32.mrf.mxu0
        %v2459 = vpop.f32.mrf.mxu0
        %v2460 = vadd.f32 0.0, %v2459
        %v2461 = vpop.f32.mrf.mxu0
        %2462 = vmatprep.mubr.bf16.mxu0 0
        %2463 = vmatmul.mubr.bf16.gmra.mxu0 %v2345
        %v2464 = vpop.f32.mrf.mxu0
        %v2465 = vadd.f32 0.0, %v2464
        %v2466 = vpop.f32.mrf.mxu0
        %v2467 = vpop.f32.mrf.mxu0
        %v2468 = vadd.f32 0.0, %v2467
        %v2469 = vpop.f32.mrf.mxu0
        %2470 = vmatprep.mubr.bf16.mxu0 0
        %2471 = vmatmul.mubr.bf16.gmra.mxu0 %v2346
        %v2472 = vpop.f32.mrf.mxu0
        %v2473 = vadd.f32 0.0, %v2472
        %v2474 = vpop.f32.mrf.mxu0
        %v2475 = vpop.f32.mrf.mxu0
        %v2476 = vadd.f32 0.0, %v2475
        %v2477 = vpop.f32.mrf.mxu0
        %2478 = vmatprep.mubr.bf16.mxu0 0
        %2479 = vmatmul.mubr.bf16.gmra.mxu0 %v2347
        %v2480 = vpop.f32.mrf.mxu0
        %v2481 = vadd.f32 0.0, %v2480
        %v2482 = vpop.f32.mrf.mxu0
        %v2483 = vpop.f32.mrf.mxu0
        %v2484 = vadd.f32 0.0, %v2483
        %v2485 = vpop.f32.mrf.mxu0
        %2486 = vmatprep.mubr.bf16.mxu0 0
        %2487 = vmatmul.mubr.bf16.gmra.mxu0 %v2348
        %v2488 = vpop.f32.mrf.mxu0
        %v2489 = vadd.f32 0.0, %v2488
        %v2490 = vpop.f32.mrf.mxu0
        %v2491 = vpop.f32.mrf.mxu0
        %v2492 = vadd.f32 0.0, %v2491
        %v2493 = vpop.f32.mrf.mxu0
        %2494 = vmatprep.mubr.bf16.mxu0 0
        %2495 = vmatmul.mubr.bf16.gmra.mxu0 %v2349
        %v2496 = vpop.f32.mrf.mxu0
        %v2497 = vadd.f32 0.0, %v2496
        %v2498 = vpop.f32.mrf.mxu0
        %v2499 = vpop.f32.mrf.mxu0
        %v2500 = vpop.f32.mrf.mxu0
        %2501 = vdwg.mxu0
        %v2502 = vadd.f32 %v2265, %v2441
        %v2503 = vadd.f32 %v2266, %v2444
        %v2504 = vadd.f32 %v2267, %v2449
        %v2505 = vadd.f32 %v2268, %v2452
        %v2506 = vadd.f32 %v2269, %v2457
        %v2507 = vadd.f32 %v2270, %v2460
        %v2508 = vadd.f32 %v2271, %v2465
        %v2509 = vadd.f32 %v2272, %v2468
        %v2510 = vadd.f32 %v2273, %v2473
        %v2511 = vadd.f32 %v2274, %v2476
        %v2512 = vadd.f32 %v2275, %v2481
        %v2513 = vadd.f32 %v2276, %v2484
        %v2514 = vadd.f32 %v2277, %v2489
        %v2515 = vadd.f32 %v2278, %v2492
        %v2516 = vadd.f32 %v2279, %v2497
        %v2517 = vld [vmem:[#allocation2 + $0x8] sm:$0xf]
        %v2518 = vld [vmem:[#allocation2 + $0xc] sm:$0xf]
        %v2519 = vld [vmem:[#allocation2 + $0x10] sm:$0xf]
        %v2520 = vld [vmem:[#allocation2 + $0x14] sm:$0xf]
        %v2521 = vld [vmem:[#allocation2 + $0x18] sm:$0xf]
        %v2522 = vld [vmem:[#allocation2 + $0x1c] sm:$0xf]
        %v2523 = vld [vmem:[#allocation2 + $0x20] sm:$0xf]
        %v2524 = vld [vmem:[#allocation2 + $0x24] sm:$0xf]
        %v2525 = vld [vmem:[#allocation2 + $0x28] sm:$0xf]
        %v2526 = vld [vmem:[#allocation2 + $0x2c] sm:$0xf]
        %v2527 = vld [vmem:[#allocation2 + $0x30] sm:$0xf]
        %v2528 = vld [vmem:[#allocation2 + $0x34] sm:$0xf]
        %v2529 = vld [vmem:[#allocation2 + $0x38] sm:$0xf]
        %v2530 = vld [vmem:[#allocation2 + $0x3c] sm:$0xf]
        %v2531 = vld [vmem:[#allocation2 + $0x40] sm:$0xf]
        %v2532 = vld [vmem:[#allocation2 + $0x44] sm:$0x1]
        %s2533 = scalar_lea.vmem [#allocation3], 256
        %v2534 = vld [vmem:[%s2533] sm:$0xf]
        %v2535 = vld [vmem:[%s2533 + $0x4] sm:$0xf]
        %v2536 = vld [vmem:[%s2533 + $0x8] sm:$0xf]
        %v2537 = vld [vmem:[%s2533 + $0xc] sm:$0xf]
        %v2538 = vld [vmem:[%s2533 + $0x10] sm:$0xf]
        %v2539 = vld [vmem:[%s2533 + $0x14] sm:$0xf]
        %v2540 = vld [vmem:[%s2533 + $0x18] sm:$0xf]
        %v2541 = vld [vmem:[%s2533 + $0x1c] sm:$0xf]
        %v2542 = vld [vmem:[%s2533 + $0x20] sm:$0xf]
        %v2543 = vld [vmem:[%s2533 + $0x24] sm:$0xf]
        %v2544 = vld [vmem:[%s2533 + $0x28] sm:$0xf]
        %v2545 = vld [vmem:[%s2533 + $0x2c] sm:$0xf]
        %v2546 = vld [vmem:[%s2533 + $0x30] sm:$0xf]
        %v2547 = vld [vmem:[%s2533 + $0x34] sm:$0xf]
        %v2548 = vld [vmem:[%s2533 + $0x38] sm:$0xf]
        %v2549 = vld [vmem:[%s2533 + $0x3c] sm:$0xf]
        %v2566 = vunpack.c.l.b16 %v2517
        %v2567 = vunpack.c.l.b16 %v2518
        %v2568 = vunpack.c.l.b16 %v2519
        %v2569 = vunpack.c.l.b16 %v2520
        %v2570 = vunpack.c.l.b16 %v2521
        %v2571 = vunpack.c.l.b16 %v2522
        %v2572 = vunpack.c.l.b16 %v2523
        %v2573 = vunpack.c.l.b16 %v2524
        %v2574 = vunpack.c.l.b16 %v2525
        %v2575 = vunpack.c.l.b16 %v2526
        %v2576 = vunpack.c.l.b16 %v2527
        %v2577 = vunpack.c.l.b16 %v2528
        %v2578 = vunpack.c.l.b16 %v2529
        %v2579 = vunpack.c.l.b16 %v2530
        %v2580 = vunpack.c.l.b16 %v2531
        %v2581 = vunpack.c.l.b16 %v2532
        %v2582 = vpack.c.b16 %v2567, %v2566
        %v2583 = vpack.c.b16 %v2569, %v2568
        %v2584 = vpack.c.b16 %v2571, %v2570
        %v2585 = vpack.c.b16 %v2573, %v2572
        %v2586 = vpack.c.b16 %v2575, %v2574
        %v2587 = vpack.c.b16 %v2577, %v2576
        %v2588 = vpack.c.b16 %v2579, %v2578
        %v2589 = vpack.c.b16 %v2581, %v2580
        %v2591 = vshrl.u32 %v2582, 16
        %v2593 = vshll.u32 %v2582, 16
        %v2595 = vrot.slane %v2593, 1
        %v2596 = vor.u32 %v2591, %v2595
        %v2598 = vshll.u32 %v2583, 16
        %v2600 = vrot.slane %v2598, 1
        %v2601 = vsel %vm304, %v2596, %v2600
        %v2602 = vshrl.u32 %v2583, 16
        %v2604 = vor.u32 %v2602, %v2600
        %v2606 = vshll.u32 %v2584, 16
        %v2608 = vrot.slane %v2606, 1
        %v2609 = vsel %vm304, %v2604, %v2608
        %v2610 = vshrl.u32 %v2584, 16
        %v2612 = vor.u32 %v2610, %v2608
        %v2614 = vshll.u32 %v2585, 16
        %v2616 = vrot.slane %v2614, 1
        %v2617 = vsel %vm304, %v2612, %v2616
        %v2618 = vshrl.u32 %v2585, 16
        %v2620 = vor.u32 %v2618, %v2616
        %v2622 = vshll.u32 %v2586, 16
        %v2624 = vrot.slane %v2622, 1
        %v2625 = vsel %vm304, %v2620, %v2624
        %v2626 = vshrl.u32 %v2586, 16
        %v2628 = vor.u32 %v2626, %v2624
        %v2630 = vshll.u32 %v2587, 16
        %v2632 = vrot.slane %v2630, 1
        %v2633 = vsel %vm304, %v2628, %v2632
        %v2634 = vshrl.u32 %v2587, 16
        %v2636 = vor.u32 %v2634, %v2632
        %v2638 = vshll.u32 %v2588, 16
        %v2640 = vrot.slane %v2638, 1
        %v2641 = vsel %vm304, %v2636, %v2640
        %v2642 = vshrl.u32 %v2588, 16
        %v2644 = vor.u32 %v2642, %v2640
        %v2646 = vshll.u32 %v2589, 16
        %v2648 = vrot.slane %v2646, 1
        %v2649 = vsel %vm304, %v2644, %v2648
        %v2650 = vshrl.u32 %v2589, 16
        %v2652 = vor.u32 %v2650, %v2648
        %v2677 = vunpack.c.l.b16 %v2534
        %v2678 = vunpack.c.l.b16 %v2535
        %v2679 = vunpack.c.l.b16 %v2536
        %v2680 = vunpack.c.l.b16 %v2537
        %v2681 = vunpack.c.l.b16 %v2538
        %v2682 = vunpack.c.l.b16 %v2539
        %v2683 = vunpack.c.l.b16 %v2540
        %v2684 = vunpack.c.l.b16 %v2541
        %v2685 = vunpack.c.l.b16 %v2542
        %v2686 = vunpack.c.l.b16 %v2543
        %v2687 = vunpack.c.l.b16 %v2544
        %v2688 = vunpack.c.l.b16 %v2545
        %v2689 = vunpack.c.l.b16 %v2546
        %v2690 = vunpack.c.l.b16 %v2547
        %v2691 = vunpack.c.l.b16 %v2548
        %v2692 = vunpack.c.l.b16 %v2549
        %v2693 = vpack.c.b16 %v2678, %v2677
        %v2694 = vpack.c.b16 %v2680, %v2679
        %v2695 = vpack.c.b16 %v2682, %v2681
        %v2696 = vpack.c.b16 %v2684, %v2683
        %v2697 = vpack.c.b16 %v2686, %v2685
        %v2698 = vpack.c.b16 %v2688, %v2687
        %v2699 = vpack.c.b16 %v2690, %v2689
        %v2700 = vpack.c.b16 %v2692, %v2691
        %2709 = vmatprep.subr.bf16.mxu0 0
        %2710 = vmatpush1.bf16.msra.mxu0 %v2700
        %2711 = vmatprep.subr.bf16.mxu0 0
        %2712 = vmatpush1.bf16.msra.mxu0 %v2699
        %2713 = vmatprep.subr.bf16.mxu0 0
        %2714 = vmatpush1.bf16.msra.mxu0 %v2698
        %2715 = vmatprep.subr.bf16.mxu0 0
        %2716 = vmatpush1.bf16.msra.mxu0 %v2697
        %2717 = vmatprep.subr.bf16.mxu0 0
        %2718 = vmatpush1.bf16.msra.mxu0 %v2696
        %2719 = vmatprep.subr.bf16.mxu0 0
        %2720 = vmatpush1.bf16.msra.mxu0 %v2695
        %2721 = vmatprep.subr.bf16.mxu0 0
        %2722 = vmatpush1.bf16.msra.mxu0 %v2694
        %2723 = vmatprep.subr.bf16.mxu0 0
        %2724 = vmatpush1.bf16.msra.mxu0 %v2693
        %2725 = vmatprep.subr.bf16.mxu0 0
        %2726 = vmatpush2.bf16.msra.mxu0 0
        %2727 = vmatprep.subr.bf16.mxu0 0
        %2728 = vmatpush2.bf16.msra.mxu0 0
        %2729 = vmatprep.subr.bf16.mxu0 0
        %2730 = vmatpush2.bf16.msra.mxu0 0
        %2731 = vmatprep.subr.bf16.mxu0 0
        %2732 = vmatpush2.bf16.msra.mxu0 0
        %2733 = vmatprep.subr.bf16.mxu0 0
        %2734 = vmatpush2.bf16.msra.mxu0 0
        %2735 = vmatprep.subr.bf16.mxu0 0
        %2736 = vmatpush2.bf16.msra.mxu0 0
        %2737 = vmatprep.subr.bf16.mxu0 0
        %2738 = vmatpush2.bf16.msra.mxu0 0
        %2739 = vmatprep.subr.bf16.mxu0 0
        %2740 = vmatpush2.bf16.msra.mxu0 0
        %2741 = vmatprep.mubr.bf16.mxu0 0
        %2742 = vmatmul.mubr.bf16.gmra.mxu0 %v2601
        %v2743 = vpop.f32.mrf.mxu0
        %v2744 = vadd.f32 0.0, %v2743
        %v2745 = vpop.f32.mrf.mxu0
        %v2746 = vpop.f32.mrf.mxu0
        %v2747 = vadd.f32 0.0, %v2746
        %v2748 = vpop.f32.mrf.mxu0
        %2749 = vmatprep.mubr.bf16.mxu0 0
        %2750 = vmatmul.mubr.bf16.gmra.mxu0 %v2609
        %v2751 = vpop.f32.mrf.mxu0
        %v2752 = vadd.f32 0.0, %v2751
        %v2753 = vpop.f32.mrf.mxu0
        %v2754 = vpop.f32.mrf.mxu0
        %v2755 = vadd.f32 0.0, %v2754
        %v2756 = vpop.f32.mrf.mxu0
        %2757 = vmatprep.mubr.bf16.mxu0 0
        %2758 = vmatmul.mubr.bf16.gmra.mxu0 %v2617
        %v2759 = vpop.f32.mrf.mxu0
        %v2760 = vadd.f32 0.0, %v2759
        %v2761 = vpop.f32.mrf.mxu0
        %v2762 = vpop.f32.mrf.mxu0
        %v2763 = vadd.f32 0.0, %v2762
        %v2764 = vpop.f32.mrf.mxu0
        %2765 = vmatprep.mubr.bf16.mxu0 0
        %2766 = vmatmul.mubr.bf16.gmra.mxu0 %v2625
        %v2767 = vpop.f32.mrf.mxu0
        %v2768 = vadd.f32 0.0, %v2767
        %v2769 = vpop.f32.mrf.mxu0
        %v2770 = vpop.f32.mrf.mxu0
        %v2771 = vadd.f32 0.0, %v2770
        %v2772 = vpop.f32.mrf.mxu0
        %2773 = vmatprep.mubr.bf16.mxu0 0
        %2774 = vmatmul.mubr.bf16.gmra.mxu0 %v2633
        %v2775 = vpop.f32.mrf.mxu0
        %v2776 = vadd.f32 0.0, %v2775
        %v2777 = vpop.f32.mrf.mxu0
        %v2778 = vpop.f32.mrf.mxu0
        %v2779 = vadd.f32 0.0, %v2778
        %v2780 = vpop.f32.mrf.mxu0
        %2781 = vmatprep.mubr.bf16.mxu0 0
        %2782 = vmatmul.mubr.bf16.gmra.mxu0 %v2641
        %v2783 = vpop.f32.mrf.mxu0
        %v2784 = vadd.f32 0.0, %v2783
        %v2785 = vpop.f32.mrf.mxu0
        %v2786 = vpop.f32.mrf.mxu0
        %v2787 = vadd.f32 0.0, %v2786
        %v2788 = vpop.f32.mrf.mxu0
        %2789 = vmatprep.mubr.bf16.mxu0 0
        %2790 = vmatmul.mubr.bf16.gmra.mxu0 %v2649
        %v2791 = vpop.f32.mrf.mxu0
        %v2792 = vadd.f32 0.0, %v2791
        %v2793 = vpop.f32.mrf.mxu0
        %v2794 = vpop.f32.mrf.mxu0
        %v2795 = vadd.f32 0.0, %v2794
        %v2796 = vpop.f32.mrf.mxu0
        %2797 = vmatprep.mubr.bf16.mxu0 0
        %2798 = vmatmul.mubr.bf16.gmra.mxu0 %v2652
        %v2799 = vpop.f32.mrf.mxu0
        %v2800 = vadd.f32 0.0, %v2799
        %v2801 = vpop.f32.mrf.mxu0
        %v2802 = vpop.f32.mrf.mxu0
        %v2803 = vpop.f32.mrf.mxu0
        %2804 = vdwg.mxu0
        %v2805 = vadd.f32 %v2502, %v2744
        %v2806 = vadd.f32 %v2503, %v2747
        %v2807 = vadd.f32 %v2504, %v2752
        %v2808 = vadd.f32 %v2505, %v2755
        %v2809 = vadd.f32 %v2506, %v2760
        %v2810 = vadd.f32 %v2507, %v2763
        %v2811 = vadd.f32 %v2508, %v2768
        %v2812 = vadd.f32 %v2509, %v2771
        %v2813 = vadd.f32 %v2510, %v2776
        %v2814 = vadd.f32 %v2511, %v2779
        %v2815 = vadd.f32 %v2512, %v2784
        %v2816 = vadd.f32 %v2513, %v2787
        %v2817 = vadd.f32 %v2514, %v2792
        %v2818 = vadd.f32 %v2515, %v2795
        %v2819 = vadd.f32 %v2516, %v2800
        %v2820 = vld [vmem:[#allocation2 + $0x8] sm:$0xe]
        %s2821 = scalar_lea.vmem [#allocation3], 320
        %v2822 = vld [vmem:[%s2821] sm:$0xf]
        %v2823 = vld [vmem:[%s2821 + $0x4] sm:$0xf]
        %v2824 = vld [vmem:[%s2821 + $0x8] sm:$0xf]
        %v2825 = vld [vmem:[%s2821 + $0xc] sm:$0xf]
        %v2826 = vld [vmem:[%s2821 + $0x10] sm:$0xf]
        %v2827 = vld [vmem:[%s2821 + $0x14] sm:$0xf]
        %v2828 = vld [vmem:[%s2821 + $0x18] sm:$0xf]
        %v2829 = vld [vmem:[%s2821 + $0x1c] sm:$0xf]
        %v2830 = vld [vmem:[%s2821 + $0x20] sm:$0xf]
        %v2831 = vld [vmem:[%s2821 + $0x24] sm:$0xf]
        %v2832 = vld [vmem:[%s2821 + $0x28] sm:$0xf]
        %v2833 = vld [vmem:[%s2821 + $0x2c] sm:$0xf]
        %v2834 = vld [vmem:[%s2821 + $0x30] sm:$0xf]
        %v2835 = vld [vmem:[%s2821 + $0x34] sm:$0xf]
        %v2836 = vld [vmem:[%s2821 + $0x38] sm:$0xf]
        %v2837 = vld [vmem:[%s2821 + $0x3c] sm:$0xf]
        %v2839 = vunpack.c.l.b16 %v2820
        %v2840 = vpack.c.b16 %v2567, %v2839
        %v2841 = vrot.slane %v2840, 1
        %v2842 = vrot.slane %v2583, 1
        %v2843 = vsel %vm2097, %v2841, %v2842
        %v2844 = vrot.slane %v2584, 1
        %v2845 = vsel %vm2097, %v2842, %v2844
        %v2846 = vrot.slane %v2585, 1
        %v2847 = vsel %vm2097, %v2844, %v2846
        %v2848 = vrot.slane %v2586, 1
        %v2849 = vsel %vm2097, %v2846, %v2848
        %v2850 = vrot.slane %v2587, 1
        %v2851 = vsel %vm2097, %v2848, %v2850
        %v2852 = vrot.slane %v2588, 1
        %v2853 = vsel %vm2097, %v2850, %v2852
        %v2854 = vrot.slane %v2589, 1
        %v2855 = vsel %vm2097, %v2852, %v2854
        %v2880 = vunpack.c.l.b16 %v2822
        %v2881 = vunpack.c.l.b16 %v2823
        %v2882 = vunpack.c.l.b16 %v2824
        %v2883 = vunpack.c.l.b16 %v2825
        %v2884 = vunpack.c.l.b16 %v2826
        %v2885 = vunpack.c.l.b16 %v2827
        %v2886 = vunpack.c.l.b16 %v2828
        %v2887 = vunpack.c.l.b16 %v2829
        %v2888 = vunpack.c.l.b16 %v2830
        %v2889 = vunpack.c.l.b16 %v2831
        %v2890 = vunpack.c.l.b16 %v2832
        %v2891 = vunpack.c.l.b16 %v2833
        %v2892 = vunpack.c.l.b16 %v2834
        %v2893 = vunpack.c.l.b16 %v2835
        %v2894 = vunpack.c.l.b16 %v2836
        %v2895 = vunpack.c.l.b16 %v2837
        %v2896 = vpack.c.b16 %v2881, %v2880
        %v2897 = vpack.c.b16 %v2883, %v2882
        %v2898 = vpack.c.b16 %v2885, %v2884
        %v2899 = vpack.c.b16 %v2887, %v2886
        %v2900 = vpack.c.b16 %v2889, %v2888
        %v2901 = vpack.c.b16 %v2891, %v2890
        %v2902 = vpack.c.b16 %v2893, %v2892
        %v2903 = vpack.c.b16 %v2895, %v2894
        %2912 = vmatprep.subr.bf16.mxu0 0
        %2913 = vmatpush1.bf16.msra.mxu0 %v2903
        %2914 = vmatprep.subr.bf16.mxu0 0
        %2915 = vmatpush1.bf16.msra.mxu0 %v2902
        %2916 = vmatprep.subr.bf16.mxu0 0
        %2917 = vmatpush1.bf16.msra.mxu0 %v2901
        %2918 = vmatprep.subr.bf16.mxu0 0
        %2919 = vmatpush1.bf16.msra.mxu0 %v2900
        %2920 = vmatprep.subr.bf16.mxu0 0
        %2921 = vmatpush1.bf16.msra.mxu0 %v2899
        %2922 = vmatprep.subr.bf16.mxu0 0
        %2923 = vmatpush1.bf16.msra.mxu0 %v2898
        %2924 = vmatprep.subr.bf16.mxu0 0
        %2925 = vmatpush1.bf16.msra.mxu0 %v2897
        %2926 = vmatprep.subr.bf16.mxu0 0
        %2927 = vmatpush1.bf16.msra.mxu0 %v2896
        %2928 = vmatprep.subr.bf16.mxu0 0
        %2929 = vmatpush2.bf16.msra.mxu0 0
        %2930 = vmatprep.subr.bf16.mxu0 0
        %2931 = vmatpush2.bf16.msra.mxu0 0
        %2932 = vmatprep.subr.bf16.mxu0 0
        %2933 = vmatpush2.bf16.msra.mxu0 0
        %2934 = vmatprep.subr.bf16.mxu0 0
        %2935 = vmatpush2.bf16.msra.mxu0 0
        %2936 = vmatprep.subr.bf16.mxu0 0
        %2937 = vmatpush2.bf16.msra.mxu0 0
        %2938 = vmatprep.subr.bf16.mxu0 0
        %2939 = vmatpush2.bf16.msra.mxu0 0
        %2940 = vmatprep.subr.bf16.mxu0 0
        %2941 = vmatpush2.bf16.msra.mxu0 0
        %2942 = vmatprep.subr.bf16.mxu0 0
        %2943 = vmatpush2.bf16.msra.mxu0 0
        %2944 = vmatprep.mubr.bf16.mxu0 0
        %2945 = vmatmul.mubr.bf16.gmra.mxu0 %v2843
        %v2946 = vpop.f32.mrf.mxu0
        %v2947 = vadd.f32 0.0, %v2946
        %v2948 = vpop.f32.mrf.mxu0
        %v2949 = vpop.f32.mrf.mxu0
        %v2950 = vadd.f32 0.0, %v2949
        %v2951 = vpop.f32.mrf.mxu0
        %2952 = vmatprep.mubr.bf16.mxu0 0
        %2953 = vmatmul.mubr.bf16.gmra.mxu0 %v2845
        %v2954 = vpop.f32.mrf.mxu0
        %v2955 = vadd.f32 0.0, %v2954
        %v2956 = vpop.f32.mrf.mxu0
        %v2957 = vpop.f32.mrf.mxu0
        %v2958 = vadd.f32 0.0, %v2957
        %v2959 = vpop.f32.mrf.mxu0
        %2960 = vmatprep.mubr.bf16.mxu0 0
        %2961 = vmatmul.mubr.bf16.gmra.mxu0 %v2847
        %v2962 = vpop.f32.mrf.mxu0
        %v2963 = vadd.f32 0.0, %v2962
        %v2964 = vpop.f32.mrf.mxu0
        %v2965 = vpop.f32.mrf.mxu0
        %v2966 = vadd.f32 0.0, %v2965
        %v2967 = vpop.f32.mrf.mxu0
        %2968 = vmatprep.mubr.bf16.mxu0 0
        %2969 = vmatmul.mubr.bf16.gmra.mxu0 %v2849
        %v2970 = vpop.f32.mrf.mxu0
        %v2971 = vadd.f32 0.0, %v2970
        %v2972 = vpop.f32.mrf.mxu0
        %v2973 = vpop.f32.mrf.mxu0
        %v2974 = vadd.f32 0.0, %v2973
        %v2975 = vpop.f32.mrf.mxu0
        %2976 = vmatprep.mubr.bf16.mxu0 0
        %2977 = vmatmul.mubr.bf16.gmra.mxu0 %v2851
        %v2978 = vpop.f32.mrf.mxu0
        %v2979 = vadd.f32 0.0, %v2978
        %v2980 = vpop.f32.mrf.mxu0
        %v2981 = vpop.f32.mrf.mxu0
        %v2982 = vadd.f32 0.0, %v2981
        %v2983 = vpop.f32.mrf.mxu0
        %2984 = vmatprep.mubr.bf16.mxu0 0
        %2985 = vmatmul.mubr.bf16.gmra.mxu0 %v2853
        %v2986 = vpop.f32.mrf.mxu0
        %v2987 = vadd.f32 0.0, %v2986
        %v2988 = vpop.f32.mrf.mxu0
        %v2989 = vpop.f32.mrf.mxu0
        %v2990 = vadd.f32 0.0, %v2989
        %v2991 = vpop.f32.mrf.mxu0
        %2992 = vmatprep.mubr.bf16.mxu0 0
        %2993 = vmatmul.mubr.bf16.gmra.mxu0 %v2855
        %v2994 = vpop.f32.mrf.mxu0
        %v2995 = vadd.f32 0.0, %v2994
        %v2996 = vpop.f32.mrf.mxu0
        %v2997 = vpop.f32.mrf.mxu0
        %v2998 = vadd.f32 0.0, %v2997
        %v2999 = vpop.f32.mrf.mxu0
        %3000 = vmatprep.mubr.bf16.mxu0 0
        %3001 = vmatmul.mubr.bf16.gmra.mxu0 %v2854
        %v3002 = vpop.f32.mrf.mxu0
        %v3003 = vadd.f32 0.0, %v3002
        %v3004 = vpop.f32.mrf.mxu0
        %v3005 = vpop.f32.mrf.mxu0
        %v3006 = vpop.f32.mrf.mxu0
        %3007 = vdwg.mxu0
        %v3008 = vadd.f32 %v2805, %v2947
        %v3009 = vadd.f32 %v2806, %v2950
        %v3010 = vadd.f32 %v2807, %v2955
        %v3011 = vadd.f32 %v2808, %v2958
        %v3012 = vadd.f32 %v2809, %v2963
        %v3013 = vadd.f32 %v2810, %v2966
        %v3014 = vadd.f32 %v2811, %v2971
        %v3015 = vadd.f32 %v2812, %v2974
        %v3016 = vadd.f32 %v2813, %v2979
        %v3017 = vadd.f32 %v2814, %v2982
        %v3018 = vadd.f32 %v2815, %v2987
        %v3019 = vadd.f32 %v2816, %v2990
        %v3020 = vadd.f32 %v2817, %v2995
        %v3021 = vadd.f32 %v2818, %v2998
        %v3022 = vadd.f32 %v2819, %v3003
        %v3023 = vld [vmem:[#allocation2 + $0x10] sm:$0xf]
        %v3024 = vld [vmem:[#allocation2 + $0x14] sm:$0xf]
        %v3025 = vld [vmem:[#allocation2 + $0x18] sm:$0xf]
        %v3026 = vld [vmem:[#allocation2 + $0x1c] sm:$0xf]
        %v3027 = vld [vmem:[#allocation2 + $0x20] sm:$0xf]
        %v3028 = vld [vmem:[#allocation2 + $0x24] sm:$0xf]
        %v3029 = vld [vmem:[#allocation2 + $0x28] sm:$0xf]
        %v3030 = vld [vmem:[#allocation2 + $0x2c] sm:$0xf]
        %v3031 = vld [vmem:[#allocation2 + $0x30] sm:$0xf]
        %v3032 = vld [vmem:[#allocation2 + $0x34] sm:$0xf]
        %v3033 = vld [vmem:[#allocation2 + $0x38] sm:$0xf]
        %v3034 = vld [vmem:[#allocation2 + $0x3c] sm:$0xf]
        %v3035 = vld [vmem:[#allocation2 + $0x40] sm:$0xf]
        %v3036 = vld [vmem:[#allocation2 + $0x44] sm:$0xf]
        %v3037 = vld [vmem:[#allocation2 + $0x48] sm:$0xf]
        %s3038 = scalar_lea.vmem [#allocation3], 384
        %v3039 = vld [vmem:[%s3038] sm:$0xf]
        %v3040 = vld [vmem:[%s3038 + $0x4] sm:$0xf]
        %v3041 = vld [vmem:[%s3038 + $0x8] sm:$0xf]
        %v3042 = vld [vmem:[%s3038 + $0xc] sm:$0xf]
        %v3043 = vld [vmem:[%s3038 + $0x10] sm:$0xf]
        %v3044 = vld [vmem:[%s3038 + $0x14] sm:$0xf]
        %v3045 = vld [vmem:[%s3038 + $0x18] sm:$0xf]
        %v3046 = vld [vmem:[%s3038 + $0x1c] sm:$0xf]
        %v3047 = vld [vmem:[%s3038 + $0x20] sm:$0xf]
        %v3048 = vld [vmem:[%s3038 + $0x24] sm:$0xf]
        %v3049 = vld [vmem:[%s3038 + $0x28] sm:$0xf]
        %v3050 = vld [vmem:[%s3038 + $0x2c] sm:$0xf]
        %v3051 = vld [vmem:[%s3038 + $0x30] sm:$0xf]
        %v3052 = vld [vmem:[%s3038 + $0x34] sm:$0xf]
        %v3053 = vld [vmem:[%s3038 + $0x38] sm:$0xf]
        %v3054 = vld [vmem:[%s3038 + $0x3c] sm:$0xf]
        %v3070 = vunpack.c.l.b16 %v3023
        %v3071 = vunpack.c.l.b16 %v3024
        %v3072 = vunpack.c.l.b16 %v3025
        %v3073 = vunpack.c.l.b16 %v3026
        %v3074 = vunpack.c.l.b16 %v3027
        %v3075 = vunpack.c.l.b16 %v3028
        %v3076 = vunpack.c.l.b16 %v3029
        %v3077 = vunpack.c.l.b16 %v3030
        %v3078 = vunpack.c.l.b16 %v3031
        %v3079 = vunpack.c.l.b16 %v3032
        %v3080 = vunpack.c.l.b16 %v3033
        %v3081 = vunpack.c.l.b16 %v3034
        %v3082 = vunpack.c.l.b16 %v3035
        %v3083 = vunpack.c.l.b16 %v3036
        %v3084 = vunpack.c.l.b16 %v3037
        %v3085 = vpack.c.b16 %v3071, %v3070
        %v3086 = vpack.c.b16 %v3073, %v3072
        %v3087 = vpack.c.b16 %v3075, %v3074
        %v3088 = vpack.c.b16 %v3077, %v3076
        %v3089 = vpack.c.b16 %v3079, %v3078
        %v3090 = vpack.c.b16 %v3081, %v3080
        %v3091 = vpack.c.b16 %v3083, %v3082
        %v3092 = vpack.c.b16 %v3084, %v3084
        %v3117 = vunpack.c.l.b16 %v3039
        %v3118 = vunpack.c.l.b16 %v3040
        %v3119 = vunpack.c.l.b16 %v3041
        %v3120 = vunpack.c.l.b16 %v3042
        %v3121 = vunpack.c.l.b16 %v3043
        %v3122 = vunpack.c.l.b16 %v3044
        %v3123 = vunpack.c.l.b16 %v3045
        %v3124 = vunpack.c.l.b16 %v3046
        %v3125 = vunpack.c.l.b16 %v3047
        %v3126 = vunpack.c.l.b16 %v3048
        %v3127 = vunpack.c.l.b16 %v3049
        %v3128 = vunpack.c.l.b16 %v3050
        %v3129 = vunpack.c.l.b16 %v3051
        %v3130 = vunpack.c.l.b16 %v3052
        %v3131 = vunpack.c.l.b16 %v3053
        %v3132 = vunpack.c.l.b16 %v3054
        %v3133 = vpack.c.b16 %v3118, %v3117
        %v3134 = vpack.c.b16 %v3120, %v3119
        %v3135 = vpack.c.b16 %v3122, %v3121
        %v3136 = vpack.c.b16 %v3124, %v3123
        %v3137 = vpack.c.b16 %v3126, %v3125
        %v3138 = vpack.c.b16 %v3128, %v3127
        %v3139 = vpack.c.b16 %v3130, %v3129
        %v3140 = vpack.c.b16 %v3132, %v3131
        %3149 = vmatprep.subr.bf16.mxu0 0
        %3150 = vmatpush1.bf16.msra.mxu0 %v3140
        %3151 = vmatprep.subr.bf16.mxu0 0
        %3152 = vmatpush1.bf16.msra.mxu0 %v3139
        %3153 = vmatprep.subr.bf16.mxu0 0
        %3154 = vmatpush1.bf16.msra.mxu0 %v3138
        %3155 = vmatprep.subr.bf16.mxu0 0
        %3156 = vmatpush1.bf16.msra.mxu0 %v3137
        %3157 = vmatprep.subr.bf16.mxu0 0
        %3158 = vmatpush1.bf16.msra.mxu0 %v3136
        %3159 = vmatprep.subr.bf16.mxu0 0
        %3160 = vmatpush1.bf16.msra.mxu0 %v3135
        %3161 = vmatprep.subr.bf16.mxu0 0
        %3162 = vmatpush1.bf16.msra.mxu0 %v3134
        %3163 = vmatprep.subr.bf16.mxu0 0
        %3164 = vmatpush1.bf16.msra.mxu0 %v3133
        %3165 = vmatprep.subr.bf16.mxu0 0
        %3166 = vmatpush2.bf16.msra.mxu0 0
        %3167 = vmatprep.subr.bf16.mxu0 0
        %3168 = vmatpush2.bf16.msra.mxu0 0
        %3169 = vmatprep.subr.bf16.mxu0 0
        %3170 = vmatpush2.bf16.msra.mxu0 0
        %3171 = vmatprep.subr.bf16.mxu0 0
        %3172 = vmatpush2.bf16.msra.mxu0 0
        %3173 = vmatprep.subr.bf16.mxu0 0
        %3174 = vmatpush2.bf16.msra.mxu0 0
        %3175 = vmatprep.subr.bf16.mxu0 0
        %3176 = vmatpush2.bf16.msra.mxu0 0
        %3177 = vmatprep.subr.bf16.mxu0 0
        %3178 = vmatpush2.bf16.msra.mxu0 0
        %3179 = vmatprep.subr.bf16.mxu0 0
        %3180 = vmatpush2.bf16.msra.mxu0 0
        %3181 = vmatprep.mubr.bf16.mxu0 0
        %3182 = vmatmul.mubr.bf16.gmra.mxu0 %v3085
        %v3183 = vpop.f32.mrf.mxu0
        %v3184 = vadd.f32 0.0, %v3183
        %v3185 = vpop.f32.mrf.mxu0
        %v3186 = vpop.f32.mrf.mxu0
        %v3187 = vadd.f32 0.0, %v3186
        %v3188 = vpop.f32.mrf.mxu0
        %3189 = vmatprep.mubr.bf16.mxu0 0
        %3190 = vmatmul.mubr.bf16.gmra.mxu0 %v3086
        %v3191 = vpop.f32.mrf.mxu0
        %v3192 = vadd.f32 0.0, %v3191
        %v3193 = vpop.f32.mrf.mxu0
        %v3194 = vpop.f32.mrf.mxu0
        %v3195 = vadd.f32 0.0, %v3194
        %v3196 = vpop.f32.mrf.mxu0
        %3197 = vmatprep.mubr.bf16.mxu0 0
        %3198 = vmatmul.mubr.bf16.gmra.mxu0 %v3087
        %v3199 = vpop.f32.mrf.mxu0
        %v3200 = vadd.f32 0.0, %v3199
        %v3201 = vpop.f32.mrf.mxu0
        %v3202 = vpop.f32.mrf.mxu0
        %v3203 = vadd.f32 0.0, %v3202
        %v3204 = vpop.f32.mrf.mxu0
        %3205 = vmatprep.mubr.bf16.mxu0 0
        %3206 = vmatmul.mubr.bf16.gmra.mxu0 %v3088
        %v3207 = vpop.f32.mrf.mxu0
        %v3208 = vadd.f32 0.0, %v3207
        %v3209 = vpop.f32.mrf.mxu0
        %v3210 = vpop.f32.mrf.mxu0
        %v3211 = vadd.f32 0.0, %v3210
        %v3212 = vpop.f32.mrf.mxu0
        %3213 = vmatprep.mubr.bf16.mxu0 0
        %3214 = vmatmul.mubr.bf16.gmra.mxu0 %v3089
        %v3215 = vpop.f32.mrf.mxu0
        %v3216 = vadd.f32 0.0, %v3215
        %v3217 = vpop.f32.mrf.mxu0
        %v3218 = vpop.f32.mrf.mxu0
        %v3219 = vadd.f32 0.0, %v3218
        %v3220 = vpop.f32.mrf.mxu0
        %3221 = vmatprep.mubr.bf16.mxu0 0
        %3222 = vmatmul.mubr.bf16.gmra.mxu0 %v3090
        %v3223 = vpop.f32.mrf.mxu0
        %v3224 = vadd.f32 0.0, %v3223
        %v3225 = vpop.f32.mrf.mxu0
        %v3226 = vpop.f32.mrf.mxu0
        %v3227 = vadd.f32 0.0, %v3226
        %v3228 = vpop.f32.mrf.mxu0
        %3229 = vmatprep.mubr.bf16.mxu0 0
        %3230 = vmatmul.mubr.bf16.gmra.mxu0 %v3091
        %v3231 = vpop.f32.mrf.mxu0
        %v3232 = vadd.f32 0.0, %v3231
        %v3233 = vpop.f32.mrf.mxu0
        %v3234 = vpop.f32.mrf.mxu0
        %v3235 = vadd.f32 0.0, %v3234
        %v3236 = vpop.f32.mrf.mxu0
        %3237 = vmatprep.mubr.bf16.mxu0 0
        %3238 = vmatmul.mubr.bf16.gmra.mxu0 %v3092
        %v3239 = vpop.f32.mrf.mxu0
        %v3240 = vadd.f32 0.0, %v3239
        %v3241 = vpop.f32.mrf.mxu0
        %v3242 = vpop.f32.mrf.mxu0
        %v3243 = vpop.f32.mrf.mxu0
        %3244 = vdwg.mxu0
        %v3245 = vadd.f32 %v3008, %v3184
        %v3246 = vadd.f32 %v3009, %v3187
        %v3247 = vadd.f32 %v3010, %v3192
        %v3248 = vadd.f32 %v3011, %v3195
        %v3249 = vadd.f32 %v3012, %v3200
        %v3250 = vadd.f32 %v3013, %v3203
        %v3251 = vadd.f32 %v3014, %v3208
        %v3252 = vadd.f32 %v3015, %v3211
        %v3253 = vadd.f32 %v3016, %v3216
        %v3254 = vadd.f32 %v3017, %v3219
        %v3255 = vadd.f32 %v3018, %v3224
        %v3256 = vadd.f32 %v3019, %v3227
        %v3257 = vadd.f32 %v3020, %v3232
        %v3258 = vadd.f32 %v3021, %v3235
        %v3259 = vadd.f32 %v3022, %v3240
        %v3260 = vld [vmem:[#allocation2 + $0x10] sm:$0xf]
        %v3261 = vld [vmem:[#allocation2 + $0x14] sm:$0xf]
        %v3262 = vld [vmem:[#allocation2 + $0x18] sm:$0xf]
        %v3263 = vld [vmem:[#allocation2 + $0x1c] sm:$0xf]
        %v3264 = vld [vmem:[#allocation2 + $0x20] sm:$0xf]
        %v3265 = vld [vmem:[#allocation2 + $0x24] sm:$0xf]
        %v3266 = vld [vmem:[#allocation2 + $0x28] sm:$0xf]
        %v3267 = vld [vmem:[#allocation2 + $0x2c] sm:$0xf]
        %v3268 = vld [vmem:[#allocation2 + $0x30] sm:$0xf]
        %v3269 = vld [vmem:[#allocation2 + $0x34] sm:$0xf]
        %v3270 = vld [vmem:[#allocation2 + $0x38] sm:$0xf]
        %v3271 = vld [vmem:[#allocation2 + $0x3c] sm:$0xf]
        %v3272 = vld [vmem:[#allocation2 + $0x40] sm:$0xf]
        %v3273 = vld [vmem:[#allocation2 + $0x44] sm:$0xf]
        %v3274 = vld [vmem:[#allocation2 + $0x48] sm:$0xf]
        %v3275 = vld [vmem:[#allocation2 + $0x4c] sm:$0x1]
        %s3276 = scalar_lea.vmem [#allocation3], 448
        %v3277 = vld [vmem:[%s3276] sm:$0xf]
        %v3278 = vld [vmem:[%s3276 + $0x4] sm:$0xf]
        %v3279 = vld [vmem:[%s3276 + $0x8] sm:$0xf]
        %v3280 = vld [vmem:[%s3276 + $0xc] sm:$0xf]
        %v3281 = vld [vmem:[%s3276 + $0x10] sm:$0xf]
        %v3282 = vld [vmem:[%s3276 + $0x14] sm:$0xf]
        %v3283 = vld [vmem:[%s3276 + $0x18] sm:$0xf]
        %v3284 = vld [vmem:[%s3276 + $0x1c] sm:$0xf]
        %v3285 = vld [vmem:[%s3276 + $0x20] sm:$0xf]
        %v3286 = vld [vmem:[%s3276 + $0x24] sm:$0xf]
        %v3287 = vld [vmem:[%s3276 + $0x28] sm:$0xf]
        %v3288 = vld [vmem:[%s3276 + $0x2c] sm:$0xf]
        %v3289 = vld [vmem:[%s3276 + $0x30] sm:$0xf]
        %v3290 = vld [vmem:[%s3276 + $0x34] sm:$0xf]
        %v3291 = vld [vmem:[%s3276 + $0x38] sm:$0xf]
        %v3292 = vld [vmem:[%s3276 + $0x3c] sm:$0xf]
        %v3309 = vunpack.c.l.b16 %v3260
        %v3310 = vunpack.c.l.b16 %v3261
        %v3311 = vunpack.c.l.b16 %v3262
        %v3312 = vunpack.c.l.b16 %v3263
        %v3313 = vunpack.c.l.b16 %v3264
        %v3314 = vunpack.c.l.b16 %v3265
        %v3315 = vunpack.c.l.b16 %v3266
        %v3316 = vunpack.c.l.b16 %v3267
        %v3317 = vunpack.c.l.b16 %v3268
        %v3318 = vunpack.c.l.b16 %v3269
        %v3319 = vunpack.c.l.b16 %v3270
        %v3320 = vunpack.c.l.b16 %v3271
        %v3321 = vunpack.c.l.b16 %v3272
        %v3322 = vunpack.c.l.b16 %v3273
        %v3323 = vunpack.c.l.b16 %v3274
        %v3324 = vunpack.c.l.b16 %v3275
        %v3325 = vpack.c.b16 %v3310, %v3309
        %v3326 = vpack.c.b16 %v3312, %v3311
        %v3327 = vpack.c.b16 %v3314, %v3313
        %v3328 = vpack.c.b16 %v3316, %v3315
        %v3329 = vpack.c.b16 %v3318, %v3317
        %v3330 = vpack.c.b16 %v3320, %v3319
        %v3331 = vpack.c.b16 %v3322, %v3321
        %v3332 = vpack.c.b16 %v3324, %v3323
        %v3334 = vshrl.u32 %v3325, 16
        %v3336 = vshll.u32 %v3325, 16
        %v3338 = vrot.slane %v3336, 1
        %v3339 = vor.u32 %v3334, %v3338
        %v3341 = vshll.u32 %v3326, 16
        %v3343 = vrot.slane %v3341, 1
        %v3344 = vsel %vm304, %v3339, %v3343
        %v3345 = vshrl.u32 %v3326, 16
        %v3347 = vor.u32 %v3345, %v3343
        %v3349 = vshll.u32 %v3327, 16
        %v3351 = vrot.slane %v3349, 1
        %v3352 = vsel %vm304, %v3347, %v3351
        %v3353 = vshrl.u32 %v3327, 16
        %v3355 = vor.u32 %v3353, %v3351
        %v3357 = vshll.u32 %v3328, 16
        %v3359 = vrot.slane %v3357, 1
        %v3360 = vsel %vm304, %v3355, %v3359
        %v3361 = vshrl.u32 %v3328, 16
        %v3363 = vor.u32 %v3361, %v3359
        %v3365 = vshll.u32 %v3329, 16
        %v3367 = vrot.slane %v3365, 1
        %v3368 = vsel %vm304, %v3363, %v3367
        %v3369 = vshrl.u32 %v3329, 16
        %v3371 = vor.u32 %v3369, %v3367
        %v3373 = vshll.u32 %v3330, 16
        %v3375 = vrot.slane %v3373, 1
        %v3376 = vsel %vm304, %v3371, %v3375
        %v3377 = vshrl.u32 %v3330, 16
        %v3379 = vor.u32 %v3377, %v3375
        %v3381 = vshll.u32 %v3331, 16
        %v3383 = vrot.slane %v3381, 1
        %v3384 = vsel %vm304, %v3379, %v3383
        %v3385 = vshrl.u32 %v3331, 16
        %v3387 = vor.u32 %v3385, %v3383
        %v3389 = vshll.u32 %v3332, 16
        %v3391 = vrot.slane %v3389, 1
        %v3392 = vsel %vm304, %v3387, %v3391
        %v3393 = vshrl.u32 %v3332, 16
        %v3395 = vor.u32 %v3393, %v3391
        %v3420 = vunpack.c.l.b16 %v3277
        %v3421 = vunpack.c.l.b16 %v3278
        %v3422 = vunpack.c.l.b16 %v3279
        %v3423 = vunpack.c.l.b16 %v3280
        %v3424 = vunpack.c.l.b16 %v3281
        %v3425 = vunpack.c.l.b16 %v3282
        %v3426 = vunpack.c.l.b16 %v3283
        %v3427 = vunpack.c.l.b16 %v3284
        %v3428 = vunpack.c.l.b16 %v3285
        %v3429 = vunpack.c.l.b16 %v3286
        %v3430 = vunpack.c.l.b16 %v3287
        %v3431 = vunpack.c.l.b16 %v3288
        %v3432 = vunpack.c.l.b16 %v3289
        %v3433 = vunpack.c.l.b16 %v3290
        %v3434 = vunpack.c.l.b16 %v3291
        %v3435 = vunpack.c.l.b16 %v3292
        %v3436 = vpack.c.b16 %v3421, %v3420
        %v3437 = vpack.c.b16 %v3423, %v3422
        %v3438 = vpack.c.b16 %v3425, %v3424
        %v3439 = vpack.c.b16 %v3427, %v3426
        %v3440 = vpack.c.b16 %v3429, %v3428
        %v3441 = vpack.c.b16 %v3431, %v3430
        %v3442 = vpack.c.b16 %v3433, %v3432
        %v3443 = vpack.c.b16 %v3435, %v3434
        %3452 = vmatprep.subr.bf16.mxu0 0
        %3453 = vmatpush1.bf16.msra.mxu0 %v3443
        %3454 = vmatprep.subr.bf16.mxu0 0
        %3455 = vmatpush1.bf16.msra.mxu0 %v3442
        %3456 = vmatprep.subr.bf16.mxu0 0
        %3457 = vmatpush1.bf16.msra.mxu0 %v3441
        %3458 = vmatprep.subr.bf16.mxu0 0
        %3459 = vmatpush1.bf16.msra.mxu0 %v3440
        %3460 = vmatprep.subr.bf16.mxu0 0
        %3461 = vmatpush1.bf16.msra.mxu0 %v3439
        %3462 = vmatprep.subr.bf16.mxu0 0
        %3463 = vmatpush1.bf16.msra.mxu0 %v3438
        %3464 = vmatprep.subr.bf16.mxu0 0
        %3465 = vmatpush1.bf16.msra.mxu0 %v3437
        %3466 = vmatprep.subr.bf16.mxu0 0
        %3467 = vmatpush1.bf16.msra.mxu0 %v3436
        %3468 = vmatprep.subr.bf16.mxu0 0
        %3469 = vmatpush2.bf16.msra.mxu0 0
        %3470 = vmatprep.subr.bf16.mxu0 0
        %3471 = vmatpush2.bf16.msra.mxu0 0
        %3472 = vmatprep.subr.bf16.mxu0 0
        %3473 = vmatpush2.bf16.msra.mxu0 0
        %3474 = vmatprep.subr.bf16.mxu0 0
        %3475 = vmatpush2.bf16.msra.mxu0 0
        %3476 = vmatprep.subr.bf16.mxu0 0
        %3477 = vmatpush2.bf16.msra.mxu0 0
        %3478 = vmatprep.subr.bf16.mxu0 0
        %3479 = vmatpush2.bf16.msra.mxu0 0
        %3480 = vmatprep.subr.bf16.mxu0 0
        %3481 = vmatpush2.bf16.msra.mxu0 0
        %3482 = vmatprep.subr.bf16.mxu0 0
        %3483 = vmatpush2.bf16.msra.mxu0 0
        %3484 = vmatprep.mubr.bf16.mxu0 0
        %3485 = vmatmul.mubr.bf16.gmra.mxu0 %v3344
        %v3486 = vpop.f32.mrf.mxu0
        %v3487 = vadd.f32 0.0, %v3486
        %v3488 = vpop.f32.mrf.mxu0
        %v3489 = vpop.f32.mrf.mxu0
        %v3490 = vadd.f32 0.0, %v3489
        %v3491 = vpop.f32.mrf.mxu0
        %3492 = vmatprep.mubr.bf16.mxu0 0
        %3493 = vmatmul.mubr.bf16.gmra.mxu0 %v3352
        %v3494 = vpop.f32.mrf.mxu0
        %v3495 = vadd.f32 0.0, %v3494
        %v3496 = vpop.f32.mrf.mxu0
        %v3497 = vpop.f32.mrf.mxu0
        %v3498 = vadd.f32 0.0, %v3497
        %v3499 = vpop.f32.mrf.mxu0
        %3500 = vmatprep.mubr.bf16.mxu0 0
        %3501 = vmatmul.mubr.bf16.gmra.mxu0 %v3360
        %v3502 = vpop.f32.mrf.mxu0
        %v3503 = vadd.f32 0.0, %v3502
        %v3504 = vpop.f32.mrf.mxu0
        %v3505 = vpop.f32.mrf.mxu0
        %v3506 = vadd.f32 0.0, %v3505
        %v3507 = vpop.f32.mrf.mxu0
        %3508 = vmatprep.mubr.bf16.mxu0 0
        %3509 = vmatmul.mubr.bf16.gmra.mxu0 %v3368
        %v3510 = vpop.f32.mrf.mxu0
        %v3511 = vadd.f32 0.0, %v3510
        %v3512 = vpop.f32.mrf.mxu0
        %v3513 = vpop.f32.mrf.mxu0
        %v3514 = vadd.f32 0.0, %v3513
        %v3515 = vpop.f32.mrf.mxu0
        %3516 = vmatprep.mubr.bf16.mxu0 0
        %3517 = vmatmul.mubr.bf16.gmra.mxu0 %v3376
        %v3518 = vpop.f32.mrf.mxu0
        %v3519 = vadd.f32 0.0, %v3518
        %v3520 = vpop.f32.mrf.mxu0
        %v3521 = vpop.f32.mrf.mxu0
        %v3522 = vadd.f32 0.0, %v3521
        %v3523 = vpop.f32.mrf.mxu0
        %3524 = vmatprep.mubr.bf16.mxu0 0
        %3525 = vmatmul.mubr.bf16.gmra.mxu0 %v3384
        %v3526 = vpop.f32.mrf.mxu0
        %v3527 = vadd.f32 0.0, %v3526
        %v3528 = vpop.f32.mrf.mxu0
        %v3529 = vpop.f32.mrf.mxu0
        %v3530 = vadd.f32 0.0, %v3529
        %v3531 = vpop.f32.mrf.mxu0
        %3532 = vmatprep.mubr.bf16.mxu0 0
        %3533 = vmatmul.mubr.bf16.gmra.mxu0 %v3392
        %v3534 = vpop.f32.mrf.mxu0
        %v3535 = vadd.f32 0.0, %v3534
        %v3536 = vpop.f32.mrf.mxu0
        %v3537 = vpop.f32.mrf.mxu0
        %v3538 = vadd.f32 0.0, %v3537
        %v3539 = vpop.f32.mrf.mxu0
        %3540 = vmatprep.mubr.bf16.mxu0 0
        %3541 = vmatmul.mubr.bf16.gmra.mxu0 %v3395
        %v3542 = vpop.f32.mrf.mxu0
        %v3543 = vadd.f32 0.0, %v3542
        %v3544 = vpop.f32.mrf.mxu0
        %v3545 = vpop.f32.mrf.mxu0
        %v3546 = vpop.f32.mrf.mxu0
        %3547 = vdwg.mxu0
        %v3548 = vadd.f32 %v3245, %v3487
        %v3549 = vadd.f32 %v3246, %v3490
        %v3550 = vadd.f32 %v3247, %v3495
        %v3551 = vadd.f32 %v3248, %v3498
        %v3552 = vadd.f32 %v3249, %v3503
        %v3553 = vadd.f32 %v3250, %v3506
        %v3554 = vadd.f32 %v3251, %v3511
        %v3555 = vadd.f32 %v3252, %v3514
        %v3556 = vadd.f32 %v3253, %v3519
        %v3557 = vadd.f32 %v3254, %v3522
        %v3558 = vadd.f32 %v3255, %v3527
        %v3559 = vadd.f32 %v3256, %v3530
        %v3560 = vadd.f32 %v3257, %v3535
        %v3561 = vadd.f32 %v3258, %v3538
        %v3562 = vadd.f32 %v3259, %v3543
        %v3563 = vld [vmem:[#allocation2 + $0x10] sm:$0xe]
        %s3564 = scalar_lea.vmem [#allocation3], 512
        %v3565 = vld [vmem:[%s3564] sm:$0xf]
        %v3566 = vld [vmem:[%s3564 + $0x4] sm:$0xf]
        %v3567 = vld [vmem:[%s3564 + $0x8] sm:$0xf]
        %v3568 = vld [vmem:[%s3564 + $0xc] sm:$0xf]
        %v3569 = vld [vmem:[%s3564 + $0x10] sm:$0xf]
        %v3570 = vld [vmem:[%s3564 + $0x14] sm:$0xf]
        %v3571 = vld [vmem:[%s3564 + $0x18] sm:$0xf]
        %v3572 = vld [vmem:[%s3564 + $0x1c] sm:$0xf]
        %v3573 = vld [vmem:[%s3564 + $0x20] sm:$0xf]
        %v3574 = vld [vmem:[%s3564 + $0x24] sm:$0xf]
        %v3575 = vld [vmem:[%s3564 + $0x28] sm:$0xf]
        %v3576 = vld [vmem:[%s3564 + $0x2c] sm:$0xf]
        %v3577 = vld [vmem:[%s3564 + $0x30] sm:$0xf]
        %v3578 = vld [vmem:[%s3564 + $0x34] sm:$0xf]
        %v3579 = vld [vmem:[%s3564 + $0x38] sm:$0xf]
        %v3580 = vld [vmem:[%s3564 + $0x3c] sm:$0xf]
        %v3582 = vunpack.c.l.b16 %v3563
        %v3583 = vpack.c.b16 %v3310, %v3582
        %v3584 = vrot.slane %v3583, 1
        %v3585 = vrot.slane %v3326, 1
        %v3586 = vsel %vm2097, %v3584, %v3585
        %v3587 = vrot.slane %v3327, 1
        %v3588 = vsel %vm2097, %v3585, %v3587
        %v3589 = vrot.slane %v3328, 1
        %v3590 = vsel %vm2097, %v3587, %v3589
        %v3591 = vrot.slane %v3329, 1
        %v3592 = vsel %vm2097, %v3589, %v3591
        %v3593 = vrot.slane %v3330, 1
        %v3594 = vsel %vm2097, %v3591, %v3593
        %v3595 = vrot.slane %v3331, 1
        %v3596 = vsel %vm2097, %v3593, %v3595
        %v3597 = vrot.slane %v3332, 1
        %v3598 = vsel %vm2097, %v3595, %v3597
        %v3623 = vunpack.c.l.b16 %v3565
        %v3624 = vunpack.c.l.b16 %v3566
        %v3625 = vunpack.c.l.b16 %v3567
        %v3626 = vunpack.c.l.b16 %v3568
        %v3627 = vunpack.c.l.b16 %v3569
        %v3628 = vunpack.c.l.b16 %v3570
        %v3629 = vunpack.c.l.b16 %v3571
        %v3630 = vunpack.c.l.b16 %v3572
        %v3631 = vunpack.c.l.b16 %v3573
        %v3632 = vunpack.c.l.b16 %v3574
        %v3633 = vunpack.c.l.b16 %v3575
        %v3634 = vunpack.c.l.b16 %v3576
        %v3635 = vunpack.c.l.b16 %v3577
        %v3636 = vunpack.c.l.b16 %v3578
        %v3637 = vunpack.c.l.b16 %v3579
        %v3638 = vunpack.c.l.b16 %v3580
        %v3639 = vpack.c.b16 %v3624, %v3623
        %v3640 = vpack.c.b16 %v3626, %v3625
        %v3641 = vpack.c.b16 %v3628, %v3627
        %v3642 = vpack.c.b16 %v3630, %v3629
        %v3643 = vpack.c.b16 %v3632, %v3631
        %v3644 = vpack.c.b16 %v3634, %v3633
        %v3645 = vpack.c.b16 %v3636, %v3635
        %v3646 = vpack.c.b16 %v3638, %v3637
        %3655 = vmatprep.subr.bf16.mxu0 0
        %3656 = vmatpush1.bf16.msra.mxu0 %v3646
        %3657 = vmatprep.subr.bf16.mxu0 0
        %3658 = vmatpush1.bf16.msra.mxu0 %v3645
        %3659 = vmatprep.subr.bf16.mxu0 0
        %3660 = vmatpush1.bf16.msra.mxu0 %v3644
        %3661 = vmatprep.subr.bf16.mxu0 0
        %3662 = vmatpush1.bf16.msra.mxu0 %v3643
        %3663 = vmatprep.subr.bf16.mxu0 0
        %3664 = vmatpush1.bf16.msra.mxu0 %v3642
        %3665 = vmatprep.subr.bf16.mxu0 0
        %3666 = vmatpush1.bf16.msra.mxu0 %v3641
        %3667 = vmatprep.subr.bf16.mxu0 0
        %3668 = vmatpush1.bf16.msra.mxu0 %v3640
        %3669 = vmatprep.subr.bf16.mxu0 0
        %3670 = vmatpush1.bf16.msra.mxu0 %v3639
        %3671 = vmatprep.subr.bf16.mxu0 0
        %3672 = vmatpush2.bf16.msra.mxu0 0
        %3673 = vmatprep.subr.bf16.mxu0 0
        %3674 = vmatpush2.bf16.msra.mxu0 0
        %3675 = vmatprep.subr.bf16.mxu0 0
        %3676 = vmatpush2.bf16.msra.mxu0 0
        %3677 = vmatprep.subr.bf16.mxu0 0
        %3678 = vmatpush2.bf16.msra.mxu0 0
        %3679 = vmatprep.subr.bf16.mxu0 0
        %3680 = vmatpush2.bf16.msra.mxu0 0
        %3681 = vmatprep.subr.bf16.mxu0 0
        %3682 = vmatpush2.bf16.msra.mxu0 0
        %3683 = vmatprep.subr.bf16.mxu0 0
        %3684 = vmatpush2.bf16.msra.mxu0 0
        %3685 = vmatprep.subr.bf16.mxu0 0
        %3686 = vmatpush2.bf16.msra.mxu0 0
        %3687 = vmatprep.mubr.bf16.mxu0 0
        %3688 = vmatmul.mubr.bf16.gmra.mxu0 %v3586
        %v3689 = vpop.f32.mrf.mxu0
        %v3690 = vadd.f32 0.0, %v3689
        %v3691 = vpop.f32.mrf.mxu0
        %v3692 = vpop.f32.mrf.mxu0
        %v3693 = vadd.f32 0.0, %v3692
        %v3694 = vpop.f32.mrf.mxu0
        %3695 = vmatprep.mubr.bf16.mxu0 0
        %3696 = vmatmul.mubr.bf16.gmra.mxu0 %v3588
        %v3697 = vpop.f32.mrf.mxu0
        %v3698 = vadd.f32 0.0, %v3697
        %v3699 = vpop.f32.mrf.mxu0
        %v3700 = vpop.f32.mrf.mxu0
        %v3701 = vadd.f32 0.0, %v3700
        %v3702 = vpop.f32.mrf.mxu0
        %3703 = vmatprep.mubr.bf16.mxu0 0
        %3704 = vmatmul.mubr.bf16.gmra.mxu0 %v3590
        %v3705 = vpop.f32.mrf.mxu0
        %v3706 = vadd.f32 0.0, %v3705
        %v3707 = vpop.f32.mrf.mxu0
        %v3708 = vpop.f32.mrf.mxu0
        %v3709 = vadd.f32 0.0, %v3708
        %v3710 = vpop.f32.mrf.mxu0
        %3711 = vmatprep.mubr.bf16.mxu0 0
        %3712 = vmatmul.mubr.bf16.gmra.mxu0 %v3592
        %v3713 = vpop.f32.mrf.mxu0
        %v3714 = vadd.f32 0.0, %v3713
        %v3715 = vpop.f32.mrf.mxu0
        %v3716 = vpop.f32.mrf.mxu0
        %v3717 = vadd.f32 0.0, %v3716
        %v3718 = vpop.f32.mrf.mxu0
        %3719 = vmatprep.mubr.bf16.mxu0 0
        %3720 = vmatmul.mubr.bf16.gmra.mxu0 %v3594
        %v3721 = vpop.f32.mrf.mxu0
        %v3722 = vadd.f32 0.0, %v3721
        %v3723 = vpop.f32.mrf.mxu0
        %v3724 = vpop.f32.mrf.mxu0
        %v3725 = vadd.f32 0.0, %v3724
        %v3726 = vpop.f32.mrf.mxu0
        %3727 = vmatprep.mubr.bf16.mxu0 0
        %3728 = vmatmul.mubr.bf16.gmra.mxu0 %v3596
        %v3729 = vpop.f32.mrf.mxu0
        %v3730 = vadd.f32 0.0, %v3729
        %v3731 = vpop.f32.mrf.mxu0
        %v3732 = vpop.f32.mrf.mxu0
        %v3733 = vadd.f32 0.0, %v3732
        %v3734 = vpop.f32.mrf.mxu0
        %3735 = vmatprep.mubr.bf16.mxu0 0
        %3736 = vmatmul.mubr.bf16.gmra.mxu0 %v3598
        %v3737 = vpop.f32.mrf.mxu0
        %v3738 = vadd.f32 0.0, %v3737
        %v3739 = vpop.f32.mrf.mxu0
        %v3740 = vpop.f32.mrf.mxu0
        %v3741 = vadd.f32 0.0, %v3740
        %v3742 = vpop.f32.mrf.mxu0
        %3743 = vmatprep.mubr.bf16.mxu0 0
        %3744 = vmatmul.mubr.bf16.gmra.mxu0 %v3597
        %v3745 = vpop.f32.mrf.mxu0
        %v3746 = vadd.f32 0.0, %v3745
        %v3747 = vpop.f32.mrf.mxu0
        %v3748 = vpop.f32.mrf.mxu0
        %v3749 = vpop.f32.mrf.mxu0
        %3750 = vdwg.mxu0
        %v3751 = vadd.f32 %v3548, %v3690
        %v3752 = vadd.f32 %v3549, %v3693
        %v3753 = vadd.f32 %v3550, %v3698
        %v3754 = vadd.f32 %v3551, %v3701
        %v3755 = vadd.f32 %v3552, %v3706
        %v3756 = vadd.f32 %v3553, %v3709
        %v3757 = vadd.f32 %v3554, %v3714
        %v3758 = vadd.f32 %v3555, %v3717
        %v3759 = vadd.f32 %v3556, %v3722
        %v3760 = vadd.f32 %v3557, %v3725
        %v3761 = vadd.f32 %v3558, %v3730
        %v3762 = vadd.f32 %v3559, %v3733
        %v3763 = vadd.f32 %v3560, %v3738
        %v3764 = vadd.f32 %v3561, %v3741
        %v3765 = vadd.f32 %v3562, %v3746
        %v3766 = vld [vmem:[%s3 + $0x2] sm:$0x1]
        %v3767 = vlaneseq
        %v3768 = vshrl.u32 %v3767, 7
        %v3769 = vsub.s32 0, %v3768
        %v3770 = vrot.slane %v3766, %v3769
        %v3771 = vmul.f32 %v3751, %v3770
        %v3772 = vmul.f32 %v3752, %v3770
        %v3773 = vmul.f32 %v3753, %v3770
        %v3774 = vmul.f32 %v3754, %v3770
        %v3775 = vmul.f32 %v3755, %v3770
        %v3776 = vmul.f32 %v3756, %v3770
        %v3777 = vmul.f32 %v3757, %v3770
        %v3778 = vmul.f32 %v3758, %v3770
        %v3779 = vmul.f32 %v3759, %v3770
        %v3780 = vmul.f32 %v3760, %v3770
        %v3781 = vmul.f32 %v3761, %v3770
        %v3782 = vmul.f32 %v3762, %v3770
        %v3783 = vmul.f32 %v3763, %v3770
        %v3784 = vmul.f32 %v3764, %v3770
        %v3785 = vmul.f32 %v3765, %v3770
        %v3786 = vld [vmem:[%s3 + $0x3] sm:$0x1]
        %v3787 = vlaneseq
        %v3788 = vshrl.u32 %v3787, 7
        %v3789 = vsub.s32 0, %v3788
        %v3790 = vrot.slane %v3786, %v3789
        %v3791 = vadd.f32 %v3771, %v3790
        %v3792 = vadd.f32 %v3772, %v3790
        %v3793 = vadd.f32 %v3773, %v3790
        %v3794 = vadd.f32 %v3774, %v3790
        %v3795 = vadd.f32 %v3775, %v3790
        %v3796 = vadd.f32 %v3776, %v3790
        %v3797 = vadd.f32 %v3777, %v3790
        %v3798 = vadd.f32 %v3778, %v3790
        %v3799 = vadd.f32 %v3779, %v3790
        %v3800 = vadd.f32 %v3780, %v3790
        %v3801 = vadd.f32 %v3781, %v3790
        %v3802 = vadd.f32 %v3782, %v3790
        %v3803 = vadd.f32 %v3783, %v3790
        %v3804 = vadd.f32 %v3784, %v3790
        %v3805 = vadd.f32 %v3785, %v3790
        %v3806 = vld [vmem:[%s3 + $0x4] sm:$0x1]
        %v3807 = vlaneseq
        %v3808 = vshrl.u32 %v3807, 7
        %v3809 = vsub.s32 0, %v3808
        %v3810 = vrot.slane %v3806, %v3809
        %v3811 = vmul.f32 %v1196, %v3810
        %v3812 = vmul.f32 %v1198, %v3810
        %v3813 = vmul.f32 %v1200, %v3810
        %v3814 = vmul.f32 %v1202, %v3810
        %v3815 = vmul.f32 %v1204, %v3810
        %v3816 = vmul.f32 %v1206, %v3810
        %v3817 = vmul.f32 %v1208, %v3810
        %v3818 = vmul.f32 %v1210, %v3810
        %v3819 = vmul.f32 %v1212, %v3810
        %v3820 = vmul.f32 %v1214, %v3810
        %v3821 = vmul.f32 %v1216, %v3810
        %v3822 = vmul.f32 %v1218, %v3810
        %v3823 = vmul.f32 %v1220, %v3810
        %v3824 = vmul.f32 %v1222, %v3810
        %v3825 = vmul.f32 %v1224, %v3810
        %v3826 = vld [vmem:[%s3 + $0x5] sm:$0x1]
        %v3827 = vlaneseq
        %v3828 = vshrl.u32 %v3827, 7
        %v3829 = vsub.s32 0, %v3828
        %v3830 = vrot.slane %v3826, %v3829
        %v3831 = vadd.f32 %v3811, %v3830
        %v3832 = vadd.f32 %v3812, %v3830
        %v3833 = vadd.f32 %v3813, %v3830
        %v3834 = vadd.f32 %v3814, %v3830
        %v3835 = vadd.f32 %v3815, %v3830
        %v3836 = vadd.f32 %v3816, %v3830
        %v3837 = vadd.f32 %v3817, %v3830
        %v3838 = vadd.f32 %v3818, %v3830
        %v3839 = vadd.f32 %v3819, %v3830
        %v3840 = vadd.f32 %v3820, %v3830
        %v3841 = vadd.f32 %v3821, %v3830
        %v3842 = vadd.f32 %v3822, %v3830
        %v3843 = vadd.f32 %v3823, %v3830
        %v3844 = vadd.f32 %v3824, %v3830
        %v3845 = vadd.f32 %v3825, %v3830
        %v3846 = vadd.f32 %v3791, %v3831
        %v3847 = vadd.f32 %v3792, %v3832
        %v3848 = vadd.f32 %v3793, %v3833
        %v3849 = vadd.f32 %v3794, %v3834
        %v3850 = vadd.f32 %v3795, %v3835
        %v3851 = vadd.f32 %v3796, %v3836
        %v3852 = vadd.f32 %v3797, %v3837
        %v3853 = vadd.f32 %v3798, %v3838
        %v3854 = vadd.f32 %v3799, %v3839
        %v3855 = vadd.f32 %v3800, %v3840
        %v3856 = vadd.f32 %v3801, %v3841
        %v3857 = vadd.f32 %v3802, %v3842
        %v3858 = vadd.f32 %v3803, %v3843
        %v3859 = vadd.f32 %v3804, %v3844
        %v3860 = vadd.f32 %v3805, %v3845
        %v3861 = vmax.f32 %v3846, 0.0
        %v3862 = vmax.f32 %v3847, 0.0
        %v3863 = vmax.f32 %v3848, 0.0
        %v3864 = vmax.f32 %v3849, 0.0
        %v3865 = vmax.f32 %v3850, 0.0
        %v3866 = vmax.f32 %v3851, 0.0
        %v3867 = vmax.f32 %v3852, 0.0
        %v3868 = vmax.f32 %v3853, 0.0
        %v3869 = vmax.f32 %v3854, 0.0
        %v3870 = vmax.f32 %v3855, 0.0
        %v3871 = vmax.f32 %v3856, 0.0
        %v3872 = vmax.f32 %v3857, 0.0
        %v3873 = vmax.f32 %v3858, 0.0
        %v3874 = vmax.f32 %v3859, 0.0
        %v3875 = vmax.f32 %v3860, 0.0
        %3876 = vst [vmem:[%s232] sm:$0xff] %v3861
        %3877 = vst [vmem:[%s232 + $0x8] sm:$0xff] %v3862
        %3878 = vst [vmem:[%s232 + $0x10] sm:$0xff] %v3863
        %3879 = vst [vmem:[%s232 + $0x18] sm:$0xff] %v3864
        %3880 = vst [vmem:[%s232 + $0x20] sm:$0xff] %v3865
        %3881 = vst [vmem:[%s232 + $0x28] sm:$0xff] %v3866
        %3882 = vst [vmem:[%s232 + $0x30] sm:$0xff] %v3867
        %3883 = vst [vmem:[%s232 + $0x38] sm:$0xff] %v3868
        %3884 = vst [vmem:[%s232 + $0x40] sm:$0xff] %v3869
        %3885 = vst [vmem:[%s232 + $0x48] sm:$0xff] %v3870
        %3886 = vst [vmem:[%s232 + $0x50] sm:$0xff] %v3871
        %3887 = vst [vmem:[%s232 + $0x58] sm:$0xff] %v3872
        %3888 = vst [vmem:[%s232 + $0x60] sm:$0xff] %v3873
        %3889 = vst [vmem:[%s232 + $0x68] sm:$0xff] %v3874
        %3890 = vst [vmem:[%s232 + $0x70] sm:$0xff] %v3875
        %s3891 = sand.u32 %s138, 1
        %s3892 = scalar_lea.sflag [#allocation5], %s3891
        %s3893 = sand.u32 %s138, 1
        %s3894 = smul.addr %s3893, 144
        %s3895 = scalar_lea.vmem [#allocation6], %s3894
        // Predicated region
        $region45: #{tpu_custom_call.1} parent=39 // pred_check
          %p3896 = pneg %p148
        $region46: #{tpu_custom_call.1} parent=39 // pred_check_branch
          %3898 = sbr.rel (%p3896) target = $region48
        $region47: #{tpu_custom_call.1} parent=39 // pred_region
          %s3900 = ssub.s32 2304, 2304
          %3901 = vsyncadd %s3892, %s3900
          %s3902 = smul.addr %s20, 18
          %s3903 = smul.addr %s3902, 128
          %s3904 = scalar_lea.hbm %s5, %s3903
          %s3905 = sshll.u32 %s3895, 4
          %s3906 = int_to_ptr.vmem [resolvable:$true] %s3905
          %3911 = dma.vmem_to_hbm [thread:$0]  %s3906, 2304, %s3904, %s3892, 128, 128, 8
        $region48: #{tpu_custom_call.1} parent=39 // pred_fallthru
          _
      $region40: #{tpu_custom_call.1} parent=5 // pred_fallthru
        _
      %p3912 = scmp.le.s32.totalorder 2, %s15
      // Predicated region
      $region49: #{tpu_custom_call.1} parent=5 // pred_check
        %p3913 = pneg %p3912
      $region50: #{tpu_custom_call.1} parent=5 // pred_check_branch
        %3915 = sbr.rel (%p3913) target = $region52
      $region51: #{tpu_custom_call.1} parent=5 // pred_region
        %s3916 = ssub.s32 %s15, 2
        // Predicated region
        $region53: #{tpu_custom_call.1} parent=51 // pred_check
          %p3917 = pneg %p154
        $region54: #{tpu_custom_call.1} parent=51 // pred_check_branch
          %3919 = sbr.rel (%p3917) target = $region56
        $region55: #{tpu_custom_call.1} parent=51 // pred_region
          %s3920 = sand.u32 %s139, 1
          %s3921 = scalar_lea.sflag [#allocation5], %s3920
          %s3922 = sand.u32 %s139, 1
          %s3923 = smul.addr %s3922, 144
          %s3924 = scalar_lea.vmem [#allocation6], %s3923
          %3925 = dma.done %s3921, 2304
        $region56: #{tpu_custom_call.1} parent=51 // pred_fallthru
          _
      $region52: #{tpu_custom_call.1} parent=5 // pred_fallthru
        _
    $region6: #{tpu_custom_call.1} parent=1 // loop_footer
      %s19 = sadd.s32 1, %s15
    $region7: #{tpu_custom_call.1} parent=1 // loop_footer_branch
      %14 = sbr.rel target = $region3
    $region8: #{tpu_custom_call.1} parent=1 // loop_exit
      _
    %3926 = vsyncpa [#allocation4], 1
    %s3927 = scalar_lea.sflag [#allocation4], 1
    %3928 = vsyncpa %s3927, 1
    %3929 = vsyncpa [#allocation5], 1
    %s3930 = scalar_lea.sflag [#allocation5], 1
    %3931 = vsyncpa %s3930, 1

</llo_original>
